<compile_context>
chip_gen: v6e
topology: v6e:2x2x1
jax: 0.10.0
libtpu: 0.0.40
codegen_flags: <defaults>
</compile_context>

<pallas_src>
import numpy as np
import jax
import jax.numpy as jnp
from jax import lax
from jax.experimental import pallas as pl
from jax.experimental.pallas import tpu as pltpu

# ----------------------------- configuration -----------------------------
T = 2
B = 2
EMBED = 32
CIN = EMBED // 2            # 16
H = W = 16
HO, WO = H // 2, W // 2     # 8, 8
HW = H * W                  # 256
HWO = HO * WO               # 64
K3 = 9 * CIN                # 144  (concat-K for proj3)
K4 = 9 * EMBED              # 288  (concat-K for proj4)
BN_EPS = 1e-5
V_TH = 1.0                  # ParametricLIFNode default v_threshold
INIT_TAU = 2.0              # ParametricLIFNode default init_tau -> sigmoid(w) = 0.5

# clamp-max maxpool == -inf-padded maxpool only because odd rows/cols are discarded
# by the stride-2 subsample; guard the assumption.
assert H % 2 == 0 and W % 2 == 0


# ------------------------- in-kernel shift helpers -------------------------
def _shift_zero(a, off, axis):
    # result[i] = a[i + off] with zero padding (off in {-1, 0, 1}) -- for conv taps.
    if off == 0:
        return a
    n = a.shape[axis]
    zshape = list(a.shape)
    zshape[axis] = 1
    z = jnp.zeros(zshape, a.dtype)
    if off == 1:
        return jnp.concatenate([lax.slice_in_dim(a, 1, n, axis=axis), z], axis=axis)
    return jnp.concatenate([z, lax.slice_in_dim(a, 0, n - 1, axis=axis)], axis=axis)


def _shift_clamp(a, off, axis):
    # result[i] = a[clamp(i + off)] (edge replicate) -- for the 3x3/s2/p1 maxpool.
    if off == 0:
        return a
    n = a.shape[axis]
    if off == 1:
        body = lax.slice_in_dim(a, 1, n, axis=axis)
        edge = lax.slice_in_dim(a, n - 1, n, axis=axis)
        return jnp.concatenate([body, edge], axis=axis)
    body = lax.slice_in_dim(a, 0, n - 1, axis=axis)
    edge = lax.slice_in_dim(a, 0, 1, axis=axis)
    return jnp.concatenate([edge, body], axis=axis)


# ------------------------------- fused kernel ---------------------------------
def fused_stage_kernel(decay_ref, patches_ref, xres_ref, w3_ref, w4_ref, wr_ref,
                       sel_ref, s3_ref, b3_ref, s4_ref, b4_ref, sr_ref, br_ref,
                       out_ref):
    d3 = decay_ref[0, 0]
    d4 = decay_ref[0, 1]
    dr = decay_ref[0, 2]

    # ---- proj3_conv (3x3, pad=1): wrapper im2col -> ONE bf16 matmul, batched over T ----
    patches = patches_ref[0]                                        # (T*HW, 9*CIN) bf16
    y3 = jnp.dot(patches, w3_ref[...], preferred_element_type=jnp.float32)   # (T*HW, EMBED)
    y3 = y3 * s3_ref[...] + b3_ref[...]                             # folded proj3_bn (f32)

    # ---- proj3_maxpool (3x3, stride 2, pad 1): separable clamp-max + stride-2 select ----
    y3 = y3.reshape(T, H, W, EMBED)
    mh = jnp.maximum(jnp.maximum(_shift_clamp(y3, -1, 1), y3), _shift_clamp(y3, 1, 1))
    mm = jnp.maximum(jnp.maximum(_shift_clamp(mh, -1, 2), mh), _shift_clamp(mh, 1, 2))
    sel = sel_ref[...]                                              # (HWO, HW) f32, 0/1
    pooled = [jnp.dot(sel, mm[t].reshape(HW, EMBED), preferred_element_type=jnp.float32)
              for t in range(T)]                                    # T x (HWO, EMBED) f32

    # ---- proj_res_conv (1x1, stride 2) + folded proj_res_bn, batched over T ----
    yr = jnp.dot(xres_ref[0], wr_ref[...], preferred_element_type=jnp.float32)  # (T*HWO, EMBED)
    yr = yr * sr_ref[...] + br_ref[...]

    # ---- proj3_lif: serial recurrence over T (elementwise only) ----
    v3 = jnp.zeros((HWO, EMBED), jnp.float32)
    spk3 = []
    for t in range(T):
        v3 = v3 + (pooled[t] - v3) * d3
        s = (v3 >= V_TH).astype(jnp.float32)
        v3 = v3 * (1.0 - s)
        spk3.append(s)

    # ---- proj4_conv (3x3, pad=1) on the spike maps: ONE concat-K matmul over all T ----
    spk_map = jnp.stack(spk3, axis=0).reshape(T, HO, WO, EMBED)
    taps = []
    for k in range(9):
        dy, dx = divmod(k, 3)
        sh = _shift_zero(_shift_zero(spk_map, dy - 1, 1), dx - 1, 2)
        taps.append(sh.reshape(T * HWO, EMBED))
    x4 = jnp.concatenate(taps, axis=-1).astype(jnp.bfloat16)        # (T*HWO, 9*EMBED)
    y4 = jnp.dot(x4, w4_ref[...], preferred_element_type=jnp.float32)
    y4 = y4 * s4_ref[...] + b4_ref[...]                             # folded proj4_bn

    # ---- proj4_lif + proj_res_lif + residual add (serial over T, fused store) ----
    v4 = jnp.zeros((HWO, EMBED), jnp.float32)
    vr = jnp.zeros((HWO, EMBED), jnp.float32)
    for t in range(T):
        v4 = v4 + (y4[t * HWO:(t + 1) * HWO] - v4) * d4
        spk4 = (v4 >= V_TH).astype(jnp.float32)
        v4 = v4 * (1.0 - spk4)

        vr = vr + (yr[t * HWO:(t + 1) * HWO] - vr) * dr
        spkr = (vr >= V_TH).astype(jnp.float32)
        vr = vr * (1.0 - spkr)

        out_ref[0, t] = spk4 + spkr


def run_fused_stage(decay, patches, xres, w3c, w4c, wr, sel, s3, b3, s4, b4, sr, br):
    b = patches.shape[0]
    return pl.pallas_call(
        fused_stage_kernel,
        out_shape=jax.ShapeDtypeStruct((b, T, HWO, EMBED), jnp.float32),
        grid=(b,),
        in_specs=[
            pl.BlockSpec((1, 3), lambda i: (0, 0), memory_space=pltpu.MemorySpace.SMEM),
            pl.BlockSpec((1, T * HW, K3), lambda i: (i, 0, 0)),     # im2col patches (bf16)
            pl.BlockSpec((1, T * HWO, CIN), lambda i: (i, 0, 0)),   # stride-2 residual input
            pl.BlockSpec((K3, EMBED), lambda i: (0, 0)),            # proj3 weights (144, 32)
            pl.BlockSpec((K4, EMBED), lambda i: (0, 0)),            # proj4 weights (288, 32)
            pl.BlockSpec((CIN, EMBED), lambda i: (0, 0)),           # proj_res weights (16, 32)
            pl.BlockSpec((HWO, HW), lambda i: (0, 0)),              # stride-2 selector
            pl.BlockSpec((1, EMBED), lambda i: (0, 0)),
            pl.BlockSpec((1, EMBED), lambda i: (0, 0)),
            pl.BlockSpec((1, EMBED), lambda i: (0, 0)),
            pl.BlockSpec((1, EMBED), lambda i: (0, 0)),
            pl.BlockSpec((1, EMBED), lambda i: (0, 0)),
            pl.BlockSpec((1, EMBED), lambda i: (0, 0)),
        ],
        out_specs=pl.BlockSpec((1, T, HWO, EMBED), lambda i: (i, 0, 0, 0)),
        compiler_params=pltpu.CompilerParams(dimension_semantics=("parallel",)),
    )(decay, patches, xres, w3c, w4c, wr, sel, s3, b3, s4, b4, sr, br)


# -------------------------------- glue -------------------------------------
def fold_bn(gamma, beta, mean, var):
    scale = gamma / jnp.sqrt(var + BN_EPS)
    bias = beta - mean * scale
    return scale.reshape(1, -1), bias.reshape(1, -1)


def build_subsample_select():
    # (HWO, HW) 0/1 matrix picking pixel (2i, 2j) -> output (i, j) for the maxpool subsample.
    s = np.zeros((HWO, HW), np.float32)
    for i in range(HO):
        for j in range(WO):
            s[i * WO + j, (2 * i) * W + (2 * j)] = 1.0
    return jnp.asarray(s)


def init_params(key):
    ks = jax.random.split(key, 6)

    def conv_w(k, cout, cin, kh, kw):
        fan_in = cin * kh * kw
        return jax.random.normal(k, (cout, cin, kh, kw), jnp.float32) / np.sqrt(fan_in)

    def bn(k, c):
        k1, k2, k3, k4 = jax.random.split(k, 4)
        gamma = 1.0 + 0.1 * jax.random.normal(k1, (c,), jnp.float32)
        beta = 0.1 * jax.random.normal(k2, (c,), jnp.float32)
        mean = 0.1 * jax.random.normal(k3, (c,), jnp.float32)
        var = 1.0 + 0.1 * jnp.abs(jax.random.normal(k4, (c,), jnp.float32))
        return gamma, beta, mean, var

    w3_t = conv_w(ks[0], EMBED, CIN, 3, 3)      # PyTorch layout (Cout, Cin, 3, 3)
    w4_t = conv_w(ks[1], EMBED, EMBED, 3, 3)
    wr_t = conv_w(ks[2], EMBED, CIN, 1, 1)

    # concat-K weights: row (k*Cin + ci) of tap k = (kh*3 + kw)  ->  column co
    w3c = jnp.transpose(w3_t, (2, 3, 1, 0)).reshape(K3, EMBED).astype(jnp.bfloat16)
    w4c = jnp.transpose(w4_t, (2, 3, 1, 0)).reshape(K4, EMBED).astype(jnp.bfloat16)
    wr = wr_t.reshape(EMBED, CIN).T.astype(jnp.bfloat16)

    # ParametricLIFNode: sigmoid(w) = 1/init_tau = 0.5 for all three LIFs
    decay = jnp.full((1, 3), 1.0 / INIT_TAU, jnp.float32)

    return dict(w3=w3c, w4=w4c, wr=wr,
                bn3=bn(ks[3], EMBED), bn4=bn(ks[4], EMBED), bnr=bn(ks[5], EMBED),
                sel=build_subsample_select(), decay=decay)


@jax.jit
def patch_embedding_stage(x_tbchw, params):
    # x: (T, B, CIN, H, W) -> channels-last, batch-major (pure layout glue, XLA side)
    t, b, c, hh, ww = x_tbchw.shape
    xh = jnp.transpose(x_tbchw, (1, 0, 3, 4, 2))                          # (B, T, H, W, CIN)
    xpad = jnp.pad(xh, ((0, 0), (0, 0), (1, 1), (1, 1), (0, 0)))          # (B, T, H+2, W+2, CIN)

    # wrapper-side im2col for proj3 (tap order k = dy*3 + dx, matching w3c rows)
    taps = [xpad[:, :, dy:dy + H, dx:dx + W, :] for dy in range(3) for dx in range(3)]
    patches = jnp.concatenate(taps, axis=-1).reshape(b, T * HW, K3).astype(jnp.bfloat16)

    # stride-2 subsample for the 1x1/stride-2 residual conv (replaces the selection matmul)
    xres = xh[:, :, ::2, ::2, :].reshape(b, T * HWO, CIN).astype(jnp.bfloat16)

    s3, b3 = fold_bn(*params["bn3"])
    s4, b4 = fold_bn(*params["bn4"])
    sr, br = fold_bn(*params["bnr"])

    out = run_fused_stage(params["decay"], patches, xres, params["w3"], params["w4"],
                          params["wr"], params["sel"], s3, b3, s4, b4, sr, br)
    # back to PyTorch layout (T, B, EMBED, H//2, W//2)
    return jnp.transpose(out, (1, 0, 3, 2)).reshape(t, b, EMBED, HO, WO)


if __name__ == "__main__":
    key = jax.random.PRNGKey(0)
    kx, kp = jax.random.split(key)
    x = jax.random.normal(kx, (T, B, CIN, H, W), jnp.float32)
    params = init_params(kp)

    out = jax.block_until_ready(patch_embedding_stage(x, params))

    assert out.shape == (T, B, EMBED, HO, WO), out.shape
    # output = spikes + spikes, so every value must be 0, 1, or 2
    ok = bool(jnp.all((out == 0.0) | (out == 1.0) | (out == 2.0)))
    assert ok, "unexpected output values"
    print("KERNEL_OK")
</pallas_src>

<mosaic_0001>
module attributes {stable_mosaic.version = 11 : i64} {
  func.func @fused_stage_kernel(%arg0: i32, %arg1: memref<1x3xf32, #tpu.memory_space<smem>>, %arg2: memref<1x512x144xbf16, #tpu.memory_space<vmem>>, %arg3: memref<1x128x16xbf16, #tpu.memory_space<vmem>>, %arg4: memref<144x32xbf16, #tpu.memory_space<vmem>>, %arg5: memref<288x32xbf16, #tpu.memory_space<vmem>>, %arg6: memref<16x32xbf16, #tpu.memory_space<vmem>>, %arg7: memref<64x256xf32, #tpu.memory_space<vmem>>, %arg8: memref<1x32xf32, #tpu.memory_space<vmem>>, %arg9: memref<1x32xf32, #tpu.memory_space<vmem>>, %arg10: memref<1x32xf32, #tpu.memory_space<vmem>>, %arg11: memref<1x32xf32, #tpu.memory_space<vmem>>, %arg12: memref<1x32xf32, #tpu.memory_space<vmem>>, %arg13: memref<1x32xf32, #tpu.memory_space<vmem>>, %arg14: memref<1x2x64x32xf32, #tpu.memory_space<vmem>>) attributes {dimension_semantics = [#tpu.dimension_semantics<parallel>], iteration_bounds = array<i64: 2>, scalar_prefetch = 0 : i64, scratch_operands = 0 : i64, tpu.core_type = #tpu.core_type<tc>, window_params = [{transform_indices = @transform_0, window_bounds = array<i64: 1, 3>}, {transform_indices = @transform_1, window_bounds = array<i64: 1, 512, 144>}, {transform_indices = @transform_2, window_bounds = array<i64: 1, 128, 16>}, {pipeline_mode = #tpu.pipeline_mode<synchronous>, transform_indices = @transform_3, window_bounds = array<i64: 144, 32>}, {pipeline_mode = #tpu.pipeline_mode<synchronous>, transform_indices = @transform_4, window_bounds = array<i64: 288, 32>}, {pipeline_mode = #tpu.pipeline_mode<synchronous>, transform_indices = @transform_5, window_bounds = array<i64: 16, 32>}, {pipeline_mode = #tpu.pipeline_mode<synchronous>, transform_indices = @transform_6, window_bounds = array<i64: 64, 256>}, {pipeline_mode = #tpu.pipeline_mode<synchronous>, transform_indices = @transform_7, window_bounds = array<i64: 1, 32>}, {pipeline_mode = #tpu.pipeline_mode<synchronous>, transform_indices = @transform_8, window_bounds = array<i64: 1, 32>}, {pipeline_mode = #tpu.pipeline_mode<synchronous>, transform_indices = @transform_9, window_bounds = array<i64: 1, 32>}, {pipeline_mode = #tpu.pipeline_mode<synchronous>, transform_indices = @transform_10, window_bounds = array<i64: 1, 32>}, {pipeline_mode = #tpu.pipeline_mode<synchronous>, transform_indices = @transform_11, window_bounds = array<i64: 1, 32>}, {pipeline_mode = #tpu.pipeline_mode<synchronous>, transform_indices = @transform_12, window_bounds = array<i64: 1, 32>}, {transform_indices = @transform_13, window_bounds = array<i64: 1, 2, 64, 32>}]} {
    %c0 = arith.constant 0 : index
    %c0_0 = arith.constant 0 : index
    %0 = memref.load %arg1[%c0, %c0_0] : memref<1x3xf32, #tpu.memory_space<smem>>
    %c0_1 = arith.constant 0 : index
    %c1 = arith.constant 1 : index
    %1 = memref.load %arg1[%c0_1, %c1] : memref<1x3xf32, #tpu.memory_space<smem>>
    %c0_2 = arith.constant 0 : index
    %c2 = arith.constant 2 : index
    %2 = memref.load %arg1[%c0_2, %c2] : memref<1x3xf32, #tpu.memory_space<smem>>
    %c0_3 = arith.constant 0 : index
    %c0_4 = arith.constant 0 : index
    %c0_5 = arith.constant 0 : index
    %3 = vector.load %arg2[%c0_3, %c0_4, %c0_5] : memref<1x512x144xbf16, #tpu.memory_space<vmem>>, vector<1x512x144xbf16>
    %4 = vector.shape_cast %3 : vector<1x512x144xbf16> to vector<512x144xbf16>
    %c0_6 = arith.constant 0 : index
    %c0_7 = arith.constant 0 : index
    %5 = vector.load %arg4[%c0_6, %c0_7] : memref<144x32xbf16, #tpu.memory_space<vmem>>, vector<144x32xbf16>
    %cst = arith.constant dense<0.000000e+00> : vector<512x32xf32>
    %6 = tpu.matmul %4, %5, %cst {dimension_numbers = #tpu.dot_dimension_numbers<[1], [0], [0], [1], [0, 0, 1, 1], [], []>} : vector<512x144xbf16>, vector<144x32xbf16>, vector<512x32xf32> -> vector<512x32xf32>
    %c0_8 = arith.constant 0 : index
    %c0_9 = arith.constant 0 : index
    %7 = vector.load %arg8[%c0_8, %c0_9] : memref<1x32xf32, #tpu.memory_space<vmem>>, vector<1x32xf32>
    %8 = vector.broadcast %7 : vector<1x32xf32> to vector<512x32xf32>
    %9 = arith.mulf %6, %8 : vector<512x32xf32>
    %c0_10 = arith.constant 0 : index
    %c0_11 = arith.constant 0 : index
    %10 = vector.load %arg9[%c0_10, %c0_11] : memref<1x32xf32, #tpu.memory_space<vmem>>, vector<1x32xf32>
    %11 = vector.broadcast %10 : vector<1x32xf32> to vector<512x32xf32>
    %12 = arith.addf %9, %11 : vector<512x32xf32>
    %13 = vector.shape_cast %12 : vector<512x32xf32> to vector<2x16x16x32xf32>
    %14 = vector.extract_strided_slice %13 {offsets = [0, 0, 0, 0], sizes = [2, 15, 16, 32], strides = [1, 1, 1, 1]} : vector<2x16x16x32xf32> to vector<2x15x16x32xf32>
    %15 = vector.extract_strided_slice %13 {offsets = [0, 0, 0, 0], sizes = [2, 1, 16, 32], strides = [1, 1, 1, 1]} : vector<2x16x16x32xf32> to vector<2x1x16x32xf32>
    %16 = tpu.concatenate %15, %14 in 1 : vector<2x1x16x32xf32>, vector<2x15x16x32xf32> -> vector<2x16x16x32xf32>
    %17 = arith.maximumf %16, %13 : vector<2x16x16x32xf32>
    %18 = vector.extract_strided_slice %13 {offsets = [0, 1, 0, 0], sizes = [2, 15, 16, 32], strides = [1, 1, 1, 1]} : vector<2x16x16x32xf32> to vector<2x15x16x32xf32>
    %19 = vector.extract_strided_slice %13 {offsets = [0, 15, 0, 0], sizes = [2, 1, 16, 32], strides = [1, 1, 1, 1]} : vector<2x16x16x32xf32> to vector<2x1x16x32xf32>
    %20 = tpu.concatenate %18, %19 in 1 : vector<2x15x16x32xf32>, vector<2x1x16x32xf32> -> vector<2x16x16x32xf32>
    %21 = arith.maximumf %17, %20 : vector<2x16x16x32xf32>
    %22 = vector.extract_strided_slice %21 {offsets = [0, 0, 0, 0], sizes = [2, 16, 15, 32], strides = [1, 1, 1, 1]} : vector<2x16x16x32xf32> to vector<2x16x15x32xf32>
    %23 = vector.extract_strided_slice %21 {offsets = [0, 0, 0, 0], sizes = [2, 16, 1, 32], strides = [1, 1, 1, 1]} : vector<2x16x16x32xf32> to vector<2x16x1x32xf32>
    %24 = tpu.concatenate %23, %22 in 2 : vector<2x16x1x32xf32>, vector<2x16x15x32xf32> -> vector<2x16x16x32xf32>
    %25 = arith.maximumf %24, %21 : vector<2x16x16x32xf32>
    %26 = vector.extract_strided_slice %21 {offsets = [0, 0, 1, 0], sizes = [2, 16, 15, 32], strides = [1, 1, 1, 1]} : vector<2x16x16x32xf32> to vector<2x16x15x32xf32>
    %27 = vector.extract_strided_slice %21 {offsets = [0, 0, 15, 0], sizes = [2, 16, 1, 32], strides = [1, 1, 1, 1]} : vector<2x16x16x32xf32> to vector<2x16x1x32xf32>
    %28 = tpu.concatenate %26, %27 in 2 : vector<2x16x15x32xf32>, vector<2x16x1x32xf32> -> vector<2x16x16x32xf32>
    %29 = arith.maximumf %25, %28 : vector<2x16x16x32xf32>
    %c0_12 = arith.constant 0 : index
    %c0_13 = arith.constant 0 : index
    %30 = vector.load %arg7[%c0_12, %c0_13] : memref<64x256xf32, #tpu.memory_space<vmem>>, vector<64x256xf32>
    %31 = vector.extract_strided_slice %29 {offsets = [0, 0, 0, 0], sizes = [1, 16, 16, 32], strides = [1, 1, 1, 1]} : vector<2x16x16x32xf32> to vector<1x16x16x32xf32>
    %32 = vector.shape_cast %31 : vector<1x16x16x32xf32> to vector<16x16x32xf32>
    %33 = vector.shape_cast %32 : vector<16x16x32xf32> to vector<256x32xf32>
    %cst_14 = arith.constant dense<0.000000e+00> : vector<64x32xf32>
    %34 = tpu.matmul %30, %33, %cst_14 {dimension_numbers = #tpu.dot_dimension_numbers<[1], [0], [0], [1], [0, 0, 1, 1], [], []>} : vector<64x256xf32>, vector<256x32xf32>, vector<64x32xf32> -> vector<64x32xf32>
    %35 = vector.extract_strided_slice %29 {offsets = [1, 0, 0, 0], sizes = [1, 16, 16, 32], strides = [1, 1, 1, 1]} : vector<2x16x16x32xf32> to vector<1x16x16x32xf32>
    %36 = vector.shape_cast %35 : vector<1x16x16x32xf32> to vector<16x16x32xf32>
    %37 = vector.shape_cast %36 : vector<16x16x32xf32> to vector<256x32xf32>
    %cst_15 = arith.constant dense<0.000000e+00> : vector<64x32xf32>
    %38 = tpu.matmul %30, %37, %cst_15 {dimension_numbers = #tpu.dot_dimension_numbers<[1], [0], [0], [1], [0, 0, 1, 1], [], []>} : vector<64x256xf32>, vector<256x32xf32>, vector<64x32xf32> -> vector<64x32xf32>
    %c0_16 = arith.constant 0 : index
    %c0_17 = arith.constant 0 : index
    %c0_18 = arith.constant 0 : index
    %39 = vector.load %arg3[%c0_16, %c0_17, %c0_18] : memref<1x128x16xbf16, #tpu.memory_space<vmem>>, vector<1x128x16xbf16>
    %40 = vector.shape_cast %39 : vector<1x128x16xbf16> to vector<128x16xbf16>
    %c0_19 = arith.constant 0 : index
    %c0_20 = arith.constant 0 : index
    %41 = vector.load %arg6[%c0_19, %c0_20] : memref<16x32xbf16, #tpu.memory_space<vmem>>, vector<16x32xbf16>
    %cst_21 = arith.constant dense<0.000000e+00> : vector<128x32xf32>
    %42 = tpu.matmul %40, %41, %cst_21 {dimension_numbers = #tpu.dot_dimension_numbers<[1], [0], [0], [1], [0, 0, 1, 1], [], []>} : vector<128x16xbf16>, vector<16x32xbf16>, vector<128x32xf32> -> vector<128x32xf32>
    %c0_22 = arith.constant 0 : index
    %c0_23 = arith.constant 0 : index
    %43 = vector.load %arg12[%c0_22, %c0_23] : memref<1x32xf32, #tpu.memory_space<vmem>>, vector<1x32xf32>
    %44 = vector.broadcast %43 : vector<1x32xf32> to vector<128x32xf32>
    %45 = arith.mulf %42, %44 : vector<128x32xf32>
    %c0_24 = arith.constant 0 : index
    %c0_25 = arith.constant 0 : index
    %46 = vector.load %arg13[%c0_24, %c0_25] : memref<1x32xf32, #tpu.memory_space<vmem>>, vector<1x32xf32>
    %47 = vector.broadcast %46 : vector<1x32xf32> to vector<128x32xf32>
    %48 = arith.addf %45, %47 : vector<128x32xf32>
    %cst_26 = arith.constant 0.000000e+00 : f32
    %49 = vector.broadcast %cst_26 : f32 to vector<64x32xf32>
    %50 = arith.subf %34, %49 : vector<64x32xf32>
    %51 = vector.broadcast %0 : f32 to vector<64x32xf32>
    %52 = arith.mulf %50, %51 : vector<64x32xf32>
    %53 = arith.addf %49, %52 : vector<64x32xf32>
    %cst_27 = arith.constant 1.000000e+00 : f32
    %54 = vector.broadcast %cst_27 : f32 to vector<64x32xf32>
    %55 = arith.cmpf oge, %53, %54 : vector<64x32xf32>
    %56 = arith.extui %55 : vector<64x32xi1> to vector<64x32xi32>
    %57 = arith.sitofp %56 : vector<64x32xi32> to vector<64x32xf32>
    %cst_28 = arith.constant 1.000000e+00 : f32
    %58 = vector.broadcast %cst_28 : f32 to vector<64x32xf32>
    %59 = arith.subf %58, %57 : vector<64x32xf32>
    %60 = arith.mulf %53, %59 : vector<64x32xf32>
    %61 = arith.subf %38, %60 : vector<64x32xf32>
    %62 = vector.broadcast %0 : f32 to vector<64x32xf32>
    %63 = arith.mulf %61, %62 : vector<64x32xf32>
    %64 = arith.addf %60, %63 : vector<64x32xf32>
    %cst_29 = arith.constant 1.000000e+00 : f32
    %65 = vector.broadcast %cst_29 : f32 to vector<64x32xf32>
    %66 = arith.cmpf oge, %64, %65 : vector<64x32xf32>
    %67 = arith.extui %66 : vector<64x32xi1> to vector<64x32xi32>
    %68 = arith.sitofp %67 : vector<64x32xi32> to vector<64x32xf32>
    %69 = vector.shape_cast %57 : vector<64x32xf32> to vector<1x64x32xf32>
    %70 = vector.shape_cast %68 : vector<64x32xf32> to vector<1x64x32xf32>
    %71 = tpu.concatenate %69, %70 in 0 : vector<1x64x32xf32>, vector<1x64x32xf32> -> vector<2x64x32xf32>
    %72 = vector.shape_cast %71 : vector<2x64x32xf32> to vector<2x8x8x32xf32>
    %cst_30 = arith.constant 0.000000e+00 : f32
    %73 = vector.broadcast %cst_30 : f32 to vector<2x1x8x32xf32>
    %74 = vector.extract_strided_slice %72 {offsets = [0, 0, 0, 0], sizes = [2, 7, 8, 32], strides = [1, 1, 1, 1]} : vector<2x8x8x32xf32> to vector<2x7x8x32xf32>
    %75 = tpu.concatenate %73, %74 in 1 : vector<2x1x8x32xf32>, vector<2x7x8x32xf32> -> vector<2x8x8x32xf32>
    %cst_31 = arith.constant 0.000000e+00 : f32
    %76 = vector.broadcast %cst_31 : f32 to vector<2x8x1x32xf32>
    %77 = vector.extract_strided_slice %75 {offsets = [0, 0, 0, 0], sizes = [2, 8, 7, 32], strides = [1, 1, 1, 1]} : vector<2x8x8x32xf32> to vector<2x8x7x32xf32>
    %78 = tpu.concatenate %76, %77 in 2 : vector<2x8x1x32xf32>, vector<2x8x7x32xf32> -> vector<2x8x8x32xf32>
    %79 = vector.shape_cast %78 : vector<2x8x8x32xf32> to vector<128x32xf32>
    %cst_32 = arith.constant 0.000000e+00 : f32
    %80 = vector.broadcast %cst_32 : f32 to vector<2x1x8x32xf32>
    %81 = vector.extract_strided_slice %72 {offsets = [0, 0, 0, 0], sizes = [2, 7, 8, 32], strides = [1, 1, 1, 1]} : vector<2x8x8x32xf32> to vector<2x7x8x32xf32>
    %82 = tpu.concatenate %80, %81 in 1 : vector<2x1x8x32xf32>, vector<2x7x8x32xf32> -> vector<2x8x8x32xf32>
    %83 = vector.shape_cast %82 : vector<2x8x8x32xf32> to vector<128x32xf32>
    %cst_33 = arith.constant 0.000000e+00 : f32
    %84 = vector.broadcast %cst_33 : f32 to vector<2x1x8x32xf32>
    %85 = vector.extract_strided_slice %72 {offsets = [0, 0, 0, 0], sizes = [2, 7, 8, 32], strides = [1, 1, 1, 1]} : vector<2x8x8x32xf32> to vector<2x7x8x32xf32>
    %86 = tpu.concatenate %84, %85 in 1 : vector<2x1x8x32xf32>, vector<2x7x8x32xf32> -> vector<2x8x8x32xf32>
    %cst_34 = arith.constant 0.000000e+00 : f32
    %87 = vector.broadcast %cst_34 : f32 to vector<2x8x1x32xf32>
    %88 = vector.extract_strided_slice %86 {offsets = [0, 0, 1, 0], sizes = [2, 8, 7, 32], strides = [1, 1, 1, 1]} : vector<2x8x8x32xf32> to vector<2x8x7x32xf32>
    %89 = tpu.concatenate %88, %87 in 2 : vector<2x8x7x32xf32>, vector<2x8x1x32xf32> -> vector<2x8x8x32xf32>
    %90 = vector.shape_cast %89 : vector<2x8x8x32xf32> to vector<128x32xf32>
    %cst_35 = arith.constant 0.000000e+00 : f32
    %91 = vector.broadcast %cst_35 : f32 to vector<2x8x1x32xf32>
    %92 = vector.extract_strided_slice %72 {offsets = [0, 0, 0, 0], sizes = [2, 8, 7, 32], strides = [1, 1, 1, 1]} : vector<2x8x8x32xf32> to vector<2x8x7x32xf32>
    %93 = tpu.concatenate %91, %92 in 2 : vector<2x8x1x32xf32>, vector<2x8x7x32xf32> -> vector<2x8x8x32xf32>
    %94 = vector.shape_cast %93 : vector<2x8x8x32xf32> to vector<128x32xf32>
    %95 = vector.shape_cast %72 : vector<2x8x8x32xf32> to vector<128x32xf32>
    %cst_36 = arith.constant 0.000000e+00 : f32
    %96 = vector.broadcast %cst_36 : f32 to vector<2x8x1x32xf32>
    %97 = vector.extract_strided_slice %72 {offsets = [0, 0, 1, 0], sizes = [2, 8, 7, 32], strides = [1, 1, 1, 1]} : vector<2x8x8x32xf32> to vector<2x8x7x32xf32>
    %98 = tpu.concatenate %97, %96 in 2 : vector<2x8x7x32xf32>, vector<2x8x1x32xf32> -> vector<2x8x8x32xf32>
    %99 = vector.shape_cast %98 : vector<2x8x8x32xf32> to vector<128x32xf32>
    %cst_37 = arith.constant 0.000000e+00 : f32
    %100 = vector.broadcast %cst_37 : f32 to vector<2x1x8x32xf32>
    %101 = vector.extract_strided_slice %72 {offsets = [0, 1, 0, 0], sizes = [2, 7, 8, 32], strides = [1, 1, 1, 1]} : vector<2x8x8x32xf32> to vector<2x7x8x32xf32>
    %102 = tpu.concatenate %101, %100 in 1 : vector<2x7x8x32xf32>, vector<2x1x8x32xf32> -> vector<2x8x8x32xf32>
    %cst_38 = arith.constant 0.000000e+00 : f32
    %103 = vector.broadcast %cst_38 : f32 to vector<2x8x1x32xf32>
    %104 = vector.extract_strided_slice %102 {offsets = [0, 0, 0, 0], sizes = [2, 8, 7, 32], strides = [1, 1, 1, 1]} : vector<2x8x8x32xf32> to vector<2x8x7x32xf32>
    %105 = tpu.concatenate %103, %104 in 2 : vector<2x8x1x32xf32>, vector<2x8x7x32xf32> -> vector<2x8x8x32xf32>
    %106 = vector.shape_cast %105 : vector<2x8x8x32xf32> to vector<128x32xf32>
    %cst_39 = arith.constant 0.000000e+00 : f32
    %107 = vector.broadcast %cst_39 : f32 to vector<2x1x8x32xf32>
    %108 = vector.extract_strided_slice %72 {offsets = [0, 1, 0, 0], sizes = [2, 7, 8, 32], strides = [1, 1, 1, 1]} : vector<2x8x8x32xf32> to vector<2x7x8x32xf32>
    %109 = tpu.concatenate %108, %107 in 1 : vector<2x7x8x32xf32>, vector<2x1x8x32xf32> -> vector<2x8x8x32xf32>
    %110 = vector.shape_cast %109 : vector<2x8x8x32xf32> to vector<128x32xf32>
    %cst_40 = arith.constant 0.000000e+00 : f32
    %111 = vector.broadcast %cst_40 : f32 to vector<2x1x8x32xf32>
    %112 = vector.extract_strided_slice %72 {offsets = [0, 1, 0, 0], sizes = [2, 7, 8, 32], strides = [1, 1, 1, 1]} : vector<2x8x8x32xf32> to vector<2x7x8x32xf32>
    %113 = tpu.concatenate %112, %111 in 1 : vector<2x7x8x32xf32>, vector<2x1x8x32xf32> -> vector<2x8x8x32xf32>
    %cst_41 = arith.constant 0.000000e+00 : f32
    %114 = vector.broadcast %cst_41 : f32 to vector<2x8x1x32xf32>
    %115 = vector.extract_strided_slice %113 {offsets = [0, 0, 1, 0], sizes = [2, 8, 7, 32], strides = [1, 1, 1, 1]} : vector<2x8x8x32xf32> to vector<2x8x7x32xf32>
    %116 = tpu.concatenate %115, %114 in 2 : vector<2x8x7x32xf32>, vector<2x8x1x32xf32> -> vector<2x8x8x32xf32>
    %117 = vector.shape_cast %116 : vector<2x8x8x32xf32> to vector<128x32xf32>
    %118 = tpu.concatenate %79, %83, %90, %94, %95, %99, %106, %110, %117 in 1 : vector<128x32xf32>, vector<128x32xf32>, vector<128x32xf32>, vector<128x32xf32>, vector<128x32xf32>, vector<128x32xf32>, vector<128x32xf32>, vector<128x32xf32>, vector<128x32xf32> -> vector<128x288xf32>
    %119 = arith.truncf %118 : vector<128x288xf32> to vector<128x288xbf16>
    %c0_42 = arith.constant 0 : index
    %c0_43 = arith.constant 0 : index
    %120 = vector.load %arg5[%c0_42, %c0_43] : memref<288x32xbf16, #tpu.memory_space<vmem>>, vector<288x32xbf16>
    %cst_44 = arith.constant dense<0.000000e+00> : vector<128x32xf32>
    %121 = tpu.matmul %119, %120, %cst_44 {dimension_numbers = #tpu.dot_dimension_numbers<[1], [0], [0], [1], [0, 0, 1, 1], [], []>} : vector<128x288xbf16>, vector<288x32xbf16>, vector<128x32xf32> -> vector<128x32xf32>
    %c0_45 = arith.constant 0 : index
    %c0_46 = arith.constant 0 : index
    %122 = vector.load %arg10[%c0_45, %c0_46] : memref<1x32xf32, #tpu.memory_space<vmem>>, vector<1x32xf32>
    %123 = vector.broadcast %122 : vector<1x32xf32> to vector<128x32xf32>
    %124 = arith.mulf %121, %123 : vector<128x32xf32>
    %c0_47 = arith.constant 0 : index
    %c0_48 = arith.constant 0 : index
    %125 = vector.load %arg11[%c0_47, %c0_48] : memref<1x32xf32, #tpu.memory_space<vmem>>, vector<1x32xf32>
    %126 = vector.broadcast %125 : vector<1x32xf32> to vector<128x32xf32>
    %127 = arith.addf %124, %126 : vector<128x32xf32>
    %cst_49 = arith.constant 0.000000e+00 : f32
    %128 = vector.broadcast %cst_49 : f32 to vector<64x32xf32>
    %cst_50 = arith.constant 0.000000e+00 : f32
    %129 = vector.broadcast %cst_50 : f32 to vector<64x32xf32>
    %130 = vector.extract_strided_slice %127 {offsets = [0, 0], sizes = [64, 32], strides = [1, 1]} : vector<128x32xf32> to vector<64x32xf32>
    %131 = arith.subf %130, %128 : vector<64x32xf32>
    %132 = vector.broadcast %1 : f32 to vector<64x32xf32>
    %133 = arith.mulf %131, %132 : vector<64x32xf32>
    %134 = arith.addf %128, %133 : vector<64x32xf32>
    %cst_51 = arith.constant 1.000000e+00 : f32
    %135 = vector.broadcast %cst_51 : f32 to vector<64x32xf32>
    %136 = arith.cmpf oge, %134, %135 : vector<64x32xf32>
    %137 = arith.extui %136 : vector<64x32xi1> to vector<64x32xi32>
    %138 = arith.sitofp %137 : vector<64x32xi32> to vector<64x32xf32>
    %cst_52 = arith.constant 1.000000e+00 : f32
    %139 = vector.broadcast %cst_52 : f32 to vector<64x32xf32>
    %140 = arith.subf %139, %138 : vector<64x32xf32>
    %141 = arith.mulf %134, %140 : vector<64x32xf32>
    %142 = vector.extract_strided_slice %48 {offsets = [0, 0], sizes = [64, 32], strides = [1, 1]} : vector<128x32xf32> to vector<64x32xf32>
    %143 = arith.subf %142, %129 : vector<64x32xf32>
    %144 = vector.broadcast %2 : f32 to vector<64x32xf32>
    %145 = arith.mulf %143, %144 : vector<64x32xf32>
    %146 = arith.addf %129, %145 : vector<64x32xf32>
    %cst_53 = arith.constant 1.000000e+00 : f32
    %147 = vector.broadcast %cst_53 : f32 to vector<64x32xf32>
    %148 = arith.cmpf oge, %146, %147 : vector<64x32xf32>
    %149 = arith.extui %148 : vector<64x32xi1> to vector<64x32xi32>
    %150 = arith.sitofp %149 : vector<64x32xi32> to vector<64x32xf32>
    %cst_54 = arith.constant 1.000000e+00 : f32
    %151 = vector.broadcast %cst_54 : f32 to vector<64x32xf32>
    %152 = arith.subf %151, %150 : vector<64x32xf32>
    %153 = arith.mulf %146, %152 : vector<64x32xf32>
    %154 = arith.addf %138, %150 : vector<64x32xf32>
    %c0_55 = arith.constant 0 : index
    %c0_56 = arith.constant 0 : index
    %c0_57 = arith.constant 0 : index
    %c0_58 = arith.constant 0 : index
    %155 = vector.load %arg14[%c0_55, %c0_56, %c0_57, %c0_58] : memref<1x2x64x32xf32, #tpu.memory_space<vmem>>, vector<1x1x64x32xf32>
    %156 = vector.shape_cast %155 : vector<1x1x64x32xf32> to vector<64x32xf32>
    %157 = vector.shape_cast %154 : vector<64x32xf32> to vector<1x1x64x32xf32>
    tpu.vector_store %arg14[%c0_55, %c0_56, %c0_57, %c0_58], %157 {strides = array<i32>} : memref<1x2x64x32xf32, #tpu.memory_space<vmem>>, vector<1x1x64x32xf32>,
    %158 = vector.extract_strided_slice %127 {offsets = [64, 0], sizes = [64, 32], strides = [1, 1]} : vector<128x32xf32> to vector<64x32xf32>
    %159 = arith.subf %158, %141 : vector<64x32xf32>
    %160 = vector.broadcast %1 : f32 to vector<64x32xf32>
    %161 = arith.mulf %159, %160 : vector<64x32xf32>
    %162 = arith.addf %141, %161 : vector<64x32xf32>
    %cst_59 = arith.constant 1.000000e+00 : f32
    %163 = vector.broadcast %cst_59 : f32 to vector<64x32xf32>
    %164 = arith.cmpf oge, %162, %163 : vector<64x32xf32>
    %165 = arith.extui %164 : vector<64x32xi1> to vector<64x32xi32>
    %166 = arith.sitofp %165 : vector<64x32xi32> to vector<64x32xf32>
    %167 = vector.extract_strided_slice %48 {offsets = [64, 0], sizes = [64, 32], strides = [1, 1]} : vector<128x32xf32> to vector<64x32xf32>
    %168 = arith.subf %167, %153 : vector<64x32xf32>
    %169 = vector.broadcast %2 : f32 to vector<64x32xf32>
    %170 = arith.mulf %168, %169 : vector<64x32xf32>
    %171 = arith.addf %153, %170 : vector<64x32xf32>
    %cst_60 = arith.constant 1.000000e+00 : f32
    %172 = vector.broadcast %cst_60 : f32 to vector<64x32xf32>
    %173 = arith.cmpf oge, %171, %172 : vector<64x32xf32>
    %174 = arith.extui %173 : vector<64x32xi1> to vector<64x32xi32>
    %175 = arith.sitofp %174 : vector<64x32xi32> to vector<64x32xf32>
    %176 = arith.addf %166, %175 : vector<64x32xf32>
    %c0_61 = arith.constant 0 : index
    %c1_62 = arith.constant 1 : index
    %c0_63 = arith.constant 0 : index
    %c0_64 = arith.constant 0 : index
    %177 = vector.load %arg14[%c0_61, %c1_62, %c0_63, %c0_64] : memref<1x2x64x32xf32, #tpu.memory_space<vmem>>, vector<1x1x64x32xf32>
    %178 = vector.shape_cast %177 : vector<1x1x64x32xf32> to vector<64x32xf32>
    %179 = vector.shape_cast %176 : vector<64x32xf32> to vector<1x1x64x32xf32>
    tpu.vector_store %arg14[%c0_61, %c1_62, %c0_63, %c0_64], %179 {strides = array<i32>} : memref<1x2x64x32xf32, #tpu.memory_space<vmem>>, vector<1x1x64x32xf32>,
    return
  }
  func.func @transform_0(%arg0: i32) -> (i32, i32) {
    %c0_i32 = arith.constant 0 : i32
    %c0_i32_0 = arith.constant 0 : i32
    %c0_i32_1 = arith.constant 0 : i32
    return %c0_i32, %c0_i32_0 : i32, i32
  }
  func.func @transform_1(%arg0: i32) -> (i32, i32, i32) {
    %c0_i32 = arith.constant 0 : i32
    %c0_i32_0 = arith.constant 0 : i32
    %c0_i32_1 = arith.constant 0 : i32
    return %arg0, %c0_i32, %c0_i32_0 : i32, i32, i32
  }
  func.func @transform_2(%arg0: i32) -> (i32, i32, i32) {
    %c0_i32 = arith.constant 0 : i32
    %c0_i32_0 = arith.constant 0 : i32
    %c0_i32_1 = arith.constant 0 : i32
    return %arg0, %c0_i32, %c0_i32_0 : i32, i32, i32
  }
  func.func @transform_3(%arg0: i32) -> (i32, i32) {
    %c0_i32 = arith.constant 0 : i32
    %c0_i32_0 = arith.constant 0 : i32
    %c0_i32_1 = arith.constant 0 : i32
    return %c0_i32, %c0_i32_0 : i32, i32
  }
  func.func @transform_4(%arg0: i32) -> (i32, i32) {
    %c0_i32 = arith.constant 0 : i32
    %c0_i32_0 = arith.constant 0 : i32
    %c0_i32_1 = arith.constant 0 : i32
    return %c0_i32, %c0_i32_0 : i32, i32
  }
  func.func @transform_5(%arg0: i32) -> (i32, i32) {
    %c0_i32 = arith.constant 0 : i32
    %c0_i32_0 = arith.constant 0 : i32
    %c0_i32_1 = arith.constant 0 : i32
    return %c0_i32, %c0_i32_0 : i32, i32
  }
  func.func @transform_6(%arg0: i32) -> (i32, i32) {
    %c0_i32 = arith.constant 0 : i32
    %c0_i32_0 = arith.constant 0 : i32
    %c0_i32_1 = arith.constant 0 : i32
    return %c0_i32, %c0_i32_0 : i32, i32
  }
  func.func @transform_7(%arg0: i32) -> (i32, i32) {
    %c0_i32 = arith.constant 0 : i32
    %c0_i32_0 = arith.constant 0 : i32
    %c0_i32_1 = arith.constant 0 : i32
    return %c0_i32, %c0_i32_0 : i32, i32
  }
  func.func @transform_8(%arg0: i32) -> (i32, i32) {
    %c0_i32 = arith.constant 0 : i32
    %c0_i32_0 = arith.constant 0 : i32
    %c0_i32_1 = arith.constant 0 : i32
    return %c0_i32, %c0_i32_0 : i32, i32
  }
  func.func @transform_9(%arg0: i32) -> (i32, i32) {
    %c0_i32 = arith.constant 0 : i32
    %c0_i32_0 = arith.constant 0 : i32
    %c0_i32_1 = arith.constant 0 : i32
    return %c0_i32, %c0_i32_0 : i32, i32
  }
  func.func @transform_10(%arg0: i32) -> (i32, i32) {
    %c0_i32 = arith.constant 0 : i32
    %c0_i32_0 = arith.constant 0 : i32
    %c0_i32_1 = arith.constant 0 : i32
    return %c0_i32, %c0_i32_0 : i32, i32
  }
  func.func @transform_11(%arg0: i32) -> (i32, i32) {
    %c0_i32 = arith.constant 0 : i32
    %c0_i32_0 = arith.constant 0 : i32
    %c0_i32_1 = arith.constant 0 : i32
    return %c0_i32, %c0_i32_0 : i32, i32
  }
  func.func @transform_12(%arg0: i32) -> (i32, i32) {
    %c0_i32 = arith.constant 0 : i32
    %c0_i32_0 = arith.constant 0 : i32
    %c0_i32_1 = arith.constant 0 : i32
    return %c0_i32, %c0_i32_0 : i32, i32
  }
  func.func @transform_13(%arg0: i32) -> (i32, i32, i32, i32) {
    %c0_i32 = arith.constant 0 : i32
    %c0_i32_0 = arith.constant 0 : i32
    %c0_i32_1 = arith.constant 0 : i32
    %c0_i32_2 = arith.constant 0 : i32
    return %arg0, %c0_i32, %c0_i32_0, %c0_i32_1 : i32, i32, i32, i32
  }
}

</mosaic_0001>

<llo_original>
// kernel: patch_embedding_stage.1
$region0: #{patch_embedding_stage.1}
  #allocation0 [shape = 'u32[]', space=smem, size = 0x4, offset = 0x4, fixed_abs, tag = 'smem constant byte address 0x4 - core index']
  #allocation1 [shape = 'u32[144,128]{1,0:T(1,128)}', space=vmem, size = 0x12000, scoped, tag = 'internal scratch']
  %s0 = inlined_call_operand.vmem [shape: f32[1,3], index: 0, kind: input, shape index: {}]
  %s1 = inlined_call_operand.vmem [shape: bf16[2,512,144], index: 1, kind: input, shape index: {}]
  %s2 = inlined_call_operand.vmem [shape: bf16[2,128,16], index: 2, kind: input, shape index: {}]
  %s3 = inlined_call_operand.vmem [shape: bf16[144,32], index: 3, kind: input, shape index: {}]
  %s4 = inlined_call_operand.vmem [shape: bf16[288,32], index: 4, kind: input, shape index: {}]
  %s5 = inlined_call_operand.vmem [shape: bf16[16,32], index: 5, kind: input, shape index: {}]
  %s6 = inlined_call_operand.vmem [shape: f32[64,256], index: 6, kind: input, shape index: {}]
  %s7 = inlined_call_operand.vmem [shape: f32[1,32], index: 7, kind: input, shape index: {}]
  %s8 = inlined_call_operand.vmem [shape: f32[1,32], index: 8, kind: input, shape index: {}]
  %s9 = inlined_call_operand.vmem [shape: f32[1,32], index: 9, kind: input, shape index: {}]
  %s10 = inlined_call_operand.vmem [shape: f32[1,32], index: 10, kind: input, shape index: {}]
  %s11 = inlined_call_operand.vmem [shape: f32[1,32], index: 11, kind: input, shape index: {}]
  %s12 = inlined_call_operand.vmem [shape: f32[1,32], index: 12, kind: input, shape index: {}]
  %s13 = inlined_call_operand.vmem [shape: f32[2,2,64,32], index: 13, kind: output, shape index: {}]
  %s14 = sld [smem:[#allocation0]]
  $region89: #{patch_embedding_stage.1} parent=0
    _
  %s16 = ssub.s32 1, %s14
  %s17 = scalar_select 0, %s16, %s14
  $region1: #{patch_embedding_stage.1} parent=0
    #allocation2 [shape = 'u8[512]{0}', space=smem, size = 0x200, scoped, tag = 'input window, operand 0, single buffered']
    #allocation3 [shape = 's32[2]{0}', space=sflag, size = 0x8, scoped, tag = 'scoped memory for patch_embedding_stage.1']
    %18 = vsyncpa [#allocation3], 0
    loop: start=0, step=1, limit=4
    $region2: #{patch_embedding_stage.1} parent=1 // loop_pre_header
      _
    $region3: #{patch_embedding_stage.1} parent=1 // loop_header
      %s20 = sphi 0, %s24
      %p21 = scmp.ge.s32.totalorder %s20, 4
      %s28 = sphi 0, %s28
      %s30 = sphi 0, %s28
      %s31 = sphi 0, %s30
      %s45 = sphi 0, %s31
      %s51 = sphi 0, %s53
      %s54 = sphi 0, %s51
      %s55 = sphi 0, %s54
      %s71 = sphi 0, %s55
      %s77 = sphi 0, %s79
      %s80 = sphi 0, %s77
      %s81 = sphi 0, %s80
      %s97 = sphi 0, %s81
      %s101 = sphi 0, %s101
      %s103 = sphi 0, %s101
      %s104 = sphi 0, %s103
      %s118 = sphi 0, %s104
      %s122 = sphi 0, %s122
      %s124 = sphi 0, %s122
      %s125 = sphi 0, %s124
      %s139 = sphi 0, %s125
      %s143 = sphi 0, %s143
      %s145 = sphi 0, %s143
      %s146 = sphi 0, %s145
      %s160 = sphi 0, %s146
      %s164 = sphi 0, %s164
      %s166 = sphi 0, %s164
      %s167 = sphi 0, %s166
      %s181 = sphi 0, %s167
      %s185 = sphi 0, %s185
      %s187 = sphi 0, %s185
      %s188 = sphi 0, %s187
      %s202 = sphi 0, %s188
      %s206 = sphi 0, %s206
      %s208 = sphi 0, %s206
      %s209 = sphi 0, %s208
      %s223 = sphi 0, %s209
      %s227 = sphi 0, %s227
      %s229 = sphi 0, %s227
      %s230 = sphi 0, %s229
      %s244 = sphi 0, %s230
      %s248 = sphi 0, %s248
      %s250 = sphi 0, %s248
      %s251 = sphi 0, %s250
      %s265 = sphi 0, %s251
      %s269 = sphi 0, %s269
      %s271 = sphi 0, %s269
      %s272 = sphi 0, %s271
      %s286 = sphi 0, %s272
      %s290 = sphi 0, %s290
      %s292 = sphi 0, %s290
      %s293 = sphi 0, %s292
      %s307 = sphi 0, %s293
      %s313 = sphi 0, %s315
      %s316 = sphi 0, %s313
      %s317 = sphi 0, %s316
      %s333 = sphi 0, %s317
    $region4: #{patch_embedding_stage.1} parent=1 // loop_header_branch
      %23 = sbr.rel (%p21) target = $region8
    $region5: #{patch_embedding_stage.1} parent=1 // loop_body
      %s25 = ssub.s32 %s20, 1
      %s26 = ssub.s32 %s20, 2
      %s27 = sadd.s32 %s20, 1
      %s29 = sadd.s32 %s28, 1
      %p32 = scmp.eq.s32.totalorder %s20, 1
      %p33 = scmp.ne.s32.totalorder %s28, %s30
      %p34 = scmp.eq.s32.totalorder %s20, 0
      %p35 = por %p33, %p34
      %p36 = scmp.ne.s32.totalorder %s28, %s30
      %p37 = scmp.eq.s32.totalorder %s25, 1
      %p38 = por %p36, %p37
      %p39 = scmp.ne.s32.totalorder %s30, %s31
      %p40 = scmp.eq.s32.totalorder %s25, 0
      %p41 = por %p39, %p40
      %p42 = scmp.ne.s32.totalorder %s30, %s31
      %p43 = scmp.eq.s32.totalorder %s26, 1
      %p44 = por %p42, %p43
      %p46 = scmp.ne.s32.totalorder %s31, %s45
      %p47 = scmp.eq.s32.totalorder %s26, 0
      %p48 = por %p46, %p47
      %s49 = ssub.s32 %s20, %s27
      %p50 = scmp.eq.s32.totalorder %s49, 0
      %s52 = sadd.s32 %s51, 1
      %s53 = scalar_select %p50, %s51, %s52
      %p56 = pneg %p50
      %p57 = scmp.eq.s32.totalorder %s20, 1
      %p58 = por %p56, %p57
      %p59 = scmp.ne.s32.totalorder %s51, %s54
      %p60 = scmp.eq.s32.totalorder %s20, 0
      %p61 = por %p59, %p60
      %p62 = scmp.ne.s32.totalorder %s51, %s54
      %p63 = scmp.eq.s32.totalorder %s25, 1
      %p64 = por %p62, %p63
      %p65 = scmp.ne.s32.totalorder %s54, %s55
      %p66 = scmp.eq.s32.totalorder %s25, 0
      %p67 = por %p65, %p66
      %p68 = scmp.ne.s32.totalorder %s54, %s55
      %p69 = scmp.eq.s32.totalorder %s26, 1
      %p70 = por %p68, %p69
      %p72 = scmp.ne.s32.totalorder %s55, %s71
      %p73 = scmp.eq.s32.totalorder %s26, 0
      %p74 = por %p72, %p73
      %s75 = ssub.s32 %s20, %s27
      %p76 = scmp.eq.s32.totalorder %s75, 0
      %s78 = sadd.s32 %s77, 1
      %s79 = scalar_select %p76, %s77, %s78
      %p82 = pneg %p76
      %p83 = scmp.eq.s32.totalorder %s20, 1
      %p84 = por %p82, %p83
      %p85 = scmp.ne.s32.totalorder %s77, %s80
      %p86 = scmp.eq.s32.totalorder %s20, 0
      %p87 = por %p85, %p86
      %p88 = scmp.ne.s32.totalorder %s77, %s80
      %p89 = scmp.eq.s32.totalorder %s25, 1
      %p90 = por %p88, %p89
      %p91 = scmp.ne.s32.totalorder %s80, %s81
      %p92 = scmp.eq.s32.totalorder %s25, 0
      %p93 = por %p91, %p92
      %p94 = scmp.ne.s32.totalorder %s80, %s81
      %p95 = scmp.eq.s32.totalorder %s26, 1
      %p96 = por %p94, %p95
      %p98 = scmp.ne.s32.totalorder %s81, %s97
      %p99 = scmp.eq.s32.totalorder %s26, 0
      %p100 = por %p98, %p99
      %s102 = sadd.s32 %s101, 1
      %p105 = scmp.eq.s32.totalorder %s20, 1
      %p106 = scmp.ne.s32.totalorder %s101, %s103
      %p107 = scmp.eq.s32.totalorder %s20, 0
      %p108 = por %p106, %p107
      %p109 = scmp.ne.s32.totalorder %s101, %s103
      %p110 = scmp.eq.s32.totalorder %s25, 1
      %p111 = por %p109, %p110
      %p112 = scmp.ne.s32.totalorder %s103, %s104
      %p113 = scmp.eq.s32.totalorder %s25, 0
      %p114 = por %p112, %p113
      %p115 = scmp.ne.s32.totalorder %s103, %s104
      %p116 = scmp.eq.s32.totalorder %s26, 1
      %p117 = por %p115, %p116
      %p119 = scmp.ne.s32.totalorder %s104, %s118
      %p120 = scmp.eq.s32.totalorder %s26, 0
      %p121 = por %p119, %p120
      %s123 = sadd.s32 %s122, 1
      %p126 = scmp.eq.s32.totalorder %s20, 1
      %p127 = scmp.ne.s32.totalorder %s122, %s124
      %p128 = scmp.eq.s32.totalorder %s20, 0
      %p129 = por %p127, %p128
      %p130 = scmp.ne.s32.totalorder %s122, %s124
      %p131 = scmp.eq.s32.totalorder %s25, 1
      %p132 = por %p130, %p131
      %p133 = scmp.ne.s32.totalorder %s124, %s125
      %p134 = scmp.eq.s32.totalorder %s25, 0
      %p135 = por %p133, %p134
      %p136 = scmp.ne.s32.totalorder %s124, %s125
      %p137 = scmp.eq.s32.totalorder %s26, 1
      %p138 = por %p136, %p137
      %p140 = scmp.ne.s32.totalorder %s125, %s139
      %p141 = scmp.eq.s32.totalorder %s26, 0
      %p142 = por %p140, %p141
      %s144 = sadd.s32 %s143, 1
      %p147 = scmp.eq.s32.totalorder %s20, 1
      %p148 = scmp.ne.s32.totalorder %s143, %s145
      %p149 = scmp.eq.s32.totalorder %s20, 0
      %p150 = por %p148, %p149
      %p151 = scmp.ne.s32.totalorder %s143, %s145
      %p152 = scmp.eq.s32.totalorder %s25, 1
      %p153 = por %p151, %p152
      %p154 = scmp.ne.s32.totalorder %s145, %s146
      %p155 = scmp.eq.s32.totalorder %s25, 0
      %p156 = por %p154, %p155
      %p157 = scmp.ne.s32.totalorder %s145, %s146
      %p158 = scmp.eq.s32.totalorder %s26, 1
      %p159 = por %p157, %p158
      %p161 = scmp.ne.s32.totalorder %s146, %s160
      %p162 = scmp.eq.s32.totalorder %s26, 0
      %p163 = por %p161, %p162
      %s165 = sadd.s32 %s164, 1
      %p168 = scmp.eq.s32.totalorder %s20, 1
      %p169 = scmp.ne.s32.totalorder %s164, %s166
      %p170 = scmp.eq.s32.totalorder %s20, 0
      %p171 = por %p169, %p170
      %p172 = scmp.ne.s32.totalorder %s164, %s166
      %p173 = scmp.eq.s32.totalorder %s25, 1
      %p174 = por %p172, %p173
      %p175 = scmp.ne.s32.totalorder %s166, %s167
      %p176 = scmp.eq.s32.totalorder %s25, 0
      %p177 = por %p175, %p176
      %p178 = scmp.ne.s32.totalorder %s166, %s167
      %p179 = scmp.eq.s32.totalorder %s26, 1
      %p180 = por %p178, %p179
      %p182 = scmp.ne.s32.totalorder %s167, %s181
      %p183 = scmp.eq.s32.totalorder %s26, 0
      %p184 = por %p182, %p183
      %s186 = sadd.s32 %s185, 1
      %p189 = scmp.eq.s32.totalorder %s20, 1
      %p190 = scmp.ne.s32.totalorder %s185, %s187
      %p191 = scmp.eq.s32.totalorder %s20, 0
      %p192 = por %p190, %p191
      %p193 = scmp.ne.s32.totalorder %s185, %s187
      %p194 = scmp.eq.s32.totalorder %s25, 1
      %p195 = por %p193, %p194
      %p196 = scmp.ne.s32.totalorder %s187, %s188
      %p197 = scmp.eq.s32.totalorder %s25, 0
      %p198 = por %p196, %p197
      %p199 = scmp.ne.s32.totalorder %s187, %s188
      %p200 = scmp.eq.s32.totalorder %s26, 1
      %p201 = por %p199, %p200
      %p203 = scmp.ne.s32.totalorder %s188, %s202
      %p204 = scmp.eq.s32.totalorder %s26, 0
      %p205 = por %p203, %p204
      %s207 = sadd.s32 %s206, 1
      %p210 = scmp.eq.s32.totalorder %s20, 1
      %p211 = scmp.ne.s32.totalorder %s206, %s208
      %p212 = scmp.eq.s32.totalorder %s20, 0
      %p213 = por %p211, %p212
      %p214 = scmp.ne.s32.totalorder %s206, %s208
      %p215 = scmp.eq.s32.totalorder %s25, 1
      %p216 = por %p214, %p215
      %p217 = scmp.ne.s32.totalorder %s208, %s209
      %p218 = scmp.eq.s32.totalorder %s25, 0
      %p219 = por %p217, %p218
      %p220 = scmp.ne.s32.totalorder %s208, %s209
      %p221 = scmp.eq.s32.totalorder %s26, 1
      %p222 = por %p220, %p221
      %p224 = scmp.ne.s32.totalorder %s209, %s223
      %p225 = scmp.eq.s32.totalorder %s26, 0
      %p226 = por %p224, %p225
      %s228 = sadd.s32 %s227, 1
      %p231 = scmp.eq.s32.totalorder %s20, 1
      %p232 = scmp.ne.s32.totalorder %s227, %s229
      %p233 = scmp.eq.s32.totalorder %s20, 0
      %p234 = por %p232, %p233
      %p235 = scmp.ne.s32.totalorder %s227, %s229
      %p236 = scmp.eq.s32.totalorder %s25, 1
      %p237 = por %p235, %p236
      %p238 = scmp.ne.s32.totalorder %s229, %s230
      %p239 = scmp.eq.s32.totalorder %s25, 0
      %p240 = por %p238, %p239
      %p241 = scmp.ne.s32.totalorder %s229, %s230
      %p242 = scmp.eq.s32.totalorder %s26, 1
      %p243 = por %p241, %p242
      %p245 = scmp.ne.s32.totalorder %s230, %s244
      %p246 = scmp.eq.s32.totalorder %s26, 0
      %p247 = por %p245, %p246
      %s249 = sadd.s32 %s248, 1
      %p252 = scmp.eq.s32.totalorder %s20, 1
      %p253 = scmp.ne.s32.totalorder %s248, %s250
      %p254 = scmp.eq.s32.totalorder %s20, 0
      %p255 = por %p253, %p254
      %p256 = scmp.ne.s32.totalorder %s248, %s250
      %p257 = scmp.eq.s32.totalorder %s25, 1
      %p258 = por %p256, %p257
      %p259 = scmp.ne.s32.totalorder %s250, %s251
      %p260 = scmp.eq.s32.totalorder %s25, 0
      %p261 = por %p259, %p260
      %p262 = scmp.ne.s32.totalorder %s250, %s251
      %p263 = scmp.eq.s32.totalorder %s26, 1
      %p264 = por %p262, %p263
      %p266 = scmp.ne.s32.totalorder %s251, %s265
      %p267 = scmp.eq.s32.totalorder %s26, 0
      %p268 = por %p266, %p267
      %s270 = sadd.s32 %s269, 1
      %p273 = scmp.eq.s32.totalorder %s20, 1
      %p274 = scmp.ne.s32.totalorder %s269, %s271
      %p275 = scmp.eq.s32.totalorder %s20, 0
      %p276 = por %p274, %p275
      %p277 = scmp.ne.s32.totalorder %s269, %s271
      %p278 = scmp.eq.s32.totalorder %s25, 1
      %p279 = por %p277, %p278
      %p280 = scmp.ne.s32.totalorder %s271, %s272
      %p281 = scmp.eq.s32.totalorder %s25, 0
      %p282 = por %p280, %p281
      %p283 = scmp.ne.s32.totalorder %s271, %s272
      %p284 = scmp.eq.s32.totalorder %s26, 1
      %p285 = por %p283, %p284
      %p287 = scmp.ne.s32.totalorder %s272, %s286
      %p288 = scmp.eq.s32.totalorder %s26, 0
      %p289 = por %p287, %p288
      %s291 = sadd.s32 %s290, 1
      %p294 = scmp.eq.s32.totalorder %s20, 1
      %p295 = scmp.ne.s32.totalorder %s290, %s292
      %p296 = scmp.eq.s32.totalorder %s20, 0
      %p297 = por %p295, %p296
      %p298 = scmp.ne.s32.totalorder %s290, %s292
      %p299 = scmp.eq.s32.totalorder %s25, 1
      %p300 = por %p298, %p299
      %p301 = scmp.ne.s32.totalorder %s292, %s293
      %p302 = scmp.eq.s32.totalorder %s25, 0
      %p303 = por %p301, %p302
      %p304 = scmp.ne.s32.totalorder %s292, %s293
      %p305 = scmp.eq.s32.totalorder %s26, 1
      %p306 = por %p304, %p305
      %p308 = scmp.ne.s32.totalorder %s293, %s307
      %p309 = scmp.eq.s32.totalorder %s26, 0
      %p310 = por %p308, %p309
      %s311 = ssub.s32 %s20, %s27
      %p312 = scmp.eq.s32.totalorder %s311, 0
      %s314 = sadd.s32 %s313, 1
      %s315 = scalar_select %p312, %s313, %s314
      %p318 = pneg %p312
      %p319 = scmp.eq.s32.totalorder %s20, 1
      %p320 = por %p318, %p319
      %p321 = scmp.ne.s32.totalorder %s313, %s316
      %p322 = scmp.eq.s32.totalorder %s20, 0
      %p323 = por %p321, %p322
      %p324 = scmp.ne.s32.totalorder %s313, %s316
      %p325 = scmp.eq.s32.totalorder %s25, 1
      %p326 = por %p324, %p325
      %p327 = scmp.ne.s32.totalorder %s316, %s317
      %p328 = scmp.eq.s32.totalorder %s25, 0
      %p329 = por %p327, %p328
      %p330 = scmp.ne.s32.totalorder %s316, %s317
      %p331 = scmp.eq.s32.totalorder %s26, 1
      %p332 = por %p330, %p331
      %p334 = scmp.ne.s32.totalorder %s317, %s333
      %p335 = scmp.eq.s32.totalorder %s26, 0
      %p336 = por %p334, %p335
      %p337 = scmp.le.s32.totalorder 1, %s20
      %p338 = scmp.lt.s32.totalorder %s20, 3
      %p339 = pnand %p337, %p338
      %p340 = pneg %p339
      // Predicated region
      $region9: #{patch_embedding_stage.1} parent=5 // pred_check
        _
      $region10: #{patch_embedding_stage.1} parent=5 // pred_check_branch
        %342 = sbr.rel (%p339) target = $region12
      $region11: #{patch_embedding_stage.1} parent=5 // pred_region
        %s343 = ssub.s32 %s20, 1
        // Predicated region
        $region13: #{patch_embedding_stage.1} parent=11 // pred_check
          %p344 = pneg %p41
        $region14: #{patch_embedding_stage.1} parent=11 // pred_check_branch
          %346 = sbr.rel (%p344) target = $region16
        $region15: #{patch_embedding_stage.1} parent=11 // pred_region
          %s348 = ssub.s32 16, 16
          %349 = vsyncadd [#allocation3], %s348
          %s351 = sshll.u32 %s0, 4
          %s352 = int_to_ptr.vmem [resolvable:$true] %s351
          %354 = dma.vmem_to_smem %s352, 16, [#allocation2], [#allocation3]
        $region16: #{patch_embedding_stage.1} parent=11 // pred_fallthru
          _
        // Predicated region
        $region17: #{patch_embedding_stage.1} parent=11 // pred_check
          %p355 = pneg %p114
        $region18: #{patch_embedding_stage.1} parent=11 // pred_check_branch
          %357 = sbr.rel (%p355) target = $region20
        $region19: #{patch_embedding_stage.1} parent=11 // pred_region
          _
        $region20: #{patch_embedding_stage.1} parent=11 // pred_fallthru
          _
        // Predicated region
        $region21: #{patch_embedding_stage.1} parent=11 // pred_check
          %p358 = pneg %p135
        $region22: #{patch_embedding_stage.1} parent=11 // pred_check_branch
          %360 = sbr.rel (%p358) target = $region24
        $region23: #{patch_embedding_stage.1} parent=11 // pred_region
          _
        $region24: #{patch_embedding_stage.1} parent=11 // pred_fallthru
          _
        // Predicated region
        $region25: #{patch_embedding_stage.1} parent=11 // pred_check
          %p361 = pneg %p156
        $region26: #{patch_embedding_stage.1} parent=11 // pred_check_branch
          %363 = sbr.rel (%p361) target = $region28
        $region27: #{patch_embedding_stage.1} parent=11 // pred_region
          _
        $region28: #{patch_embedding_stage.1} parent=11 // pred_fallthru
          _
        // Predicated region
        $region29: #{patch_embedding_stage.1} parent=11 // pred_check
          %p364 = pneg %p177
        $region30: #{patch_embedding_stage.1} parent=11 // pred_check_branch
          %366 = sbr.rel (%p364) target = $region32
        $region31: #{patch_embedding_stage.1} parent=11 // pred_region
          _
        $region32: #{patch_embedding_stage.1} parent=11 // pred_fallthru
          _
        // Predicated region
        $region33: #{patch_embedding_stage.1} parent=11 // pred_check
          %p367 = pneg %p198
        $region34: #{patch_embedding_stage.1} parent=11 // pred_check_branch
          %369 = sbr.rel (%p367) target = $region36
        $region35: #{patch_embedding_stage.1} parent=11 // pred_region
          _
        $region36: #{patch_embedding_stage.1} parent=11 // pred_fallthru
          _
        // Predicated region
        $region37: #{patch_embedding_stage.1} parent=11 // pred_check
          %p370 = pneg %p219
        $region38: #{patch_embedding_stage.1} parent=11 // pred_check_branch
          %372 = sbr.rel (%p370) target = $region40
        $region39: #{patch_embedding_stage.1} parent=11 // pred_region
          _
        $region40: #{patch_embedding_stage.1} parent=11 // pred_fallthru
          _
        // Predicated region
        $region41: #{patch_embedding_stage.1} parent=11 // pred_check
          %p373 = pneg %p240
        $region42: #{patch_embedding_stage.1} parent=11 // pred_check_branch
          %375 = sbr.rel (%p373) target = $region44
        $region43: #{patch_embedding_stage.1} parent=11 // pred_region
          _
        $region44: #{patch_embedding_stage.1} parent=11 // pred_fallthru
          _
        // Predicated region
        $region45: #{patch_embedding_stage.1} parent=11 // pred_check
          %p376 = pneg %p261
        $region46: #{patch_embedding_stage.1} parent=11 // pred_check_branch
          %378 = sbr.rel (%p376) target = $region48
        $region47: #{patch_embedding_stage.1} parent=11 // pred_region
          _
        $region48: #{patch_embedding_stage.1} parent=11 // pred_fallthru
          _
        // Predicated region
        $region49: #{patch_embedding_stage.1} parent=11 // pred_check
          %p379 = pneg %p282
        $region50: #{patch_embedding_stage.1} parent=11 // pred_check_branch
          %381 = sbr.rel (%p379) target = $region52
        $region51: #{patch_embedding_stage.1} parent=11 // pred_region
          _
        $region52: #{patch_embedding_stage.1} parent=11 // pred_fallthru
          _
        // Predicated region
        $region53: #{patch_embedding_stage.1} parent=11 // pred_check
          %p382 = pneg %p303
        $region54: #{patch_embedding_stage.1} parent=11 // pred_check_branch
          %384 = sbr.rel (%p382) target = $region56
        $region55: #{patch_embedding_stage.1} parent=11 // pred_region
          _
        $region56: #{patch_embedding_stage.1} parent=11 // pred_fallthru
          _
      $region12: #{patch_embedding_stage.1} parent=5 // pred_fallthru
        _
      %p385 = scmp.lt.s32.totalorder %s20, 2
      // Predicated region
      $region57: #{patch_embedding_stage.1} parent=5 // pred_check
        %p386 = pneg %p385
      $region58: #{patch_embedding_stage.1} parent=5 // pred_check_branch
        %388 = sbr.rel (%p386) target = $region60
      $region59: #{patch_embedding_stage.1} parent=5 // pred_region
        // Predicated region
        $region61: #{patch_embedding_stage.1} parent=59 // pred_check
          %p389 = pneg %p61
        $region62: #{patch_embedding_stage.1} parent=59 // pred_check_branch
          %391 = sbr.rel (%p389) target = $region64
        $region63: #{patch_embedding_stage.1} parent=59 // pred_region
          %p392 = scmp.lt.s32.totalorder %s20, 1
          %s393 = scalar_select %p392, %s20, 1
          %s394 = smul.addr %s393, 128
          %s395 = smul.addr %s394, 4
          %s396 = scalar_lea.vmem %s1, %s395
        $region64: #{patch_embedding_stage.1} parent=59 // pred_fallthru
          _
        // Predicated region
        $region65: #{patch_embedding_stage.1} parent=59 // pred_check
          %p397 = pneg %p87
        $region66: #{patch_embedding_stage.1} parent=59 // pred_check_branch
          %399 = sbr.rel (%p397) target = $region68
        $region67: #{patch_embedding_stage.1} parent=59 // pred_region
          %p400 = scmp.lt.s32.totalorder %s20, 1
          %s401 = scalar_select %p400, %s20, 1
          %s402 = smul.addr %s401, 16
          %s403 = smul.addr %s402, 4
          %s404 = scalar_lea.vmem %s2, %s403
        $region68: #{patch_embedding_stage.1} parent=59 // pred_fallthru
          _
      $region60: #{patch_embedding_stage.1} parent=5 // pred_fallthru
        _
      %p405 = scmp.le.s32.totalorder 1, %s20
      %p406 = scmp.lt.s32.totalorder %s20, 3
      %p407 = pnand %p405, %p406
      %p408 = pneg %p407
      // Predicated region
      $region69: #{patch_embedding_stage.1} parent=5 // pred_check
        _
      $region70: #{patch_embedding_stage.1} parent=5 // pred_check_branch
        %410 = sbr.rel (%p407) target = $region72
      $region71: #{patch_embedding_stage.1} parent=5 // pred_region
        %s411 = ssub.s32 %s20, 1
        // Predicated region
        $region73: #{patch_embedding_stage.1} parent=71 // pred_check
          %p412 = pneg %p41
        $region74: #{patch_embedding_stage.1} parent=71 // pred_check_branch
          %414 = sbr.rel (%p412) target = $region76
        $region75: #{patch_embedding_stage.1} parent=71 // pred_region
          %415 = dma.done [#allocation3], 16
        $region76: #{patch_embedding_stage.1} parent=71 // pred_fallthru
          _
        %416 = sfence
        %p417 = pneg %p41
        %p418 = pneg %p38
        %p419 = scmp.lt.s32.totalorder %s25, 1
        %s420 = scalar_select %p419, %s25, 1
        %s421 = smul.addr %s420, 128
        %s422 = smul.addr %s421, 4
        %s423 = scalar_lea.vmem %s1, %s422
        %p424 = pneg %p67
        %p425 = pneg %p64
        %p426 = scmp.lt.s32.totalorder %s25, 1
        %s427 = scalar_select %p426, %s25, 1
        %s428 = smul.addr %s427, 16
        %s429 = smul.addr %s428, 4
        %s430 = scalar_lea.vmem %s2, %s429
        %p431 = pneg %p93
        %p432 = pneg %p90
        %p433 = pneg %p114
        %p434 = pneg %p111
        %p435 = pneg %p135
        %p436 = pneg %p132
        %p437 = pneg %p156
        %p438 = pneg %p153
        %p439 = pneg %p177
        %p440 = pneg %p174
        %p441 = pneg %p198
        %p442 = pneg %p195
        %p443 = pneg %p219
        %p444 = pneg %p216
        %p445 = pneg %p240
        %p446 = pneg %p237
        %p447 = pneg %p261
        %p448 = pneg %p258
        %p449 = pneg %p282
        %p450 = pneg %p279
        %p451 = pneg %p303
        %p452 = pneg %p300
        %p453 = pneg %p329
        %p454 = pneg %p326
        %p455 = scmp.lt.s32.totalorder %s25, 1
        %s456 = scalar_select %p455, %s25, 1
        %s457 = smul.addr %s456, 16
        %s458 = smul.addr %s457, 8
        %s459 = scalar_lea.vmem %s13, %s458
        %p460 = scmp.lt.s32.totalorder %s25, 1
        %s461 = scalar_select %p460, %s25, 1
        %s462 = smul.addr %s461, 128
        %s463 = smul.addr %s462, 4
        %s464 = scalar_lea.vmem %s1, %s463
        %p465 = scmp.lt.s32.totalorder %s25, 1
        %s466 = scalar_select %p465, %s25, 1
        %s467 = smul.addr %s466, 16
        %s468 = smul.addr %s467, 4
        %s469 = scalar_lea.vmem %s2, %s468
        %p470 = scmp.lt.s32.totalorder %s25, 1
        %s471 = scalar_select %p470, %s25, 1
        %s472 = smul.addr %s471, 16
        %s473 = smul.addr %s472, 8
        %s474 = scalar_lea.vmem %s13, %s473
        %s476 = sld [smem:[#allocation2]]
        %s477 = sld [smem:[#allocation2 + $0x1]]
        %s478 = sld [smem:[#allocation2 + $0x2]]
        %v479 = vld [vmem:[%s464] sm:$0xff]
        %v480 = vld [vmem:[%s464 + $0x8] sm:$0xff]
        %v481 = vld [vmem:[%s464 + $0x10] sm:$0xff]
        %v482 = vld [vmem:[%s464 + $0x18] sm:$0xff]
        %v483 = vld [vmem:[%s464 + $0x20] sm:$0xff]
        %v484 = vld [vmem:[%s464 + $0x28] sm:$0xff]
        %v485 = vld [vmem:[%s464 + $0x30] sm:$0xff]
        %v486 = vld [vmem:[%s464 + $0x38] sm:$0xff]
        %v487 = vld [vmem:[%s464 + $0x40] sm:$0xff]
        %v488 = vld [vmem:[%s464 + $0x48] sm:$0xff]
        %v489 = vld [vmem:[%s464 + $0x50] sm:$0xff]
        %v490 = vld [vmem:[%s464 + $0x58] sm:$0xff]
        %v491 = vld [vmem:[%s464 + $0x60] sm:$0xff]
        %v492 = vld [vmem:[%s464 + $0x68] sm:$0xff]
        %v493 = vld [vmem:[%s464 + $0x70] sm:$0xff]
        %v494 = vld [vmem:[%s464 + $0x78] sm:$0xff]
        %v495 = vld [vmem:[%s464 + $0x80] sm:$0xff]
        %v496 = vld [vmem:[%s464 + $0x88] sm:$0xff]
        %v497 = vld [vmem:[%s464 + $0x90] sm:$0xff]
        %v498 = vld [vmem:[%s464 + $0x98] sm:$0xff]
        %v499 = vld [vmem:[%s464 + $0xa0] sm:$0xff]
        %v500 = vld [vmem:[%s464 + $0xa8] sm:$0xff]
        %v501 = vld [vmem:[%s464 + $0xb0] sm:$0xff]
        %v502 = vld [vmem:[%s464 + $0xb8] sm:$0xff]
        %v503 = vld [vmem:[%s464 + $0xc0] sm:$0xff]
        %v504 = vld [vmem:[%s464 + $0xc8] sm:$0xff]
        %v505 = vld [vmem:[%s464 + $0xd0] sm:$0xff]
        %v506 = vld [vmem:[%s464 + $0xd8] sm:$0xff]
        %v507 = vld [vmem:[%s464 + $0xe0] sm:$0xff]
        %v508 = vld [vmem:[%s464 + $0xe8] sm:$0xff]
        %v509 = vld [vmem:[%s464 + $0xf0] sm:$0xff]
        %v510 = vld [vmem:[%s464 + $0xf8] sm:$0xff]
        %v511 = vld [vmem:[%s464 + $0x100] sm:$0xff]
        %v512 = vld [vmem:[%s464 + $0x108] sm:$0xff]
        %v513 = vld [vmem:[%s464 + $0x110] sm:$0xff]
        %v514 = vld [vmem:[%s464 + $0x118] sm:$0xff]
        %v515 = vld [vmem:[%s464 + $0x120] sm:$0xff]
        %v516 = vld [vmem:[%s464 + $0x128] sm:$0xff]
        %v517 = vld [vmem:[%s464 + $0x130] sm:$0xff]
        %v518 = vld [vmem:[%s464 + $0x138] sm:$0xff]
        %v519 = vld [vmem:[%s464 + $0x140] sm:$0xff]
        %v520 = vld [vmem:[%s464 + $0x148] sm:$0xff]
        %v521 = vld [vmem:[%s464 + $0x150] sm:$0xff]
        %v522 = vld [vmem:[%s464 + $0x158] sm:$0xff]
        %v523 = vld [vmem:[%s464 + $0x160] sm:$0xff]
        %v524 = vld [vmem:[%s464 + $0x168] sm:$0xff]
        %v525 = vld [vmem:[%s464 + $0x170] sm:$0xff]
        %v526 = vld [vmem:[%s464 + $0x178] sm:$0xff]
        %v527 = vld [vmem:[%s464 + $0x180] sm:$0xff]
        %v528 = vld [vmem:[%s464 + $0x188] sm:$0xff]
        %v529 = vld [vmem:[%s464 + $0x190] sm:$0xff]
        %v530 = vld [vmem:[%s464 + $0x198] sm:$0xff]
        %v531 = vld [vmem:[%s464 + $0x1a0] sm:$0xff]
        %v532 = vld [vmem:[%s464 + $0x1a8] sm:$0xff]
        %v533 = vld [vmem:[%s464 + $0x1b0] sm:$0xff]
        %v534 = vld [vmem:[%s464 + $0x1b8] sm:$0xff]
        %v535 = vld [vmem:[%s464 + $0x1c0] sm:$0xff]
        %v536 = vld [vmem:[%s464 + $0x1c8] sm:$0xff]
        %v537 = vld [vmem:[%s464 + $0x1d0] sm:$0xff]
        %v538 = vld [vmem:[%s464 + $0x1d8] sm:$0xff]
        %v539 = vld [vmem:[%s464 + $0x1e0] sm:$0xff]
        %v540 = vld [vmem:[%s464 + $0x1e8] sm:$0xff]
        %v541 = vld [vmem:[%s464 + $0x1f0] sm:$0xff]
        %v542 = vld [vmem:[%s464 + $0x1f8] sm:$0xff]
        %v543 = vld [vmem:[%s3] sm:$0xf]
        %v544 = vld [vmem:[%s3 + $0x4] sm:$0xf]
        %v545 = vld [vmem:[%s3 + $0x8] sm:$0xf]
        %v546 = vld [vmem:[%s3 + $0xc] sm:$0xf]
        %v547 = vld [vmem:[%s3 + $0x10] sm:$0xf]
        %v548 = vld [vmem:[%s3 + $0x14] sm:$0xf]
        %v549 = vld [vmem:[%s3 + $0x18] sm:$0xf]
        %v550 = vld [vmem:[%s3 + $0x1c] sm:$0xf]
        %v551 = vld [vmem:[%s3 + $0x20] sm:$0xf]
        %v552 = vld [vmem:[%s3 + $0x24] sm:$0xf]
        %v553 = vld [vmem:[%s3 + $0x28] sm:$0xf]
        %v554 = vld [vmem:[%s3 + $0x2c] sm:$0xf]
        %v555 = vld [vmem:[%s3 + $0x30] sm:$0xf]
        %v556 = vld [vmem:[%s3 + $0x34] sm:$0xf]
        %v557 = vld [vmem:[%s3 + $0x38] sm:$0xf]
        %v558 = vld [vmem:[%s3 + $0x3c] sm:$0xf]
        %v559 = vld [vmem:[%s3 + $0x40] sm:$0xf]
        %v560 = vld [vmem:[%s3 + $0x44] sm:$0xf]
        %v625 = vunpack.c.l.b16 %v479
        %v626 = vunpack.c.h.b16 %v479
        %v627 = vunpack.c.l.b16 %v480
        %v628 = vunpack.c.h.b16 %v480
        %v629 = vunpack.c.l.b16 %v481
        %v630 = vunpack.c.h.b16 %v481
        %v631 = vunpack.c.l.b16 %v482
        %v632 = vunpack.c.h.b16 %v482
        %v633 = vunpack.c.l.b16 %v483
        %v634 = vunpack.c.h.b16 %v483
        %v635 = vunpack.c.l.b16 %v484
        %v636 = vunpack.c.h.b16 %v484
        %v637 = vunpack.c.l.b16 %v485
        %v638 = vunpack.c.h.b16 %v485
        %v639 = vunpack.c.l.b16 %v486
        %v640 = vunpack.c.h.b16 %v486
        %v641 = vunpack.c.l.b16 %v487
        %v642 = vunpack.c.h.b16 %v487
        %v643 = vunpack.c.l.b16 %v488
        %v644 = vunpack.c.h.b16 %v488
        %v645 = vunpack.c.l.b16 %v489
        %v646 = vunpack.c.h.b16 %v489
        %v647 = vunpack.c.l.b16 %v490
        %v648 = vunpack.c.h.b16 %v490
        %v649 = vunpack.c.l.b16 %v491
        %v650 = vunpack.c.h.b16 %v491
        %v651 = vunpack.c.l.b16 %v492
        %v652 = vunpack.c.h.b16 %v492
        %v653 = vunpack.c.l.b16 %v493
        %v654 = vunpack.c.h.b16 %v493
        %v655 = vunpack.c.l.b16 %v494
        %v656 = vunpack.c.h.b16 %v494
        %v657 = vunpack.c.l.b16 %v495
        %v658 = vunpack.c.h.b16 %v495
        %v659 = vunpack.c.l.b16 %v496
        %v660 = vunpack.c.h.b16 %v496
        %v661 = vunpack.c.l.b16 %v497
        %v662 = vunpack.c.h.b16 %v497
        %v663 = vunpack.c.l.b16 %v498
        %v664 = vunpack.c.h.b16 %v498
        %v665 = vunpack.c.l.b16 %v499
        %v666 = vunpack.c.h.b16 %v499
        %v667 = vunpack.c.l.b16 %v500
        %v668 = vunpack.c.h.b16 %v500
        %v669 = vunpack.c.l.b16 %v501
        %v670 = vunpack.c.h.b16 %v501
        %v671 = vunpack.c.l.b16 %v502
        %v672 = vunpack.c.h.b16 %v502
        %v673 = vunpack.c.l.b16 %v503
        %v674 = vunpack.c.h.b16 %v503
        %v675 = vunpack.c.l.b16 %v504
        %v676 = vunpack.c.h.b16 %v504
        %v677 = vunpack.c.l.b16 %v505
        %v678 = vunpack.c.h.b16 %v505
        %v679 = vunpack.c.l.b16 %v506
        %v680 = vunpack.c.h.b16 %v506
        %v681 = vunpack.c.l.b16 %v507
        %v682 = vunpack.c.h.b16 %v507
        %v683 = vunpack.c.l.b16 %v508
        %v684 = vunpack.c.h.b16 %v508
        %v685 = vunpack.c.l.b16 %v509
        %v686 = vunpack.c.h.b16 %v509
        %v687 = vunpack.c.l.b16 %v510
        %v688 = vunpack.c.h.b16 %v510
        %v689 = vunpack.c.l.b16 %v511
        %v690 = vunpack.c.h.b16 %v511
        %v691 = vunpack.c.l.b16 %v512
        %v692 = vunpack.c.h.b16 %v512
        %v693 = vunpack.c.l.b16 %v513
        %v694 = vunpack.c.h.b16 %v513
        %v695 = vunpack.c.l.b16 %v514
        %v696 = vunpack.c.h.b16 %v514
        %v697 = vunpack.c.l.b16 %v515
        %v698 = vunpack.c.h.b16 %v515
        %v699 = vunpack.c.l.b16 %v516
        %v700 = vunpack.c.h.b16 %v516
        %v701 = vunpack.c.l.b16 %v517
        %v702 = vunpack.c.h.b16 %v517
        %v703 = vunpack.c.l.b16 %v518
        %v704 = vunpack.c.h.b16 %v518
        %v705 = vunpack.c.l.b16 %v519
        %v706 = vunpack.c.h.b16 %v519
        %v707 = vunpack.c.l.b16 %v520
        %v708 = vunpack.c.h.b16 %v520
        %v709 = vunpack.c.l.b16 %v521
        %v710 = vunpack.c.h.b16 %v521
        %v711 = vunpack.c.l.b16 %v522
        %v712 = vunpack.c.h.b16 %v522
        %v713 = vunpack.c.l.b16 %v523
        %v714 = vunpack.c.h.b16 %v523
        %v715 = vunpack.c.l.b16 %v524
        %v716 = vunpack.c.h.b16 %v524
        %v717 = vunpack.c.l.b16 %v525
        %v718 = vunpack.c.h.b16 %v525
        %v719 = vunpack.c.l.b16 %v526
        %v720 = vunpack.c.h.b16 %v526
        %v721 = vunpack.c.l.b16 %v527
        %v722 = vunpack.c.h.b16 %v527
        %v723 = vunpack.c.l.b16 %v528
        %v724 = vunpack.c.h.b16 %v528
        %v725 = vunpack.c.l.b16 %v529
        %v726 = vunpack.c.h.b16 %v529
        %v727 = vunpack.c.l.b16 %v530
        %v728 = vunpack.c.h.b16 %v530
        %v729 = vunpack.c.l.b16 %v531
        %v730 = vunpack.c.h.b16 %v531
        %v731 = vunpack.c.l.b16 %v532
        %v732 = vunpack.c.h.b16 %v532
        %v733 = vunpack.c.l.b16 %v533
        %v734 = vunpack.c.h.b16 %v533
        %v735 = vunpack.c.l.b16 %v534
        %v736 = vunpack.c.h.b16 %v534
        %v737 = vunpack.c.l.b16 %v535
        %v738 = vunpack.c.h.b16 %v535
        %v739 = vunpack.c.l.b16 %v536
        %v740 = vunpack.c.h.b16 %v536
        %v741 = vunpack.c.l.b16 %v537
        %v742 = vunpack.c.h.b16 %v537
        %v743 = vunpack.c.l.b16 %v538
        %v744 = vunpack.c.h.b16 %v538
        %v745 = vunpack.c.l.b16 %v539
        %v746 = vunpack.c.h.b16 %v539
        %v747 = vunpack.c.l.b16 %v540
        %v748 = vunpack.c.h.b16 %v540
        %v749 = vunpack.c.l.b16 %v541
        %v750 = vunpack.c.h.b16 %v541
        %v751 = vunpack.c.l.b16 %v542
        %v752 = vunpack.c.h.b16 %v542
        %v753 = vpack.c.b16 %v627, %v625
        %v754 = vpack.c.b16 %v628, %v626
        %v755 = vpack.c.b16 %v631, %v629
        %v756 = vpack.c.b16 %v632, %v630
        %v757 = vpack.c.b16 %v635, %v633
        %v758 = vpack.c.b16 %v636, %v634
        %v759 = vpack.c.b16 %v639, %v637
        %v760 = vpack.c.b16 %v640, %v638
        %v761 = vpack.c.b16 %v643, %v641
        %v762 = vpack.c.b16 %v644, %v642
        %v763 = vpack.c.b16 %v647, %v645
        %v764 = vpack.c.b16 %v648, %v646
        %v765 = vpack.c.b16 %v651, %v649
        %v766 = vpack.c.b16 %v652, %v650
        %v767 = vpack.c.b16 %v655, %v653
        %v768 = vpack.c.b16 %v656, %v654
        %v769 = vpack.c.b16 %v659, %v657
        %v770 = vpack.c.b16 %v660, %v658
        %v771 = vpack.c.b16 %v663, %v661
        %v772 = vpack.c.b16 %v664, %v662
        %v773 = vpack.c.b16 %v667, %v665
        %v774 = vpack.c.b16 %v668, %v666
        %v775 = vpack.c.b16 %v671, %v669
        %v776 = vpack.c.b16 %v672, %v670
        %v777 = vpack.c.b16 %v675, %v673
        %v778 = vpack.c.b16 %v676, %v674
        %v779 = vpack.c.b16 %v679, %v677
        %v780 = vpack.c.b16 %v680, %v678
        %v781 = vpack.c.b16 %v683, %v681
        %v782 = vpack.c.b16 %v684, %v682
        %v783 = vpack.c.b16 %v687, %v685
        %v784 = vpack.c.b16 %v688, %v686
        %v785 = vpack.c.b16 %v691, %v689
        %v786 = vpack.c.b16 %v692, %v690
        %v787 = vpack.c.b16 %v695, %v693
        %v788 = vpack.c.b16 %v696, %v694
        %v789 = vpack.c.b16 %v699, %v697
        %v790 = vpack.c.b16 %v700, %v698
        %v791 = vpack.c.b16 %v703, %v701
        %v792 = vpack.c.b16 %v704, %v702
        %v793 = vpack.c.b16 %v707, %v705
        %v794 = vpack.c.b16 %v708, %v706
        %v795 = vpack.c.b16 %v711, %v709
        %v796 = vpack.c.b16 %v712, %v710
        %v797 = vpack.c.b16 %v715, %v713
        %v798 = vpack.c.b16 %v716, %v714
        %v799 = vpack.c.b16 %v719, %v717
        %v800 = vpack.c.b16 %v720, %v718
        %v801 = vpack.c.b16 %v723, %v721
        %v802 = vpack.c.b16 %v724, %v722
        %v803 = vpack.c.b16 %v727, %v725
        %v804 = vpack.c.b16 %v728, %v726
        %v805 = vpack.c.b16 %v731, %v729
        %v806 = vpack.c.b16 %v732, %v730
        %v807 = vpack.c.b16 %v735, %v733
        %v808 = vpack.c.b16 %v736, %v734
        %v809 = vpack.c.b16 %v739, %v737
        %v810 = vpack.c.b16 %v740, %v738
        %v811 = vpack.c.b16 %v743, %v741
        %v812 = vpack.c.b16 %v744, %v742
        %v813 = vpack.c.b16 %v747, %v745
        %v814 = vpack.c.b16 %v748, %v746
        %v815 = vpack.c.b16 %v751, %v749
        %v816 = vpack.c.b16 %v752, %v750
        %v867 = vunpack.c.l.b16 %v543
        %v868 = vunpack.c.l.b16 %v544
        %v869 = vunpack.c.l.b16 %v545
        %v870 = vunpack.c.l.b16 %v546
        %v871 = vunpack.c.l.b16 %v547
        %v872 = vunpack.c.l.b16 %v548
        %v873 = vunpack.c.l.b16 %v549
        %v874 = vunpack.c.l.b16 %v550
        %v875 = vunpack.c.l.b16 %v551
        %v876 = vunpack.c.l.b16 %v552
        %v877 = vunpack.c.l.b16 %v553
        %v878 = vunpack.c.l.b16 %v554
        %v879 = vunpack.c.l.b16 %v555
        %v880 = vunpack.c.l.b16 %v556
        %v881 = vunpack.c.l.b16 %v557
        %v882 = vunpack.c.l.b16 %v558
        %v883 = vunpack.c.l.b16 %v559
        %v884 = vunpack.c.l.b16 %v560
        %v885 = vpack.c.b16 %v868, %v867
        %v886 = vpack.c.b16 %v870, %v869
        %v887 = vpack.c.b16 %v872, %v871
        %v888 = vpack.c.b16 %v874, %v873
        %v889 = vpack.c.b16 %v876, %v875
        %v890 = vpack.c.b16 %v878, %v877
        %v891 = vpack.c.b16 %v880, %v879
        %v892 = vpack.c.b16 %v882, %v881
        %v893 = vpack.c.b16 %v884, %v883
        %vm903 = vcmask 130048
        %v905 = vsel %vm903, %v754, 0
        %v908 = vsel %vm903, %v756, 0
        %v911 = vsel %vm903, %v758, 0
        %v914 = vsel %vm903, %v760, 0
        %v917 = vsel %vm903, %v762, 0
        %v920 = vsel %vm903, %v764, 0
        %v923 = vsel %vm903, %v766, 0
        %v926 = vsel %vm903, %v768, 0
        %v929 = vsel %vm903, %v770, 0
        %v932 = vsel %vm903, %v772, 0
        %v935 = vsel %vm903, %v774, 0
        %v938 = vsel %vm903, %v776, 0
        %v941 = vsel %vm903, %v778, 0
        %v944 = vsel %vm903, %v780, 0
        %v947 = vsel %vm903, %v782, 0
        %v950 = vsel %vm903, %v784, 0
        %v953 = vsel %vm903, %v786, 0
        %v956 = vsel %vm903, %v788, 0
        %v959 = vsel %vm903, %v790, 0
        %v962 = vsel %vm903, %v792, 0
        %v965 = vsel %vm903, %v794, 0
        %v968 = vsel %vm903, %v796, 0
        %v971 = vsel %vm903, %v798, 0
        %v974 = vsel %vm903, %v800, 0
        %v977 = vsel %vm903, %v802, 0
        %v980 = vsel %vm903, %v804, 0
        %v983 = vsel %vm903, %v806, 0
        %v986 = vsel %vm903, %v808, 0
        %v989 = vsel %vm903, %v810, 0
        %v992 = vsel %vm903, %v812, 0
        %v995 = vsel %vm903, %v814, 0
        %v998 = vsel %vm903, %v816, 0
        %1000 = vmatprep.subr.bf16.mxu0 0
        %1001 = vmatpush1.bf16.msra.mxu0 %v892
        %1002 = vmatprep.subr.bf16.mxu0 0
        %1003 = vmatpush1.bf16.msra.mxu0 %v891
        %1004 = vmatprep.subr.bf16.mxu0 0
        %1005 = vmatpush1.bf16.msra.mxu0 %v890
        %1006 = vmatprep.subr.bf16.mxu0 0
        %1007 = vmatpush1.bf16.msra.mxu0 %v889
        %1008 = vmatprep.subr.bf16.mxu0 0
        %1009 = vmatpush1.bf16.msra.mxu0 %v888
        %1010 = vmatprep.subr.bf16.mxu0 0
        %1011 = vmatpush1.bf16.msra.mxu0 %v887
        %1012 = vmatprep.subr.bf16.mxu0 0
        %1013 = vmatpush1.bf16.msra.mxu0 %v886
        %1014 = vmatprep.subr.bf16.mxu0 0
        %1015 = vmatpush1.bf16.msra.mxu0 %v885
        %1016 = vmatprep.subr.bf16.mxu0 0
        %1017 = vmatpush2.bf16.msra.mxu0 0
        %1018 = vmatprep.subr.bf16.mxu0 0
        %1019 = vmatpush2.bf16.msra.mxu0 0
        %1020 = vmatprep.subr.bf16.mxu0 0
        %1021 = vmatpush2.bf16.msra.mxu0 0
        %1022 = vmatprep.subr.bf16.mxu0 0
        %1023 = vmatpush2.bf16.msra.mxu0 0
        %1024 = vmatprep.subr.bf16.mxu0 0
        %1025 = vmatpush2.bf16.msra.mxu0 0
        %1026 = vmatprep.subr.bf16.mxu0 0
        %1027 = vmatpush2.bf16.msra.mxu0 0
        %1028 = vmatprep.subr.bf16.mxu0 0
        %1029 = vmatpush2.bf16.msra.mxu0 0
        %1030 = vmatprep.subr.bf16.mxu0 0
        %1031 = vmatpush2.bf16.msra.mxu0 %v893
        %1032 = vmatprep.mubr.bf16.mxu0 %v905
        %1033 = vmatmul.mubr.bf16.gmra.mxu0 %v753
        %v1034 = vpop.f32.mrf.mxu0
        %v1035 = vadd.f32 0.0, %v1034
        %v1036 = vpop.f32.mrf.mxu0
        %v1037 = vpop.f32.mrf.mxu0
        %v1038 = vadd.f32 0.0, %v1037
        %v1039 = vpop.f32.mrf.mxu0
        %1040 = vmatprep.mubr.bf16.mxu0 %v908
        %1041 = vmatmul.mubr.bf16.gmra.mxu0 %v755
        %v1042 = vpop.f32.mrf.mxu0
        %v1043 = vadd.f32 0.0, %v1042
        %v1044 = vpop.f32.mrf.mxu0
        %v1045 = vpop.f32.mrf.mxu0
        %v1046 = vadd.f32 0.0, %v1045
        %v1047 = vpop.f32.mrf.mxu0
        %1048 = vmatprep.mubr.bf16.mxu0 %v911
        %1049 = vmatmul.mubr.bf16.gmra.mxu0 %v757
        %v1050 = vpop.f32.mrf.mxu0
        %v1051 = vadd.f32 0.0, %v1050
        %v1052 = vpop.f32.mrf.mxu0
        %v1053 = vpop.f32.mrf.mxu0
        %v1054 = vadd.f32 0.0, %v1053
        %v1055 = vpop.f32.mrf.mxu0
        %1056 = vmatprep.mubr.bf16.mxu0 %v914
        %1057 = vmatmul.mubr.bf16.gmra.mxu0 %v759
        %v1058 = vpop.f32.mrf.mxu0
        %v1059 = vadd.f32 0.0, %v1058
        %v1060 = vpop.f32.mrf.mxu0
        %v1061 = vpop.f32.mrf.mxu0
        %v1062 = vadd.f32 0.0, %v1061
        %v1063 = vpop.f32.mrf.mxu0
        %1064 = vmatprep.mubr.bf16.mxu0 %v917
        %1065 = vmatmul.mubr.bf16.gmra.mxu0 %v761
        %v1066 = vpop.f32.mrf.mxu0
        %v1067 = vadd.f32 0.0, %v1066
        %v1068 = vpop.f32.mrf.mxu0
        %v1069 = vpop.f32.mrf.mxu0
        %v1070 = vadd.f32 0.0, %v1069
        %v1071 = vpop.f32.mrf.mxu0
        %1072 = vmatprep.mubr.bf16.mxu0 %v920
        %1073 = vmatmul.mubr.bf16.gmra.mxu0 %v763
        %v1074 = vpop.f32.mrf.mxu0
        %v1075 = vadd.f32 0.0, %v1074
        %v1076 = vpop.f32.mrf.mxu0
        %v1077 = vpop.f32.mrf.mxu0
        %v1078 = vadd.f32 0.0, %v1077
        %v1079 = vpop.f32.mrf.mxu0
        %1080 = vmatprep.mubr.bf16.mxu0 %v923
        %1081 = vmatmul.mubr.bf16.gmra.mxu0 %v765
        %v1082 = vpop.f32.mrf.mxu0
        %v1083 = vadd.f32 0.0, %v1082
        %v1084 = vpop.f32.mrf.mxu0
        %v1085 = vpop.f32.mrf.mxu0
        %v1086 = vadd.f32 0.0, %v1085
        %v1087 = vpop.f32.mrf.mxu0
        %1088 = vmatprep.mubr.bf16.mxu0 %v926
        %1089 = vmatmul.mubr.bf16.gmra.mxu0 %v767
        %v1090 = vpop.f32.mrf.mxu0
        %v1091 = vadd.f32 0.0, %v1090
        %v1092 = vpop.f32.mrf.mxu0
        %v1093 = vpop.f32.mrf.mxu0
        %v1094 = vadd.f32 0.0, %v1093
        %v1095 = vpop.f32.mrf.mxu0
        %1096 = vmatprep.mubr.bf16.mxu0 %v929
        %1097 = vmatmul.mubr.bf16.gmra.mxu0 %v769
        %v1098 = vpop.f32.mrf.mxu0
        %v1099 = vadd.f32 0.0, %v1098
        %v1100 = vpop.f32.mrf.mxu0
        %v1101 = vpop.f32.mrf.mxu0
        %v1102 = vadd.f32 0.0, %v1101
        %v1103 = vpop.f32.mrf.mxu0
        %1104 = vmatprep.mubr.bf16.mxu0 %v932
        %1105 = vmatmul.mubr.bf16.gmra.mxu0 %v771
        %v1106 = vpop.f32.mrf.mxu0
        %v1107 = vadd.f32 0.0, %v1106
        %v1108 = vpop.f32.mrf.mxu0
        %v1109 = vpop.f32.mrf.mxu0
        %v1110 = vadd.f32 0.0, %v1109
        %v1111 = vpop.f32.mrf.mxu0
        %1112 = vmatprep.mubr.bf16.mxu0 %v935
        %1113 = vmatmul.mubr.bf16.gmra.mxu0 %v773
        %v1114 = vpop.f32.mrf.mxu0
        %v1115 = vadd.f32 0.0, %v1114
        %v1116 = vpop.f32.mrf.mxu0
        %v1117 = vpop.f32.mrf.mxu0
        %v1118 = vadd.f32 0.0, %v1117
        %v1119 = vpop.f32.mrf.mxu0
        %1120 = vmatprep.mubr.bf16.mxu0 %v938
        %1121 = vmatmul.mubr.bf16.gmra.mxu0 %v775
        %v1122 = vpop.f32.mrf.mxu0
        %v1123 = vadd.f32 0.0, %v1122
        %v1124 = vpop.f32.mrf.mxu0
        %v1125 = vpop.f32.mrf.mxu0
        %v1126 = vadd.f32 0.0, %v1125
        %v1127 = vpop.f32.mrf.mxu0
        %1128 = vmatprep.mubr.bf16.mxu0 %v941
        %1129 = vmatmul.mubr.bf16.gmra.mxu0 %v777
        %v1130 = vpop.f32.mrf.mxu0
        %v1131 = vadd.f32 0.0, %v1130
        %v1132 = vpop.f32.mrf.mxu0
        %v1133 = vpop.f32.mrf.mxu0
        %v1134 = vadd.f32 0.0, %v1133
        %v1135 = vpop.f32.mrf.mxu0
        %1136 = vmatprep.mubr.bf16.mxu0 %v944
        %1137 = vmatmul.mubr.bf16.gmra.mxu0 %v779
        %v1138 = vpop.f32.mrf.mxu0
        %v1139 = vadd.f32 0.0, %v1138
        %v1140 = vpop.f32.mrf.mxu0
        %v1141 = vpop.f32.mrf.mxu0
        %v1142 = vadd.f32 0.0, %v1141
        %v1143 = vpop.f32.mrf.mxu0
        %1144 = vmatprep.mubr.bf16.mxu0 %v947
        %1145 = vmatmul.mubr.bf16.gmra.mxu0 %v781
        %v1146 = vpop.f32.mrf.mxu0
        %v1147 = vadd.f32 0.0, %v1146
        %v1148 = vpop.f32.mrf.mxu0
        %v1149 = vpop.f32.mrf.mxu0
        %v1150 = vadd.f32 0.0, %v1149
        %v1151 = vpop.f32.mrf.mxu0
        %1152 = vmatprep.mubr.bf16.mxu0 %v950
        %1153 = vmatmul.mubr.bf16.gmra.mxu0 %v783
        %v1154 = vpop.f32.mrf.mxu0
        %v1155 = vadd.f32 0.0, %v1154
        %v1156 = vpop.f32.mrf.mxu0
        %v1157 = vpop.f32.mrf.mxu0
        %v1158 = vadd.f32 0.0, %v1157
        %v1159 = vpop.f32.mrf.mxu0
        %1160 = vmatprep.mubr.bf16.mxu0 %v953
        %1161 = vmatmul.mubr.bf16.gmra.mxu0 %v785
        %v1162 = vpop.f32.mrf.mxu0
        %v1163 = vadd.f32 0.0, %v1162
        %v1164 = vpop.f32.mrf.mxu0
        %v1165 = vpop.f32.mrf.mxu0
        %v1166 = vadd.f32 0.0, %v1165
        %v1167 = vpop.f32.mrf.mxu0
        %1168 = vmatprep.mubr.bf16.mxu0 %v956
        %1169 = vmatmul.mubr.bf16.gmra.mxu0 %v787
        %v1170 = vpop.f32.mrf.mxu0
        %v1171 = vadd.f32 0.0, %v1170
        %v1172 = vpop.f32.mrf.mxu0
        %v1173 = vpop.f32.mrf.mxu0
        %v1174 = vadd.f32 0.0, %v1173
        %v1175 = vpop.f32.mrf.mxu0
        %1176 = vmatprep.mubr.bf16.mxu0 %v959
        %1177 = vmatmul.mubr.bf16.gmra.mxu0 %v789
        %v1178 = vpop.f32.mrf.mxu0
        %v1179 = vadd.f32 0.0, %v1178
        %v1180 = vpop.f32.mrf.mxu0
        %v1181 = vpop.f32.mrf.mxu0
        %v1182 = vadd.f32 0.0, %v1181
        %v1183 = vpop.f32.mrf.mxu0
        %1184 = vmatprep.mubr.bf16.mxu0 %v962
        %1185 = vmatmul.mubr.bf16.gmra.mxu0 %v791
        %v1186 = vpop.f32.mrf.mxu0
        %v1187 = vadd.f32 0.0, %v1186
        %v1188 = vpop.f32.mrf.mxu0
        %v1189 = vpop.f32.mrf.mxu0
        %v1190 = vadd.f32 0.0, %v1189
        %v1191 = vpop.f32.mrf.mxu0
        %1192 = vmatprep.mubr.bf16.mxu0 %v965
        %1193 = vmatmul.mubr.bf16.gmra.mxu0 %v793
        %v1194 = vpop.f32.mrf.mxu0
        %v1195 = vadd.f32 0.0, %v1194
        %v1196 = vpop.f32.mrf.mxu0
        %v1197 = vpop.f32.mrf.mxu0
        %v1198 = vadd.f32 0.0, %v1197
        %v1199 = vpop.f32.mrf.mxu0
        %1200 = vmatprep.mubr.bf16.mxu0 %v968
        %1201 = vmatmul.mubr.bf16.gmra.mxu0 %v795
        %v1202 = vpop.f32.mrf.mxu0
        %v1203 = vadd.f32 0.0, %v1202
        %v1204 = vpop.f32.mrf.mxu0
        %v1205 = vpop.f32.mrf.mxu0
        %v1206 = vadd.f32 0.0, %v1205
        %v1207 = vpop.f32.mrf.mxu0
        %1208 = vmatprep.mubr.bf16.mxu0 %v971
        %1209 = vmatmul.mubr.bf16.gmra.mxu0 %v797
        %v1210 = vpop.f32.mrf.mxu0
        %v1211 = vadd.f32 0.0, %v1210
        %v1212 = vpop.f32.mrf.mxu0
        %v1213 = vpop.f32.mrf.mxu0
        %v1214 = vadd.f32 0.0, %v1213
        %v1215 = vpop.f32.mrf.mxu0
        %1216 = vmatprep.mubr.bf16.mxu0 %v974
        %1217 = vmatmul.mubr.bf16.gmra.mxu0 %v799
        %v1218 = vpop.f32.mrf.mxu0
        %v1219 = vadd.f32 0.0, %v1218
        %v1220 = vpop.f32.mrf.mxu0
        %v1221 = vpop.f32.mrf.mxu0
        %v1222 = vadd.f32 0.0, %v1221
        %v1223 = vpop.f32.mrf.mxu0
        %1224 = vmatprep.mubr.bf16.mxu0 %v977
        %1225 = vmatmul.mubr.bf16.gmra.mxu0 %v801
        %v1226 = vpop.f32.mrf.mxu0
        %v1227 = vadd.f32 0.0, %v1226
        %v1228 = vpop.f32.mrf.mxu0
        %v1229 = vpop.f32.mrf.mxu0
        %v1230 = vadd.f32 0.0, %v1229
        %v1231 = vpop.f32.mrf.mxu0
        %1232 = vmatprep.mubr.bf16.mxu0 %v980
        %1233 = vmatmul.mubr.bf16.gmra.mxu0 %v803
        %v1234 = vpop.f32.mrf.mxu0
        %v1235 = vadd.f32 0.0, %v1234
        %v1236 = vpop.f32.mrf.mxu0
        %v1237 = vpop.f32.mrf.mxu0
        %v1238 = vadd.f32 0.0, %v1237
        %v1239 = vpop.f32.mrf.mxu0
        %1240 = vmatprep.mubr.bf16.mxu0 %v983
        %1241 = vmatmul.mubr.bf16.gmra.mxu0 %v805
        %v1242 = vpop.f32.mrf.mxu0
        %v1243 = vadd.f32 0.0, %v1242
        %v1244 = vpop.f32.mrf.mxu0
        %v1245 = vpop.f32.mrf.mxu0
        %v1246 = vadd.f32 0.0, %v1245
        %v1247 = vpop.f32.mrf.mxu0
        %1248 = vmatprep.mubr.bf16.mxu0 %v986
        %1249 = vmatmul.mubr.bf16.gmra.mxu0 %v807
        %v1250 = vpop.f32.mrf.mxu0
        %v1251 = vadd.f32 0.0, %v1250
        %v1252 = vpop.f32.mrf.mxu0
        %v1253 = vpop.f32.mrf.mxu0
        %v1254 = vadd.f32 0.0, %v1253
        %v1255 = vpop.f32.mrf.mxu0
        %1256 = vmatprep.mubr.bf16.mxu0 %v989
        %1257 = vmatmul.mubr.bf16.gmra.mxu0 %v809
        %v1258 = vpop.f32.mrf.mxu0
        %v1259 = vadd.f32 0.0, %v1258
        %v1260 = vpop.f32.mrf.mxu0
        %v1261 = vpop.f32.mrf.mxu0
        %v1262 = vadd.f32 0.0, %v1261
        %v1263 = vpop.f32.mrf.mxu0
        %1264 = vmatprep.mubr.bf16.mxu0 %v992
        %1265 = vmatmul.mubr.bf16.gmra.mxu0 %v811
        %v1266 = vpop.f32.mrf.mxu0
        %v1267 = vadd.f32 0.0, %v1266
        %v1268 = vpop.f32.mrf.mxu0
        %v1269 = vpop.f32.mrf.mxu0
        %v1270 = vadd.f32 0.0, %v1269
        %v1271 = vpop.f32.mrf.mxu0
        %1272 = vmatprep.mubr.bf16.mxu0 %v995
        %1273 = vmatmul.mubr.bf16.gmra.mxu0 %v813
        %v1274 = vpop.f32.mrf.mxu0
        %v1275 = vadd.f32 0.0, %v1274
        %v1276 = vpop.f32.mrf.mxu0
        %v1277 = vpop.f32.mrf.mxu0
        %v1278 = vadd.f32 0.0, %v1277
        %v1279 = vpop.f32.mrf.mxu0
        %1280 = vmatprep.mubr.bf16.mxu0 %v998
        %1281 = vmatmul.mubr.bf16.gmra.mxu0 %v815
        %v1282 = vpop.f32.mrf.mxu0
        %v1283 = vadd.f32 0.0, %v1282
        %v1284 = vpop.f32.mrf.mxu0
        %v1285 = vpop.f32.mrf.mxu0
        %v1286 = vadd.f32 0.0, %v1285
        %v1287 = vpop.f32.mrf.mxu0
        %1288 = vdwg.mxu0
        %v1289 = vld [vmem:[%s7] sm:$0x1]
        %v1291 = vlaneseq
        %v1292 = vshrl.u32 %v1291, 7
        %v1293 = vsub.s32 0, %v1292
        %v1294 = vrot.slane %v1289, %v1293
        %v1296 = vmul.f32 %v1035, %v1294
        %v1297 = vmul.f32 %v1038, %v1294
        %v1298 = vmul.f32 %v1043, %v1294
        %v1299 = vmul.f32 %v1046, %v1294
        %v1300 = vmul.f32 %v1051, %v1294
        %v1301 = vmul.f32 %v1054, %v1294
        %v1302 = vmul.f32 %v1059, %v1294
        %v1303 = vmul.f32 %v1062, %v1294
        %v1304 = vmul.f32 %v1067, %v1294
        %v1305 = vmul.f32 %v1070, %v1294
        %v1306 = vmul.f32 %v1075, %v1294
        %v1307 = vmul.f32 %v1078, %v1294
        %v1308 = vmul.f32 %v1083, %v1294
        %v1309 = vmul.f32 %v1086, %v1294
        %v1310 = vmul.f32 %v1091, %v1294
        %v1311 = vmul.f32 %v1094, %v1294
        %v1312 = vmul.f32 %v1099, %v1294
        %v1313 = vmul.f32 %v1102, %v1294
        %v1314 = vmul.f32 %v1107, %v1294
        %v1315 = vmul.f32 %v1110, %v1294
        %v1316 = vmul.f32 %v1115, %v1294
        %v1317 = vmul.f32 %v1118, %v1294
        %v1318 = vmul.f32 %v1123, %v1294
        %v1319 = vmul.f32 %v1126, %v1294
        %v1320 = vmul.f32 %v1131, %v1294
        %v1321 = vmul.f32 %v1134, %v1294
        %v1322 = vmul.f32 %v1139, %v1294
        %v1323 = vmul.f32 %v1142, %v1294
        %v1324 = vmul.f32 %v1147, %v1294
        %v1325 = vmul.f32 %v1150, %v1294
        %v1326 = vmul.f32 %v1155, %v1294
        %v1327 = vmul.f32 %v1158, %v1294
        %v1328 = vmul.f32 %v1163, %v1294
        %v1329 = vmul.f32 %v1166, %v1294
        %v1330 = vmul.f32 %v1171, %v1294
        %v1331 = vmul.f32 %v1174, %v1294
        %v1332 = vmul.f32 %v1179, %v1294
        %v1333 = vmul.f32 %v1182, %v1294
        %v1334 = vmul.f32 %v1187, %v1294
        %v1335 = vmul.f32 %v1190, %v1294
        %v1336 = vmul.f32 %v1195, %v1294
        %v1337 = vmul.f32 %v1198, %v1294
        %v1338 = vmul.f32 %v1203, %v1294
        %v1339 = vmul.f32 %v1206, %v1294
        %v1340 = vmul.f32 %v1211, %v1294
        %v1341 = vmul.f32 %v1214, %v1294
        %v1342 = vmul.f32 %v1219, %v1294
        %v1343 = vmul.f32 %v1222, %v1294
        %v1344 = vmul.f32 %v1227, %v1294
        %v1345 = vmul.f32 %v1230, %v1294
        %v1346 = vmul.f32 %v1235, %v1294
        %v1347 = vmul.f32 %v1238, %v1294
        %v1348 = vmul.f32 %v1243, %v1294
        %v1349 = vmul.f32 %v1246, %v1294
        %v1350 = vmul.f32 %v1251, %v1294
        %v1351 = vmul.f32 %v1254, %v1294
        %v1352 = vmul.f32 %v1259, %v1294
        %v1353 = vmul.f32 %v1262, %v1294
        %v1354 = vmul.f32 %v1267, %v1294
        %v1355 = vmul.f32 %v1270, %v1294
        %v1356 = vmul.f32 %v1275, %v1294
        %v1357 = vmul.f32 %v1278, %v1294
        %v1358 = vmul.f32 %v1283, %v1294
        %v1359 = vmul.f32 %v1286, %v1294
        %v1360 = vld [vmem:[%s8] sm:$0x1]
        %v1362 = vlaneseq
        %v1363 = vshrl.u32 %v1362, 7
        %v1364 = vsub.s32 0, %v1363
        %v1365 = vrot.slane %v1360, %v1364
        %v1367 = vadd.f32 %v1296, %v1365
        %v1368 = vadd.f32 %v1297, %v1365
        %v1369 = vadd.f32 %v1298, %v1365
        %v1370 = vadd.f32 %v1299, %v1365
        %v1371 = vadd.f32 %v1300, %v1365
        %v1372 = vadd.f32 %v1301, %v1365
        %v1373 = vadd.f32 %v1302, %v1365
        %v1374 = vadd.f32 %v1303, %v1365
        %v1375 = vadd.f32 %v1304, %v1365
        %v1376 = vadd.f32 %v1305, %v1365
        %v1377 = vadd.f32 %v1306, %v1365
        %v1378 = vadd.f32 %v1307, %v1365
        %v1379 = vadd.f32 %v1308, %v1365
        %v1380 = vadd.f32 %v1309, %v1365
        %v1381 = vadd.f32 %v1310, %v1365
        %v1382 = vadd.f32 %v1311, %v1365
        %v1383 = vadd.f32 %v1312, %v1365
        %v1384 = vadd.f32 %v1313, %v1365
        %v1385 = vadd.f32 %v1314, %v1365
        %v1386 = vadd.f32 %v1315, %v1365
        %v1387 = vadd.f32 %v1316, %v1365
        %v1388 = vadd.f32 %v1317, %v1365
        %v1389 = vadd.f32 %v1318, %v1365
        %v1390 = vadd.f32 %v1319, %v1365
        %v1391 = vadd.f32 %v1320, %v1365
        %v1392 = vadd.f32 %v1321, %v1365
        %v1393 = vadd.f32 %v1322, %v1365
        %v1394 = vadd.f32 %v1323, %v1365
        %v1395 = vadd.f32 %v1324, %v1365
        %v1396 = vadd.f32 %v1325, %v1365
        %v1397 = vadd.f32 %v1326, %v1365
        %v1398 = vadd.f32 %v1327, %v1365
        %v1399 = vadd.f32 %v1328, %v1365
        %v1400 = vadd.f32 %v1329, %v1365
        %v1401 = vadd.f32 %v1330, %v1365
        %v1402 = vadd.f32 %v1331, %v1365
        %v1403 = vadd.f32 %v1332, %v1365
        %v1404 = vadd.f32 %v1333, %v1365
        %v1405 = vadd.f32 %v1334, %v1365
        %v1406 = vadd.f32 %v1335, %v1365
        %v1407 = vadd.f32 %v1336, %v1365
        %v1408 = vadd.f32 %v1337, %v1365
        %v1409 = vadd.f32 %v1338, %v1365
        %v1410 = vadd.f32 %v1339, %v1365
        %v1411 = vadd.f32 %v1340, %v1365
        %v1412 = vadd.f32 %v1341, %v1365
        %v1413 = vadd.f32 %v1342, %v1365
        %v1414 = vadd.f32 %v1343, %v1365
        %v1415 = vadd.f32 %v1344, %v1365
        %v1416 = vadd.f32 %v1345, %v1365
        %v1417 = vadd.f32 %v1346, %v1365
        %v1418 = vadd.f32 %v1347, %v1365
        %v1419 = vadd.f32 %v1348, %v1365
        %v1420 = vadd.f32 %v1349, %v1365
        %v1421 = vadd.f32 %v1350, %v1365
        %v1422 = vadd.f32 %v1351, %v1365
        %v1423 = vadd.f32 %v1352, %v1365
        %v1424 = vadd.f32 %v1353, %v1365
        %v1425 = vadd.f32 %v1354, %v1365
        %v1426 = vadd.f32 %v1355, %v1365
        %v1427 = vadd.f32 %v1356, %v1365
        %v1428 = vadd.f32 %v1357, %v1365
        %v1429 = vadd.f32 %v1358, %v1365
        %v1430 = vadd.f32 %v1359, %v1365
        %v1431 = vmax.f32 %v1367, %v1369
        %v1432 = vmax.f32 %v1368, %v1370
        %v1433 = vmax.f32 %v1369, %v1371
        %v1434 = vmax.f32 %v1370, %v1372
        %v1435 = vmax.f32 %v1371, %v1373
        %v1436 = vmax.f32 %v1372, %v1374
        %v1437 = vmax.f32 %v1373, %v1375
        %v1438 = vmax.f32 %v1374, %v1376
        %v1439 = vmax.f32 %v1375, %v1377
        %v1440 = vmax.f32 %v1376, %v1378
        %v1441 = vmax.f32 %v1377, %v1379
        %v1442 = vmax.f32 %v1378, %v1380
        %v1443 = vmax.f32 %v1379, %v1381
        %v1444 = vmax.f32 %v1380, %v1382
        %v1445 = vmax.f32 %v1381, %v1383
        %v1446 = vmax.f32 %v1382, %v1384
        %v1447 = vmax.f32 %v1383, %v1385
        %v1448 = vmax.f32 %v1384, %v1386
        %v1449 = vmax.f32 %v1385, %v1387
        %v1450 = vmax.f32 %v1386, %v1388
        %v1451 = vmax.f32 %v1387, %v1389
        %v1452 = vmax.f32 %v1388, %v1390
        %v1453 = vmax.f32 %v1389, %v1391
        %v1454 = vmax.f32 %v1390, %v1392
        %v1455 = vmax.f32 %v1391, %v1393
        %v1456 = vmax.f32 %v1392, %v1394
        %v1457 = vmax.f32 %v1393, %v1395
        %v1458 = vmax.f32 %v1394, %v1396
        %v1459 = vmax.f32 %v1395, %v1397
        %v1460 = vmax.f32 %v1396, %v1398
        %v1461 = vmax.f32 %v1399, %v1401
        %v1462 = vmax.f32 %v1400, %v1402
        %v1463 = vmax.f32 %v1401, %v1403
        %v1464 = vmax.f32 %v1402, %v1404
        %v1465 = vmax.f32 %v1403, %v1405
        %v1466 = vmax.f32 %v1404, %v1406
        %v1467 = vmax.f32 %v1405, %v1407
        %v1468 = vmax.f32 %v1406, %v1408
        %v1469 = vmax.f32 %v1407, %v1409
        %v1470 = vmax.f32 %v1408, %v1410
        %v1471 = vmax.f32 %v1409, %v1411
        %v1472 = vmax.f32 %v1410, %v1412
        %v1473 = vmax.f32 %v1411, %v1413
        %v1474 = vmax.f32 %v1412, %v1414
        %v1475 = vmax.f32 %v1413, %v1415
        %v1476 = vmax.f32 %v1414, %v1416
        %v1477 = vmax.f32 %v1415, %v1417
        %v1478 = vmax.f32 %v1416, %v1418
        %v1479 = vmax.f32 %v1417, %v1419
        %v1480 = vmax.f32 %v1418, %v1420
        %v1481 = vmax.f32 %v1419, %v1421
        %v1482 = vmax.f32 %v1420, %v1422
        %v1483 = vmax.f32 %v1421, %v1423
        %v1484 = vmax.f32 %v1422, %v1424
        %v1485 = vmax.f32 %v1423, %v1425
        %v1486 = vmax.f32 %v1424, %v1426
        %v1487 = vmax.f32 %v1425, %v1427
        %v1488 = vmax.f32 %v1426, %v1428
        %v1489 = vmax.f32 %v1427, %v1429
        %v1490 = vmax.f32 %v1428, %v1430
        %v1491 = vmax.f32 %v1431, %v1371
        %v1492 = vmax.f32 %v1432, %v1372
        %v1493 = vmax.f32 %v1433, %v1373
        %v1494 = vmax.f32 %v1434, %v1374
        %v1495 = vmax.f32 %v1435, %v1375
        %v1496 = vmax.f32 %v1436, %v1376
        %v1497 = vmax.f32 %v1437, %v1377
        %v1498 = vmax.f32 %v1438, %v1378
        %v1499 = vmax.f32 %v1439, %v1379
        %v1500 = vmax.f32 %v1440, %v1380
        %v1501 = vmax.f32 %v1441, %v1381
        %v1502 = vmax.f32 %v1442, %v1382
        %v1503 = vmax.f32 %v1443, %v1383
        %v1504 = vmax.f32 %v1444, %v1384
        %v1505 = vmax.f32 %v1445, %v1385
        %v1506 = vmax.f32 %v1446, %v1386
        %v1507 = vmax.f32 %v1447, %v1387
        %v1508 = vmax.f32 %v1448, %v1388
        %v1509 = vmax.f32 %v1449, %v1389
        %v1510 = vmax.f32 %v1450, %v1390
        %v1511 = vmax.f32 %v1451, %v1391
        %v1512 = vmax.f32 %v1452, %v1392
        %v1513 = vmax.f32 %v1453, %v1393
        %v1514 = vmax.f32 %v1454, %v1394
        %v1515 = vmax.f32 %v1455, %v1395
        %v1516 = vmax.f32 %v1456, %v1396
        %v1517 = vmax.f32 %v1457, %v1397
        %v1518 = vmax.f32 %v1458, %v1398
        %v1519 = vmax.f32 %v1459, %v1397
        %v1520 = vmax.f32 %v1460, %v1398
        %v1521 = vmax.f32 %v1461, %v1403
        %v1522 = vmax.f32 %v1462, %v1404
        %v1523 = vmax.f32 %v1463, %v1405
        %v1524 = vmax.f32 %v1464, %v1406
        %v1525 = vmax.f32 %v1465, %v1407
        %v1526 = vmax.f32 %v1466, %v1408
        %v1527 = vmax.f32 %v1467, %v1409
        %v1528 = vmax.f32 %v1468, %v1410
        %v1529 = vmax.f32 %v1469, %v1411
        %v1530 = vmax.f32 %v1470, %v1412
        %v1531 = vmax.f32 %v1471, %v1413
        %v1532 = vmax.f32 %v1472, %v1414
        %v1533 = vmax.f32 %v1473, %v1415
        %v1534 = vmax.f32 %v1474, %v1416
        %v1535 = vmax.f32 %v1475, %v1417
        %v1536 = vmax.f32 %v1476, %v1418
        %v1537 = vmax.f32 %v1477, %v1419
        %v1538 = vmax.f32 %v1478, %v1420
        %v1539 = vmax.f32 %v1479, %v1421
        %v1540 = vmax.f32 %v1480, %v1422
        %v1541 = vmax.f32 %v1481, %v1423
        %v1542 = vmax.f32 %v1482, %v1424
        %v1543 = vmax.f32 %v1483, %v1425
        %v1544 = vmax.f32 %v1484, %v1426
        %v1545 = vmax.f32 %v1485, %v1427
        %v1546 = vmax.f32 %v1486, %v1428
        %v1547 = vmax.f32 %v1487, %v1429
        %v1548 = vmax.f32 %v1488, %v1430
        %v1549 = vmax.f32 %v1489, %v1429
        %v1550 = vmax.f32 %v1490, %v1430
        %vm1615 = vcmask 1040384
        %v1616 = vrot.slane %v1431, 7
        %v1617 = vrot.slane %v1432, 7
        %v1618 = vsel %vm1615, %v1616, %v1617
        %v1619 = vrot.slane %v1491, 7
        %v1620 = vrot.slane %v1492, 7
        %v1621 = vsel %vm1615, %v1619, %v1620
        %v1622 = vrot.slane %v1493, 7
        %v1623 = vrot.slane %v1494, 7
        %v1624 = vsel %vm1615, %v1622, %v1623
        %v1625 = vrot.slane %v1495, 7
        %v1626 = vrot.slane %v1496, 7
        %v1627 = vsel %vm1615, %v1625, %v1626
        %v1628 = vrot.slane %v1497, 7
        %v1629 = vrot.slane %v1498, 7
        %v1630 = vsel %vm1615, %v1628, %v1629
        %v1631 = vrot.slane %v1499, 7
        %v1632 = vrot.slane %v1500, 7
        %v1633 = vsel %vm1615, %v1631, %v1632
        %v1634 = vrot.slane %v1501, 7
        %v1635 = vrot.slane %v1502, 7
        %v1636 = vsel %vm1615, %v1634, %v1635
        %v1637 = vrot.slane %v1503, 7
        %v1638 = vrot.slane %v1504, 7
        %v1639 = vsel %vm1615, %v1637, %v1638
        %v1640 = vrot.slane %v1505, 7
        %v1641 = vrot.slane %v1506, 7
        %v1642 = vsel %vm1615, %v1640, %v1641
        %v1643 = vrot.slane %v1507, 7
        %v1644 = vrot.slane %v1508, 7
        %v1645 = vsel %vm1615, %v1643, %v1644
        %v1646 = vrot.slane %v1509, 7
        %v1647 = vrot.slane %v1510, 7
        %v1648 = vsel %vm1615, %v1646, %v1647
        %v1649 = vrot.slane %v1511, 7
        %v1650 = vrot.slane %v1512, 7
        %v1651 = vsel %vm1615, %v1649, %v1650
        %v1652 = vrot.slane %v1513, 7
        %v1653 = vrot.slane %v1514, 7
        %v1654 = vsel %vm1615, %v1652, %v1653
        %v1655 = vrot.slane %v1515, 7
        %v1656 = vrot.slane %v1516, 7
        %v1657 = vsel %vm1615, %v1655, %v1656
        %v1658 = vrot.slane %v1517, 7
        %v1659 = vrot.slane %v1518, 7
        %v1660 = vsel %vm1615, %v1658, %v1659
        %v1661 = vrot.slane %v1519, 7
        %v1662 = vrot.slane %v1520, 7
        %v1663 = vsel %vm1615, %v1661, %v1662
        %v1664 = vrot.slane %v1461, 7
        %v1665 = vrot.slane %v1462, 7
        %v1666 = vsel %vm1615, %v1664, %v1665
        %v1667 = vrot.slane %v1521, 7
        %v1668 = vrot.slane %v1522, 7
        %v1669 = vsel %vm1615, %v1667, %v1668
        %v1670 = vrot.slane %v1523, 7
        %v1671 = vrot.slane %v1524, 7
        %v1672 = vsel %vm1615, %v1670, %v1671
        %v1673 = vrot.slane %v1525, 7
        %v1674 = vrot.slane %v1526, 7
        %v1675 = vsel %vm1615, %v1673, %v1674
        %v1676 = vrot.slane %v1527, 7
        %v1677 = vrot.slane %v1528, 7
        %v1678 = vsel %vm1615, %v1676, %v1677
        %v1679 = vrot.slane %v1529, 7
        %v1680 = vrot.slane %v1530, 7
        %v1681 = vsel %vm1615, %v1679, %v1680
        %v1682 = vrot.slane %v1531, 7
        %v1683 = vrot.slane %v1532, 7
        %v1684 = vsel %vm1615, %v1682, %v1683
        %v1685 = vrot.slane %v1533, 7
        %v1686 = vrot.slane %v1534, 7
        %v1687 = vsel %vm1615, %v1685, %v1686
        %v1688 = vrot.slane %v1535, 7
        %v1689 = vrot.slane %v1536, 7
        %v1690 = vsel %vm1615, %v1688, %v1689
        %v1691 = vrot.slane %v1537, 7
        %v1692 = vrot.slane %v1538, 7
        %v1693 = vsel %vm1615, %v1691, %v1692
        %v1694 = vrot.slane %v1539, 7
        %v1695 = vrot.slane %v1540, 7
        %v1696 = vsel %vm1615, %v1694, %v1695
        %v1697 = vrot.slane %v1541, 7
        %v1698 = vrot.slane %v1542, 7
        %v1699 = vsel %vm1615, %v1697, %v1698
        %v1700 = vrot.slane %v1543, 7
        %v1701 = vrot.slane %v1544, 7
        %v1702 = vsel %vm1615, %v1700, %v1701
        %v1703 = vrot.slane %v1545, 7
        %v1704 = vrot.slane %v1546, 7
        %v1705 = vsel %vm1615, %v1703, %v1704
        %v1706 = vrot.slane %v1547, 7
        %v1707 = vrot.slane %v1548, 7
        %v1708 = vsel %vm1615, %v1706, %v1707
        %v1709 = vrot.slane %v1549, 7
        %v1710 = vrot.slane %v1550, 7
        %v1711 = vsel %vm1615, %v1709, %v1710
        %v1776 = vsel %vm1615, %v1431, %v1616
        %v1777 = vsel %vm1615, %v1491, %v1619
        %v1778 = vsel %vm1615, %v1493, %v1622
        %v1779 = vsel %vm1615, %v1495, %v1625
        %v1780 = vsel %vm1615, %v1497, %v1628
        %v1781 = vsel %vm1615, %v1499, %v1631
        %v1782 = vsel %vm1615, %v1501, %v1634
        %v1783 = vsel %vm1615, %v1503, %v1637
        %v1784 = vsel %vm1615, %v1505, %v1640
        %v1785 = vsel %vm1615, %v1507, %v1643
        %v1786 = vsel %vm1615, %v1509, %v1646
        %v1787 = vsel %vm1615, %v1511, %v1649
        %v1788 = vsel %vm1615, %v1513, %v1652
        %v1789 = vsel %vm1615, %v1515, %v1655
        %v1790 = vsel %vm1615, %v1517, %v1658
        %v1791 = vsel %vm1615, %v1519, %v1661
        %v1792 = vsel %vm1615, %v1461, %v1664
        %v1793 = vsel %vm1615, %v1521, %v1667
        %v1794 = vsel %vm1615, %v1523, %v1670
        %v1795 = vsel %vm1615, %v1525, %v1673
        %v1796 = vsel %vm1615, %v1527, %v1676
        %v1797 = vsel %vm1615, %v1529, %v1679
        %v1798 = vsel %vm1615, %v1531, %v1682
        %v1799 = vsel %vm1615, %v1533, %v1685
        %v1800 = vsel %vm1615, %v1535, %v1688
        %v1801 = vsel %vm1615, %v1537, %v1691
        %v1802 = vsel %vm1615, %v1539, %v1694
        %v1803 = vsel %vm1615, %v1541, %v1697
        %v1804 = vsel %vm1615, %v1543, %v1700
        %v1805 = vsel %vm1615, %v1545, %v1703
        %v1806 = vsel %vm1615, %v1547, %v1706
        %v1807 = vsel %vm1615, %v1549, %v1709
        %v1808 = vmax.f32 %v1776, %v1431
        %v1809 = vmax.f32 %v1618, %v1432
        %v1810 = vmax.f32 %v1777, %v1491
        %v1811 = vmax.f32 %v1621, %v1492
        %v1812 = vmax.f32 %v1778, %v1493
        %v1813 = vmax.f32 %v1624, %v1494
        %v1814 = vmax.f32 %v1779, %v1495
        %v1815 = vmax.f32 %v1627, %v1496
        %v1816 = vmax.f32 %v1780, %v1497
        %v1817 = vmax.f32 %v1630, %v1498
        %v1818 = vmax.f32 %v1781, %v1499
        %v1819 = vmax.f32 %v1633, %v1500
        %v1820 = vmax.f32 %v1782, %v1501
        %v1821 = vmax.f32 %v1636, %v1502
        %v1822 = vmax.f32 %v1783, %v1503
        %v1823 = vmax.f32 %v1639, %v1504
        %v1824 = vmax.f32 %v1784, %v1505
        %v1825 = vmax.f32 %v1642, %v1506
        %v1826 = vmax.f32 %v1785, %v1507
        %v1827 = vmax.f32 %v1645, %v1508
        %v1828 = vmax.f32 %v1786, %v1509
        %v1829 = vmax.f32 %v1648, %v1510
        %v1830 = vmax.f32 %v1787, %v1511
        %v1831 = vmax.f32 %v1651, %v1512
        %v1832 = vmax.f32 %v1788, %v1513
        %v1833 = vmax.f32 %v1654, %v1514
        %v1834 = vmax.f32 %v1789, %v1515
        %v1835 = vmax.f32 %v1657, %v1516
        %v1836 = vmax.f32 %v1790, %v1517
        %v1837 = vmax.f32 %v1660, %v1518
        %v1838 = vmax.f32 %v1791, %v1519
        %v1839 = vmax.f32 %v1663, %v1520
        %v1840 = vmax.f32 %v1792, %v1461
        %v1841 = vmax.f32 %v1666, %v1462
        %v1842 = vmax.f32 %v1793, %v1521
        %v1843 = vmax.f32 %v1669, %v1522
        %v1844 = vmax.f32 %v1794, %v1523
        %v1845 = vmax.f32 %v1672, %v1524
        %v1846 = vmax.f32 %v1795, %v1525
        %v1847 = vmax.f32 %v1675, %v1526
        %v1848 = vmax.f32 %v1796, %v1527
        %v1849 = vmax.f32 %v1678, %v1528
        %v1850 = vmax.f32 %v1797, %v1529
        %v1851 = vmax.f32 %v1681, %v1530
        %v1852 = vmax.f32 %v1798, %v1531
        %v1853 = vmax.f32 %v1684, %v1532
        %v1854 = vmax.f32 %v1799, %v1533
        %v1855 = vmax.f32 %v1687, %v1534
        %v1856 = vmax.f32 %v1800, %v1535
        %v1857 = vmax.f32 %v1690, %v1536
        %v1858 = vmax.f32 %v1801, %v1537
        %v1859 = vmax.f32 %v1693, %v1538
        %v1860 = vmax.f32 %v1802, %v1539
        %v1861 = vmax.f32 %v1696, %v1540
        %v1862 = vmax.f32 %v1803, %v1541
        %v1863 = vmax.f32 %v1699, %v1542
        %v1864 = vmax.f32 %v1804, %v1543
        %v1865 = vmax.f32 %v1702, %v1544
        %v1866 = vmax.f32 %v1805, %v1545
        %v1867 = vmax.f32 %v1705, %v1546
        %v1868 = vmax.f32 %v1806, %v1547
        %v1869 = vmax.f32 %v1708, %v1548
        %v1870 = vmax.f32 %v1807, %v1549
        %v1871 = vmax.f32 %v1711, %v1550
        %vm1872 = vcmask 1046528
        %v1873 = vrot.slane %v1431, 1
        %v1874 = vrot.slane %v1432, 1
        %v1875 = vsel %vm1872, %v1873, %v1874
        %v1876 = vrot.slane %v1491, 1
        %v1877 = vrot.slane %v1492, 1
        %v1878 = vsel %vm1872, %v1876, %v1877
        %v1879 = vrot.slane %v1493, 1
        %v1880 = vrot.slane %v1494, 1
        %v1881 = vsel %vm1872, %v1879, %v1880
        %v1882 = vrot.slane %v1495, 1
        %v1883 = vrot.slane %v1496, 1
        %v1884 = vsel %vm1872, %v1882, %v1883
        %v1885 = vrot.slane %v1497, 1
        %v1886 = vrot.slane %v1498, 1
        %v1887 = vsel %vm1872, %v1885, %v1886
        %v1888 = vrot.slane %v1499, 1
        %v1889 = vrot.slane %v1500, 1
        %v1890 = vsel %vm1872, %v1888, %v1889
        %v1891 = vrot.slane %v1501, 1
        %v1892 = vrot.slane %v1502, 1
        %v1893 = vsel %vm1872, %v1891, %v1892
        %v1894 = vrot.slane %v1503, 1
        %v1895 = vrot.slane %v1504, 1
        %v1896 = vsel %vm1872, %v1894, %v1895
        %v1897 = vrot.slane %v1505, 1
        %v1898 = vrot.slane %v1506, 1
        %v1899 = vsel %vm1872, %v1897, %v1898
        %v1900 = vrot.slane %v1507, 1
        %v1901 = vrot.slane %v1508, 1
        %v1902 = vsel %vm1872, %v1900, %v1901
        %v1903 = vrot.slane %v1509, 1
        %v1904 = vrot.slane %v1510, 1
        %v1905 = vsel %vm1872, %v1903, %v1904
        %v1906 = vrot.slane %v1511, 1
        %v1907 = vrot.slane %v1512, 1
        %v1908 = vsel %vm1872, %v1906, %v1907
        %v1909 = vrot.slane %v1513, 1
        %v1910 = vrot.slane %v1514, 1
        %v1911 = vsel %vm1872, %v1909, %v1910
        %v1912 = vrot.slane %v1515, 1
        %v1913 = vrot.slane %v1516, 1
        %v1914 = vsel %vm1872, %v1912, %v1913
        %v1915 = vrot.slane %v1517, 1
        %v1916 = vrot.slane %v1518, 1
        %v1917 = vsel %vm1872, %v1915, %v1916
        %v1918 = vrot.slane %v1519, 1
        %v1919 = vrot.slane %v1520, 1
        %v1920 = vsel %vm1872, %v1918, %v1919
        %v1921 = vrot.slane %v1461, 1
        %v1922 = vrot.slane %v1462, 1
        %v1923 = vsel %vm1872, %v1921, %v1922
        %v1924 = vrot.slane %v1521, 1
        %v1925 = vrot.slane %v1522, 1
        %v1926 = vsel %vm1872, %v1924, %v1925
        %v1927 = vrot.slane %v1523, 1
        %v1928 = vrot.slane %v1524, 1
        %v1929 = vsel %vm1872, %v1927, %v1928
        %v1930 = vrot.slane %v1525, 1
        %v1931 = vrot.slane %v1526, 1
        %v1932 = vsel %vm1872, %v1930, %v1931
        %v1933 = vrot.slane %v1527, 1
        %v1934 = vrot.slane %v1528, 1
        %v1935 = vsel %vm1872, %v1933, %v1934
        %v1936 = vrot.slane %v1529, 1
        %v1937 = vrot.slane %v1530, 1
        %v1938 = vsel %vm1872, %v1936, %v1937
        %v1939 = vrot.slane %v1531, 1
        %v1940 = vrot.slane %v1532, 1
        %v1941 = vsel %vm1872, %v1939, %v1940
        %v1942 = vrot.slane %v1533, 1
        %v1943 = vrot.slane %v1534, 1
        %v1944 = vsel %vm1872, %v1942, %v1943
        %v1945 = vrot.slane %v1535, 1
        %v1946 = vrot.slane %v1536, 1
        %v1947 = vsel %vm1872, %v1945, %v1946
        %v1948 = vrot.slane %v1537, 1
        %v1949 = vrot.slane %v1538, 1
        %v1950 = vsel %vm1872, %v1948, %v1949
        %v1951 = vrot.slane %v1539, 1
        %v1952 = vrot.slane %v1540, 1
        %v1953 = vsel %vm1872, %v1951, %v1952
        %v1954 = vrot.slane %v1541, 1
        %v1955 = vrot.slane %v1542, 1
        %v1956 = vsel %vm1872, %v1954, %v1955
        %v1957 = vrot.slane %v1543, 1
        %v1958 = vrot.slane %v1544, 1
        %v1959 = vsel %vm1872, %v1957, %v1958
        %v1960 = vrot.slane %v1545, 1
        %v1961 = vrot.slane %v1546, 1
        %v1962 = vsel %vm1872, %v1960, %v1961
        %v1963 = vrot.slane %v1547, 1
        %v1964 = vrot.slane %v1548, 1
        %v1965 = vsel %vm1872, %v1963, %v1964
        %v1966 = vrot.slane %v1549, 1
        %v1967 = vrot.slane %v1550, 1
        %v1968 = vsel %vm1872, %v1966, %v1967
        %v2033 = vsel %vm1872, %v1874, %v1432
        %v2034 = vsel %vm1872, %v1877, %v1492
        %v2035 = vsel %vm1872, %v1880, %v1494
        %v2036 = vsel %vm1872, %v1883, %v1496
        %v2037 = vsel %vm1872, %v1886, %v1498
        %v2038 = vsel %vm1872, %v1889, %v1500
        %v2039 = vsel %vm1872, %v1892, %v1502
        %v2040 = vsel %vm1872, %v1895, %v1504
        %v2041 = vsel %vm1872, %v1898, %v1506
        %v2042 = vsel %vm1872, %v1901, %v1508
        %v2043 = vsel %vm1872, %v1904, %v1510
        %v2044 = vsel %vm1872, %v1907, %v1512
        %v2045 = vsel %vm1872, %v1910, %v1514
        %v2046 = vsel %vm1872, %v1913, %v1516
        %v2047 = vsel %vm1872, %v1916, %v1518
        %v2048 = vsel %vm1872, %v1919, %v1520
        %v2049 = vsel %vm1872, %v1922, %v1462
        %v2050 = vsel %vm1872, %v1925, %v1522
        %v2051 = vsel %vm1872, %v1928, %v1524
        %v2052 = vsel %vm1872, %v1931, %v1526
        %v2053 = vsel %vm1872, %v1934, %v1528
        %v2054 = vsel %vm1872, %v1937, %v1530
        %v2055 = vsel %vm1872, %v1940, %v1532
        %v2056 = vsel %vm1872, %v1943, %v1534
        %v2057 = vsel %vm1872, %v1946, %v1536
        %v2058 = vsel %vm1872, %v1949, %v1538
        %v2059 = vsel %vm1872, %v1952, %v1540
        %v2060 = vsel %vm1872, %v1955, %v1542
        %v2061 = vsel %vm1872, %v1958, %v1544
        %v2062 = vsel %vm1872, %v1961, %v1546
        %v2063 = vsel %vm1872, %v1964, %v1548
        %v2064 = vsel %vm1872, %v1967, %v1550
        %v2065 = vmax.f32 %v1808, %v1875
        %v2066 = vmax.f32 %v1809, %v2033
        %v2067 = vmax.f32 %v1810, %v1878
        %v2068 = vmax.f32 %v1811, %v2034
        %v2069 = vmax.f32 %v1812, %v1881
        %v2070 = vmax.f32 %v1813, %v2035
        %v2071 = vmax.f32 %v1814, %v1884
        %v2072 = vmax.f32 %v1815, %v2036
        %v2073 = vmax.f32 %v1816, %v1887
        %v2074 = vmax.f32 %v1817, %v2037
        %v2075 = vmax.f32 %v1818, %v1890
        %v2076 = vmax.f32 %v1819, %v2038
        %v2077 = vmax.f32 %v1820, %v1893
        %v2078 = vmax.f32 %v1821, %v2039
        %v2079 = vmax.f32 %v1822, %v1896
        %v2080 = vmax.f32 %v1823, %v2040
        %v2081 = vmax.f32 %v1824, %v1899
        %v2082 = vmax.f32 %v1825, %v2041
        %v2083 = vmax.f32 %v1826, %v1902
        %v2084 = vmax.f32 %v1827, %v2042
        %v2085 = vmax.f32 %v1828, %v1905
        %v2086 = vmax.f32 %v1829, %v2043
        %v2087 = vmax.f32 %v1830, %v1908
        %v2088 = vmax.f32 %v1831, %v2044
        %v2089 = vmax.f32 %v1832, %v1911
        %v2090 = vmax.f32 %v1833, %v2045
        %v2091 = vmax.f32 %v1834, %v1914
        %v2092 = vmax.f32 %v1835, %v2046
        %v2093 = vmax.f32 %v1836, %v1917
        %v2094 = vmax.f32 %v1837, %v2047
        %v2095 = vmax.f32 %v1838, %v1920
        %v2096 = vmax.f32 %v1839, %v2048
        %v2097 = vmax.f32 %v1840, %v1923
        %v2098 = vmax.f32 %v1841, %v2049
        %v2099 = vmax.f32 %v1842, %v1926
        %v2100 = vmax.f32 %v1843, %v2050
        %v2101 = vmax.f32 %v1844, %v1929
        %v2102 = vmax.f32 %v1845, %v2051
        %v2103 = vmax.f32 %v1846, %v1932
        %v2104 = vmax.f32 %v1847, %v2052
        %v2105 = vmax.f32 %v1848, %v1935
        %v2106 = vmax.f32 %v1849, %v2053
        %v2107 = vmax.f32 %v1850, %v1938
        %v2108 = vmax.f32 %v1851, %v2054
        %v2109 = vmax.f32 %v1852, %v1941
        %v2110 = vmax.f32 %v1853, %v2055
        %v2111 = vmax.f32 %v1854, %v1944
        %v2112 = vmax.f32 %v1855, %v2056
        %v2113 = vmax.f32 %v1856, %v1947
        %v2114 = vmax.f32 %v1857, %v2057
        %v2115 = vmax.f32 %v1858, %v1950
        %v2116 = vmax.f32 %v1859, %v2058
        %v2117 = vmax.f32 %v1860, %v1953
        %v2118 = vmax.f32 %v1861, %v2059
        %v2119 = vmax.f32 %v1862, %v1956
        %v2120 = vmax.f32 %v1863, %v2060
        %v2121 = vmax.f32 %v1864, %v1959
        %v2122 = vmax.f32 %v1865, %v2061
        %v2123 = vmax.f32 %v1866, %v1962
        %v2124 = vmax.f32 %v1867, %v2062
        %v2125 = vmax.f32 %v1868, %v1965
        %v2126 = vmax.f32 %v1869, %v2063
        %v2127 = vmax.f32 %v1870, %v1968
        %v2128 = vmax.f32 %v1871, %v2064
        %v2129 = vld [vmem:[%s6] sm:$0xff]
        %v2130 = vld [vmem:[%s6 + $0x8] sm:$0xff]
        %v2131 = vld [vmem:[%s6 + $0x10] sm:$0xff]
        %v2132 = vld [vmem:[%s6 + $0x18] sm:$0xff]
        %v2133 = vld [vmem:[%s6 + $0x20] sm:$0xff]
        %v2134 = vld [vmem:[%s6 + $0x28] sm:$0xff]
        %v2135 = vld [vmem:[%s6 + $0x30] sm:$0xff]
        %v2136 = vld [vmem:[%s6 + $0x38] sm:$0xff]
        %v2137 = vld [vmem:[%s6 + $0x40] sm:$0xff]
        %v2138 = vld [vmem:[%s6 + $0x48] sm:$0xff]
        %v2139 = vld [vmem:[%s6 + $0x50] sm:$0xff]
        %v2140 = vld [vmem:[%s6 + $0x58] sm:$0xff]
        %v2141 = vld [vmem:[%s6 + $0x60] sm:$0xff]
        %v2142 = vld [vmem:[%s6 + $0x68] sm:$0xff]
        %v2143 = vld [vmem:[%s6 + $0x70] sm:$0xff]
        %v2144 = vld [vmem:[%s6 + $0x78] sm:$0xff]
        %2145 = vmatprep.subr.mxu0 0.0
        %2146 = vmatpush1.msra.mxu0 %v2080
        %2147 = vmatprep.subr.mxu0 0.0
        %2148 = vmatpush1.msra.mxu0 %v2079
        %2149 = vmatprep.subr.mxu0 0.0
        %2150 = vmatpush1.msra.mxu0 %v2078
        %2151 = vmatprep.subr.mxu0 0.0
        %2152 = vmatpush1.msra.mxu0 %v2077
        %2153 = vmatprep.subr.mxu0 0.0
        %2154 = vmatpush1.msra.mxu0 %v2076
        %2155 = vmatprep.subr.mxu0 0.0
        %2156 = vmatpush1.msra.mxu0 %v2075
        %2157 = vmatprep.subr.mxu0 0.0
        %2158 = vmatpush1.msra.mxu0 %v2074
        %2159 = vmatprep.subr.mxu0 0.0
        %2160 = vmatpush1.msra.mxu0 %v2073
        %2161 = vmatprep.subr.mxu0 0.0
        %2162 = vmatpush1.msra.mxu0 %v2072
        %2163 = vmatprep.subr.mxu0 0.0
        %2164 = vmatpush1.msra.mxu0 %v2071
        %2165 = vmatprep.subr.mxu0 0.0
        %2166 = vmatpush1.msra.mxu0 %v2070
        %2167 = vmatprep.subr.mxu0 0.0
        %2168 = vmatpush1.msra.mxu0 %v2069
        %2169 = vmatprep.subr.mxu0 0.0
        %2170 = vmatpush1.msra.mxu0 %v2068
        %2171 = vmatprep.subr.mxu0 0.0
        %2172 = vmatpush1.msra.mxu0 %v2067
        %2173 = vmatprep.subr.mxu0 0.0
        %2174 = vmatpush1.msra.mxu0 %v2066
        %2175 = vmatprep.subr.mxu0 0.0
        %2176 = vmatpush1.msra.mxu0 %v2065
        %2177 = vmatprep.subr.mxu0 0.0
        %2178 = vmatpush2.msra.mxu0 %v2096
        %2179 = vmatprep.subr.mxu0 0.0
        %2180 = vmatpush2.msra.mxu0 %v2095
        %2181 = vmatprep.subr.mxu0 0.0
        %2182 = vmatpush2.msra.mxu0 %v2094
        %2183 = vmatprep.subr.mxu0 0.0
        %2184 = vmatpush2.msra.mxu0 %v2093
        %2185 = vmatprep.subr.mxu0 0.0
        %2186 = vmatpush2.msra.mxu0 %v2092
        %2187 = vmatprep.subr.mxu0 0.0
        %2188 = vmatpush2.msra.mxu0 %v2091
        %2189 = vmatprep.subr.mxu0 0.0
        %2190 = vmatpush2.msra.mxu0 %v2090
        %2191 = vmatprep.subr.mxu0 0.0
        %2192 = vmatpush2.msra.mxu0 %v2089
        %2193 = vmatprep.subr.mxu0 0.0
        %2194 = vmatpush2.msra.mxu0 %v2088
        %2195 = vmatprep.subr.mxu0 0.0
        %2196 = vmatpush2.msra.mxu0 %v2087
        %2197 = vmatprep.subr.mxu0 0.0
        %2198 = vmatpush2.msra.mxu0 %v2086
        %2199 = vmatprep.subr.mxu0 0.0
        %2200 = vmatpush2.msra.mxu0 %v2085
        %2201 = vmatprep.subr.mxu0 0.0
        %2202 = vmatpush2.msra.mxu0 %v2084
        %2203 = vmatprep.subr.mxu0 0.0
        %2204 = vmatpush2.msra.mxu0 %v2083
        %2205 = vmatprep.subr.mxu0 0.0
        %2206 = vmatpush2.msra.mxu0 %v2082
        %2207 = vmatprep.subr.mxu0 0.0
        %2208 = vmatpush2.msra.mxu0 %v2081
        %2209 = vmatprep.mubr.f32.mxu0 %v2130
        %2210 = vmatmul.mubr.f32.gmra.mxu0 %v2129
        %v2211 = vpop.f32.mrf.mxu0
        %v2212 = vadd.f32 0.0, %v2211
        %v2213 = vpop.f32.mrf.mxu0
        %2214 = vmatprep.mubr.f32.mxu0 %v2132
        %2215 = vmatmul.mubr.f32.gmra.mxu0 %v2131
        %v2216 = vpop.f32.mrf.mxu0
        %v2217 = vadd.f32 0.0, %v2216
        %v2218 = vpop.f32.mrf.mxu0
        %2219 = vmatprep.mubr.f32.mxu0 %v2134
        %2220 = vmatmul.mubr.f32.gmra.mxu0 %v2133
        %v2221 = vpop.f32.mrf.mxu0
        %v2222 = vadd.f32 0.0, %v2221
        %v2223 = vpop.f32.mrf.mxu0
        %2224 = vmatprep.mubr.f32.mxu0 %v2136
        %2225 = vmatmul.mubr.f32.gmra.mxu0 %v2135
        %v2226 = vpop.f32.mrf.mxu0
        %v2227 = vadd.f32 0.0, %v2226
        %v2228 = vpop.f32.mrf.mxu0
        %2229 = vmatprep.mubr.f32.mxu0 %v2138
        %2230 = vmatmul.mubr.f32.gmra.mxu0 %v2137
        %v2231 = vpop.f32.mrf.mxu0
        %v2232 = vadd.f32 0.0, %v2231
        %v2233 = vpop.f32.mrf.mxu0
        %2234 = vmatprep.mubr.f32.mxu0 %v2140
        %2235 = vmatmul.mubr.f32.gmra.mxu0 %v2139
        %v2236 = vpop.f32.mrf.mxu0
        %v2237 = vadd.f32 0.0, %v2236
        %v2238 = vpop.f32.mrf.mxu0
        %2239 = vmatprep.mubr.f32.mxu0 %v2142
        %2240 = vmatmul.mubr.f32.gmra.mxu0 %v2141
        %v2241 = vpop.f32.mrf.mxu0
        %v2242 = vadd.f32 0.0, %v2241
        %v2243 = vpop.f32.mrf.mxu0
        %2244 = vmatprep.mubr.f32.mxu0 %v2144
        %2245 = vmatmul.mubr.f32.gmra.mxu0 %v2143
        %v2246 = vpop.f32.mrf.mxu0
        %v2247 = vadd.f32 0.0, %v2246
        %v2248 = vpop.f32.mrf.mxu0
        %2249 = vdwg.mxu0
        %2250 = vmatprep.subr.mxu0 0.0
        %2251 = vmatpush1.msra.mxu0 %v2112
        %2252 = vmatprep.subr.mxu0 0.0
        %2253 = vmatpush1.msra.mxu0 %v2111
        %2254 = vmatprep.subr.mxu0 0.0
        %2255 = vmatpush1.msra.mxu0 %v2110
        %2256 = vmatprep.subr.mxu0 0.0
        %2257 = vmatpush1.msra.mxu0 %v2109
        %2258 = vmatprep.subr.mxu0 0.0
        %2259 = vmatpush1.msra.mxu0 %v2108
        %2260 = vmatprep.subr.mxu0 0.0
        %2261 = vmatpush1.msra.mxu0 %v2107
        %2262 = vmatprep.subr.mxu0 0.0
        %2263 = vmatpush1.msra.mxu0 %v2106
        %2264 = vmatprep.subr.mxu0 0.0
        %2265 = vmatpush1.msra.mxu0 %v2105
        %2266 = vmatprep.subr.mxu0 0.0
        %2267 = vmatpush1.msra.mxu0 %v2104
        %2268 = vmatprep.subr.mxu0 0.0
        %2269 = vmatpush1.msra.mxu0 %v2103
        %2270 = vmatprep.subr.mxu0 0.0
        %2271 = vmatpush1.msra.mxu0 %v2102
        %2272 = vmatprep.subr.mxu0 0.0
        %2273 = vmatpush1.msra.mxu0 %v2101
        %2274 = vmatprep.subr.mxu0 0.0
        %2275 = vmatpush1.msra.mxu0 %v2100
        %2276 = vmatprep.subr.mxu0 0.0
        %2277 = vmatpush1.msra.mxu0 %v2099
        %2278 = vmatprep.subr.mxu0 0.0
        %2279 = vmatpush1.msra.mxu0 %v2098
        %2280 = vmatprep.subr.mxu0 0.0
        %2281 = vmatpush1.msra.mxu0 %v2097
        %2282 = vmatprep.subr.mxu0 0.0
        %2283 = vmatpush2.msra.mxu0 %v2128
        %2284 = vmatprep.subr.mxu0 0.0
        %2285 = vmatpush2.msra.mxu0 %v2127
        %2286 = vmatprep.subr.mxu0 0.0
        %2287 = vmatpush2.msra.mxu0 %v2126
        %2288 = vmatprep.subr.mxu0 0.0
        %2289 = vmatpush2.msra.mxu0 %v2125
        %2290 = vmatprep.subr.mxu0 0.0
        %2291 = vmatpush2.msra.mxu0 %v2124
        %2292 = vmatprep.subr.mxu0 0.0
        %2293 = vmatpush2.msra.mxu0 %v2123
        %2294 = vmatprep.subr.mxu0 0.0
        %2295 = vmatpush2.msra.mxu0 %v2122
        %2296 = vmatprep.subr.mxu0 0.0
        %2297 = vmatpush2.msra.mxu0 %v2121
        %2298 = vmatprep.subr.mxu0 0.0
        %2299 = vmatpush2.msra.mxu0 %v2120
        %2300 = vmatprep.subr.mxu0 0.0
        %2301 = vmatpush2.msra.mxu0 %v2119
        %2302 = vmatprep.subr.mxu0 0.0
        %2303 = vmatpush2.msra.mxu0 %v2118
        %2304 = vmatprep.subr.mxu0 0.0
        %2305 = vmatpush2.msra.mxu0 %v2117
        %2306 = vmatprep.subr.mxu0 0.0
        %2307 = vmatpush2.msra.mxu0 %v2116
        %2308 = vmatprep.subr.mxu0 0.0
        %2309 = vmatpush2.msra.mxu0 %v2115
        %2310 = vmatprep.subr.mxu0 0.0
        %2311 = vmatpush2.msra.mxu0 %v2114
        %2312 = vmatprep.subr.mxu0 0.0
        %2313 = vmatpush2.msra.mxu0 %v2113
        %2314 = vmatprep.mubr.f32.mxu0 %v2130
        %2315 = vmatmul.mubr.f32.gmra.mxu0 %v2129
        %v2316 = vpop.f32.mrf.mxu0
        %v2317 = vadd.f32 0.0, %v2316
        %v2318 = vpop.f32.mrf.mxu0
        %2319 = vmatprep.mubr.f32.mxu0 %v2132
        %2320 = vmatmul.mubr.f32.gmra.mxu0 %v2131
        %v2321 = vpop.f32.mrf.mxu0
        %v2322 = vadd.f32 0.0, %v2321
        %v2323 = vpop.f32.mrf.mxu0
        %2324 = vmatprep.mubr.f32.mxu0 %v2134
        %2325 = vmatmul.mubr.f32.gmra.mxu0 %v2133
        %v2326 = vpop.f32.mrf.mxu0
        %v2327 = vadd.f32 0.0, %v2326
        %v2328 = vpop.f32.mrf.mxu0
        %2329 = vmatprep.mubr.f32.mxu0 %v2136
        %2330 = vmatmul.mubr.f32.gmra.mxu0 %v2135
        %v2331 = vpop.f32.mrf.mxu0
        %v2332 = vadd.f32 0.0, %v2331
        %v2333 = vpop.f32.mrf.mxu0
        %2334 = vmatprep.mubr.f32.mxu0 %v2138
        %2335 = vmatmul.mubr.f32.gmra.mxu0 %v2137
        %v2336 = vpop.f32.mrf.mxu0
        %v2337 = vadd.f32 0.0, %v2336
        %v2338 = vpop.f32.mrf.mxu0
        %2339 = vmatprep.mubr.f32.mxu0 %v2140
        %2340 = vmatmul.mubr.f32.gmra.mxu0 %v2139
        %v2341 = vpop.f32.mrf.mxu0
        %v2342 = vadd.f32 0.0, %v2341
        %v2343 = vpop.f32.mrf.mxu0
        %2344 = vmatprep.mubr.f32.mxu0 %v2142
        %2345 = vmatmul.mubr.f32.gmra.mxu0 %v2141
        %v2346 = vpop.f32.mrf.mxu0
        %v2347 = vadd.f32 0.0, %v2346
        %v2348 = vpop.f32.mrf.mxu0
        %2349 = vmatprep.mubr.f32.mxu0 %v2144
        %2350 = vmatmul.mubr.f32.gmra.mxu0 %v2143
        %v2351 = vpop.f32.mrf.mxu0
        %v2352 = vadd.f32 0.0, %v2351
        %v2353 = vpop.f32.mrf.mxu0
        %2354 = vdwg.mxu0
        %v2355 = vld [vmem:[%s469] sm:$0xf]
        %v2356 = vld [vmem:[%s469 + $0x4] sm:$0xf]
        %v2357 = vld [vmem:[%s469 + $0x8] sm:$0xf]
        %v2358 = vld [vmem:[%s469 + $0xc] sm:$0xf]
        %v2359 = vld [vmem:[%s469 + $0x10] sm:$0xf]
        %v2360 = vld [vmem:[%s469 + $0x14] sm:$0xf]
        %v2361 = vld [vmem:[%s469 + $0x18] sm:$0xf]
        %v2362 = vld [vmem:[%s469 + $0x1c] sm:$0xf]
        %v2363 = vld [vmem:[%s469 + $0x20] sm:$0xf]
        %v2364 = vld [vmem:[%s469 + $0x24] sm:$0xf]
        %v2365 = vld [vmem:[%s469 + $0x28] sm:$0xf]
        %v2366 = vld [vmem:[%s469 + $0x2c] sm:$0xf]
        %v2367 = vld [vmem:[%s469 + $0x30] sm:$0xf]
        %v2368 = vld [vmem:[%s469 + $0x34] sm:$0xf]
        %v2369 = vld [vmem:[%s469 + $0x38] sm:$0xf]
        %v2370 = vld [vmem:[%s469 + $0x3c] sm:$0xf]
        %v2371 = vld [vmem:[%s5] sm:$0xf]
        %v2372 = vld [vmem:[%s5 + $0x4] sm:$0xf]
        %v2389 = vunpack.c.l.b16 %v2355
        %v2390 = vunpack.c.l.b16 %v2356
        %v2391 = vunpack.c.l.b16 %v2357
        %v2392 = vunpack.c.l.b16 %v2358
        %v2393 = vunpack.c.l.b16 %v2359
        %v2394 = vunpack.c.l.b16 %v2360
        %v2395 = vunpack.c.l.b16 %v2361
        %v2396 = vunpack.c.l.b16 %v2362
        %v2397 = vunpack.c.l.b16 %v2363
        %v2398 = vunpack.c.l.b16 %v2364
        %v2399 = vunpack.c.l.b16 %v2365
        %v2400 = vunpack.c.l.b16 %v2366
        %v2401 = vunpack.c.l.b16 %v2367
        %v2402 = vunpack.c.l.b16 %v2368
        %v2403 = vunpack.c.l.b16 %v2369
        %v2404 = vunpack.c.l.b16 %v2370
        %v2405 = vpack.c.b16 %v2390, %v2389
        %v2406 = vpack.c.b16 %v2392, %v2391
        %v2407 = vpack.c.b16 %v2394, %v2393
        %v2408 = vpack.c.b16 %v2396, %v2395
        %v2409 = vpack.c.b16 %v2398, %v2397
        %v2410 = vpack.c.b16 %v2400, %v2399
        %v2411 = vpack.c.b16 %v2402, %v2401
        %v2412 = vpack.c.b16 %v2404, %v2403
        %v2415 = vunpack.c.l.b16 %v2371
        %v2416 = vunpack.c.l.b16 %v2372
        %v2417 = vpack.c.b16 %v2416, %v2415
        %v2420 = vsel %vm903, %v2405, 0
        %v2423 = vsel %vm903, %v2406, 0
        %v2426 = vsel %vm903, %v2407, 0
        %v2429 = vsel %vm903, %v2408, 0
        %v2432 = vsel %vm903, %v2409, 0
        %v2435 = vsel %vm903, %v2410, 0
        %v2438 = vsel %vm903, %v2411, 0
        %v2441 = vsel %vm903, %v2412, 0
        %2443 = vmatprep.subr.bf16.mxu0 0
        %2444 = vmatpush1.bf16.msra.mxu0 0
        %2445 = vmatprep.subr.bf16.mxu0 0
        %2446 = vmatpush1.bf16.msra.mxu0 0
        %2447 = vmatprep.subr.bf16.mxu0 0
        %2448 = vmatpush1.bf16.msra.mxu0 0
        %2449 = vmatprep.subr.bf16.mxu0 0
        %2450 = vmatpush1.bf16.msra.mxu0 0
        %2451 = vmatprep.subr.bf16.mxu0 0
        %2452 = vmatpush1.bf16.msra.mxu0 0
        %2453 = vmatprep.subr.bf16.mxu0 0
        %2454 = vmatpush1.bf16.msra.mxu0 0
        %2455 = vmatprep.subr.bf16.mxu0 0
        %2456 = vmatpush1.bf16.msra.mxu0 0
        %2457 = vmatprep.subr.bf16.mxu0 0
        %2458 = vmatpush1.bf16.msra.mxu0 %v2417
        %2459 = vmatprep.subr.bf16.mxu0 0
        %2460 = vmatpush2.bf16.msra.mxu0 0
        %2461 = vmatprep.subr.bf16.mxu0 0
        %2462 = vmatpush2.bf16.msra.mxu0 0
        %2463 = vmatprep.subr.bf16.mxu0 0
        %2464 = vmatpush2.bf16.msra.mxu0 0
        %2465 = vmatprep.subr.bf16.mxu0 0
        %2466 = vmatpush2.bf16.msra.mxu0 0
        %2467 = vmatprep.subr.bf16.mxu0 0
        %2468 = vmatpush2.bf16.msra.mxu0 0
        %2469 = vmatprep.subr.bf16.mxu0 0
        %2470 = vmatpush2.bf16.msra.mxu0 0
        %2471 = vmatprep.subr.bf16.mxu0 0
        %2472 = vmatpush2.bf16.msra.mxu0 0
        %2473 = vmatprep.subr.bf16.mxu0 0
        %2474 = vmatpush2.bf16.msra.mxu0 0
        %2475 = vmatprep.mubr.bf16.mxu0 0
        %2476 = vmatmul.mubr.bf16.gmra.mxu0 %v2420
        %v2477 = vpop.f32.mrf.mxu0
        %v2478 = vadd.f32 0.0, %v2477
        %v2479 = vpop.f32.mrf.mxu0
        %v2480 = vpop.f32.mrf.mxu0
        %v2481 = vadd.f32 0.0, %v2480
        %v2482 = vpop.f32.mrf.mxu0
        %2483 = vmatprep.mubr.bf16.mxu0 0
        %2484 = vmatmul.mubr.bf16.gmra.mxu0 %v2423
        %v2485 = vpop.f32.mrf.mxu0
        %v2486 = vadd.f32 0.0, %v2485
        %v2487 = vpop.f32.mrf.mxu0
        %v2488 = vpop.f32.mrf.mxu0
        %v2489 = vadd.f32 0.0, %v2488
        %v2490 = vpop.f32.mrf.mxu0
        %2491 = vmatprep.mubr.bf16.mxu0 0
        %2492 = vmatmul.mubr.bf16.gmra.mxu0 %v2426
        %v2493 = vpop.f32.mrf.mxu0
        %v2494 = vadd.f32 0.0, %v2493
        %v2495 = vpop.f32.mrf.mxu0
        %v2496 = vpop.f32.mrf.mxu0
        %v2497 = vadd.f32 0.0, %v2496
        %v2498 = vpop.f32.mrf.mxu0
        %2499 = vmatprep.mubr.bf16.mxu0 0
        %2500 = vmatmul.mubr.bf16.gmra.mxu0 %v2429
        %v2501 = vpop.f32.mrf.mxu0
        %v2502 = vadd.f32 0.0, %v2501
        %v2503 = vpop.f32.mrf.mxu0
        %v2504 = vpop.f32.mrf.mxu0
        %v2505 = vadd.f32 0.0, %v2504
        %v2506 = vpop.f32.mrf.mxu0
        %2507 = vmatprep.mubr.bf16.mxu0 0
        %2508 = vmatmul.mubr.bf16.gmra.mxu0 %v2432
        %v2509 = vpop.f32.mrf.mxu0
        %v2510 = vadd.f32 0.0, %v2509
        %v2511 = vpop.f32.mrf.mxu0
        %v2512 = vpop.f32.mrf.mxu0
        %v2513 = vadd.f32 0.0, %v2512
        %v2514 = vpop.f32.mrf.mxu0
        %2515 = vmatprep.mubr.bf16.mxu0 0
        %2516 = vmatmul.mubr.bf16.gmra.mxu0 %v2435
        %v2517 = vpop.f32.mrf.mxu0
        %v2518 = vadd.f32 0.0, %v2517
        %v2519 = vpop.f32.mrf.mxu0
        %v2520 = vpop.f32.mrf.mxu0
        %v2521 = vadd.f32 0.0, %v2520
        %v2522 = vpop.f32.mrf.mxu0
        %2523 = vmatprep.mubr.bf16.mxu0 0
        %2524 = vmatmul.mubr.bf16.gmra.mxu0 %v2438
        %v2525 = vpop.f32.mrf.mxu0
        %v2526 = vadd.f32 0.0, %v2525
        %v2527 = vpop.f32.mrf.mxu0
        %v2528 = vpop.f32.mrf.mxu0
        %v2529 = vadd.f32 0.0, %v2528
        %v2530 = vpop.f32.mrf.mxu0
        %2531 = vmatprep.mubr.bf16.mxu0 0
        %2532 = vmatmul.mubr.bf16.gmra.mxu0 %v2441
        %v2533 = vpop.f32.mrf.mxu0
        %v2534 = vadd.f32 0.0, %v2533
        %v2535 = vpop.f32.mrf.mxu0
        %v2536 = vpop.f32.mrf.mxu0
        %v2537 = vadd.f32 0.0, %v2536
        %v2538 = vpop.f32.mrf.mxu0
        %2539 = vdwg.mxu0
        %v2540 = vld [vmem:[%s11] sm:$0x1]
        %v2542 = vlaneseq
        %v2543 = vshrl.u32 %v2542, 7
        %v2544 = vsub.s32 0, %v2543
        %v2545 = vrot.slane %v2540, %v2544
        %v2547 = vmul.f32 %v2478, %v2545
        %v2548 = vmul.f32 %v2481, %v2545
        %v2549 = vmul.f32 %v2486, %v2545
        %v2550 = vmul.f32 %v2489, %v2545
        %v2551 = vmul.f32 %v2494, %v2545
        %v2552 = vmul.f32 %v2497, %v2545
        %v2553 = vmul.f32 %v2502, %v2545
        %v2554 = vmul.f32 %v2505, %v2545
        %v2555 = vmul.f32 %v2510, %v2545
        %v2556 = vmul.f32 %v2513, %v2545
        %v2557 = vmul.f32 %v2518, %v2545
        %v2558 = vmul.f32 %v2521, %v2545
        %v2559 = vmul.f32 %v2526, %v2545
        %v2560 = vmul.f32 %v2529, %v2545
        %v2561 = vmul.f32 %v2534, %v2545
        %v2562 = vmul.f32 %v2537, %v2545
        %v2563 = vld [vmem:[%s12] sm:$0x1]
        %v2565 = vlaneseq
        %v2566 = vshrl.u32 %v2565, 7
        %v2567 = vsub.s32 0, %v2566
        %v2568 = vrot.slane %v2563, %v2567
        %v2570 = vadd.f32 %v2547, %v2568
        %v2571 = vadd.f32 %v2548, %v2568
        %v2572 = vadd.f32 %v2549, %v2568
        %v2573 = vadd.f32 %v2550, %v2568
        %v2574 = vadd.f32 %v2551, %v2568
        %v2575 = vadd.f32 %v2552, %v2568
        %v2576 = vadd.f32 %v2553, %v2568
        %v2577 = vadd.f32 %v2554, %v2568
        %v2578 = vadd.f32 %v2555, %v2568
        %v2579 = vadd.f32 %v2556, %v2568
        %v2580 = vadd.f32 %v2557, %v2568
        %v2581 = vadd.f32 %v2558, %v2568
        %v2582 = vadd.f32 %v2559, %v2568
        %v2583 = vadd.f32 %v2560, %v2568
        %v2584 = vadd.f32 %v2561, %v2568
        %v2585 = vadd.f32 %v2562, %v2568
        %v2586 = vstv %s476
        %v2587 = vmul.f32 %v2212, %v2586
        %v2588 = vmul.f32 %v2217, %v2586
        %v2589 = vmul.f32 %v2222, %v2586
        %v2590 = vmul.f32 %v2227, %v2586
        %v2591 = vmul.f32 %v2232, %v2586
        %v2592 = vmul.f32 %v2237, %v2586
        %v2593 = vmul.f32 %v2242, %v2586
        %v2594 = vmul.f32 %v2247, %v2586
        %v2595 = vadd.f32 %v2587, 0.0
        %v2596 = vadd.f32 %v2588, 0.0
        %v2597 = vadd.f32 %v2589, 0.0
        %v2598 = vadd.f32 %v2590, 0.0
        %v2599 = vadd.f32 %v2591, 0.0
        %v2600 = vadd.f32 %v2592, 0.0
        %v2601 = vadd.f32 %v2593, 0.0
        %v2602 = vadd.f32 %v2594, 0.0
        %vm2603 = vcmp.ge.f32.partialorder %v2595, 1.0
        %vm2604 = vcmp.ge.f32.partialorder %v2596, 1.0
        %vm2605 = vcmp.ge.f32.partialorder %v2597, 1.0
        %vm2606 = vcmp.ge.f32.partialorder %v2598, 1.0
        %vm2607 = vcmp.ge.f32.partialorder %v2599, 1.0
        %vm2608 = vcmp.ge.f32.partialorder %v2600, 1.0
        %vm2609 = vcmp.ge.f32.partialorder %v2601, 1.0
        %vm2610 = vcmp.ge.f32.partialorder %v2602, 1.0
        %v2611 = vsel %vm2603, 1, 0
        %v2612 = vsel %vm2604, 1, 0
        %v2613 = vsel %vm2605, 1, 0
        %v2614 = vsel %vm2606, 1, 0
        %v2615 = vsel %vm2607, 1, 0
        %v2616 = vsel %vm2608, 1, 0
        %v2617 = vsel %vm2609, 1, 0
        %v2618 = vsel %vm2610, 1, 0
        %v2619 = vcvt.s32.f32 %v2611
        %v2620 = vcvt.s32.f32 %v2612
        %v2621 = vcvt.s32.f32 %v2613
        %v2622 = vcvt.s32.f32 %v2614
        %v2623 = vcvt.s32.f32 %v2615
        %v2624 = vcvt.s32.f32 %v2616
        %v2625 = vcvt.s32.f32 %v2617
        %v2626 = vcvt.s32.f32 %v2618
        %v2627 = vsub.f32 1.0, %v2619
        %v2628 = vsub.f32 1.0, %v2620
        %v2629 = vsub.f32 1.0, %v2621
        %v2630 = vsub.f32 1.0, %v2622
        %v2631 = vsub.f32 1.0, %v2623
        %v2632 = vsub.f32 1.0, %v2624
        %v2633 = vsub.f32 1.0, %v2625
        %v2634 = vsub.f32 1.0, %v2626
        %v2635 = vmul.f32 %v2595, %v2627
        %v2636 = vmul.f32 %v2596, %v2628
        %v2637 = vmul.f32 %v2597, %v2629
        %v2638 = vmul.f32 %v2598, %v2630
        %v2639 = vmul.f32 %v2599, %v2631
        %v2640 = vmul.f32 %v2600, %v2632
        %v2641 = vmul.f32 %v2601, %v2633
        %v2642 = vmul.f32 %v2602, %v2634
        %v2643 = vsub.f32 %v2317, %v2635
        %v2644 = vsub.f32 %v2322, %v2636
        %v2645 = vsub.f32 %v2327, %v2637
        %v2646 = vsub.f32 %v2332, %v2638
        %v2647 = vsub.f32 %v2337, %v2639
        %v2648 = vsub.f32 %v2342, %v2640
        %v2649 = vsub.f32 %v2347, %v2641
        %v2650 = vsub.f32 %v2352, %v2642
        %v2651 = vmul.f32 %v2643, %v2586
        %v2652 = vmul.f32 %v2644, %v2586
        %v2653 = vmul.f32 %v2645, %v2586
        %v2654 = vmul.f32 %v2646, %v2586
        %v2655 = vmul.f32 %v2647, %v2586
        %v2656 = vmul.f32 %v2648, %v2586
        %v2657 = vmul.f32 %v2649, %v2586
        %v2658 = vmul.f32 %v2650, %v2586
        %v2659 = vadd.f32 %v2635, %v2651
        %v2660 = vadd.f32 %v2636, %v2652
        %v2661 = vadd.f32 %v2637, %v2653
        %v2662 = vadd.f32 %v2638, %v2654
        %v2663 = vadd.f32 %v2639, %v2655
        %v2664 = vadd.f32 %v2640, %v2656
        %v2665 = vadd.f32 %v2641, %v2657
        %v2666 = vadd.f32 %v2642, %v2658
        %vm2667 = vcmp.ge.f32.partialorder %v2659, 1.0
        %vm2668 = vcmp.ge.f32.partialorder %v2660, 1.0
        %vm2669 = vcmp.ge.f32.partialorder %v2661, 1.0
        %vm2670 = vcmp.ge.f32.partialorder %v2662, 1.0
        %vm2671 = vcmp.ge.f32.partialorder %v2663, 1.0
        %vm2672 = vcmp.ge.f32.partialorder %v2664, 1.0
        %vm2673 = vcmp.ge.f32.partialorder %v2665, 1.0
        %vm2674 = vcmp.ge.f32.partialorder %v2666, 1.0
        %v2675 = vsel %vm2667, 1, 0
        %v2676 = vsel %vm2668, 1, 0
        %v2677 = vsel %vm2669, 1, 0
        %v2678 = vsel %vm2670, 1, 0
        %v2679 = vsel %vm2671, 1, 0
        %v2680 = vsel %vm2672, 1, 0
        %v2681 = vsel %vm2673, 1, 0
        %v2682 = vsel %vm2674, 1, 0
        %v2683 = vcvt.s32.f32 %v2675
        %v2684 = vcvt.s32.f32 %v2676
        %v2685 = vcvt.s32.f32 %v2677
        %v2686 = vcvt.s32.f32 %v2678
        %v2687 = vcvt.s32.f32 %v2679
        %v2688 = vcvt.s32.f32 %v2680
        %v2689 = vcvt.s32.f32 %v2681
        %v2690 = vcvt.s32.f32 %v2682
        %v2706 = vrot.slane 0.0, 7
        %v2707 = vrot.slane %v2619, 7
        %v2708 = vrot.slane %v2620, 7
        %v2709 = vrot.slane %v2621, 7
        %v2710 = vrot.slane %v2622, 7
        %v2711 = vrot.slane %v2623, 7
        %v2712 = vrot.slane %v2624, 7
        %v2713 = vrot.slane %v2625, 7
        %v2714 = vrot.slane %v2683, 7
        %v2715 = vrot.slane %v2684, 7
        %v2716 = vrot.slane %v2685, 7
        %v2717 = vrot.slane %v2686, 7
        %v2718 = vrot.slane %v2687, 7
        %v2719 = vrot.slane %v2688, 7
        %v2720 = vrot.slane %v2689, 7
        %v2736 = vsel %vm1615, 0.0, %v2706
        %v2737 = vsel %vm1615, 0.0, %v2707
        %v2738 = vsel %vm1615, 0.0, %v2708
        %v2739 = vsel %vm1615, 0.0, %v2709
        %v2740 = vsel %vm1615, 0.0, %v2710
        %v2741 = vsel %vm1615, 0.0, %v2711
        %v2742 = vsel %vm1615, 0.0, %v2712
        %v2743 = vsel %vm1615, 0.0, %v2713
        %v2744 = vsel %vm1615, 0.0, %v2714
        %v2745 = vsel %vm1615, 0.0, %v2715
        %v2746 = vsel %vm1615, 0.0, %v2716
        %v2747 = vsel %vm1615, 0.0, %v2717
        %v2748 = vsel %vm1615, 0.0, %v2718
        %v2749 = vsel %vm1615, 0.0, %v2719
        %v2750 = vsel %vm1615, 0.0, %v2720
        %v2751 = vrot.slane 0.0, 1
        %v2752 = vrot.slane %v2619, 1
        %v2753 = vrot.slane %v2620, 1
        %v2754 = vrot.slane %v2621, 1
        %v2755 = vrot.slane %v2622, 1
        %v2756 = vrot.slane %v2623, 1
        %v2757 = vrot.slane %v2624, 1
        %v2758 = vrot.slane %v2625, 1
        %v2759 = vrot.slane %v2683, 1
        %v2760 = vrot.slane %v2684, 1
        %v2761 = vrot.slane %v2685, 1
        %v2762 = vrot.slane %v2686, 1
        %v2763 = vrot.slane %v2687, 1
        %v2764 = vrot.slane %v2688, 1
        %v2765 = vrot.slane %v2689, 1
        %v2781 = vsel %vm1872, %v2751, 0.0
        %v2782 = vsel %vm1872, %v2752, 0.0
        %v2783 = vsel %vm1872, %v2753, 0.0
        %v2784 = vsel %vm1872, %v2754, 0.0
        %v2785 = vsel %vm1872, %v2755, 0.0
        %v2786 = vsel %vm1872, %v2756, 0.0
        %v2787 = vsel %vm1872, %v2757, 0.0
        %v2788 = vsel %vm1872, %v2758, 0.0
        %v2789 = vsel %vm1872, %v2759, 0.0
        %v2790 = vsel %vm1872, %v2760, 0.0
        %v2791 = vsel %vm1872, %v2761, 0.0
        %v2792 = vsel %vm1872, %v2762, 0.0
        %v2793 = vsel %vm1872, %v2763, 0.0
        %v2794 = vsel %vm1872, %v2764, 0.0
        %v2795 = vsel %vm1872, %v2765, 0.0
        %v2798 = vrot.slane %v2626, 7
        %v2799 = vrot.slane %v2690, 7
        %v2802 = vsel %vm1615, 0.0, %v2798
        %v2803 = vsel %vm1615, 0.0, %v2799
        %v2804 = vrot.slane %v2626, 1
        %v2805 = vrot.slane %v2690, 1
        %v2808 = vsel %vm1872, %v2804, 0.0
        %v2809 = vsel %vm1872, %v2805, 0.0
        %2810 = vrot.lane.b32.xlu0 0.0, 32
        %v2811 = vpop.permute.xlu0 %2810
        %2812 = vrot.lane.b32.xlu0 %v2619, 32
        %v2813 = vpop.permute.xlu0 %2812
        %2814 = vrot.lane.b32.xlu0 %v2620, 32
        %v2815 = vpop.permute.xlu0 %2814
        %2816 = vrot.lane.b32.xlu0 %v2621, 32
        %v2817 = vpop.permute.xlu0 %2816
        %2818 = vrot.lane.b32.xlu0 %v2622, 32
        %v2819 = vpop.permute.xlu0 %2818
        %2820 = vrot.lane.b32.xlu0 %v2623, 32
        %v2821 = vpop.permute.xlu0 %2820
        %2822 = vrot.lane.b32.xlu0 %v2624, 32
        %v2823 = vpop.permute.xlu0 %2822
        %2824 = vrot.lane.b32.xlu0 %v2625, 32
        %v2825 = vpop.permute.xlu0 %2824
        %2826 = vrot.lane.b32.xlu0 %v2683, 32
        %v2827 = vpop.permute.xlu0 %2826
        %2828 = vrot.lane.b32.xlu0 %v2684, 32
        %v2829 = vpop.permute.xlu0 %2828
        %2830 = vrot.lane.b32.xlu0 %v2685, 32
        %v2831 = vpop.permute.xlu0 %2830
        %2832 = vrot.lane.b32.xlu0 %v2686, 32
        %v2833 = vpop.permute.xlu0 %2832
        %2834 = vrot.lane.b32.xlu0 %v2687, 32
        %v2835 = vpop.permute.xlu0 %2834
        %2836 = vrot.lane.b32.xlu0 %v2688, 32
        %v2837 = vpop.permute.xlu0 %2836
        %2838 = vrot.lane.b32.xlu0 %v2689, 32
        %v2839 = vpop.permute.xlu0 %2838
        %2870 = vrot.lane.b32.xlu0 %v2781, 64
        %v2871 = vpop.permute.xlu0 %2870
        %2872 = vrot.lane.b32.xlu0 %v2782, 64
        %v2873 = vpop.permute.xlu0 %2872
        %2874 = vrot.lane.b32.xlu0 %v2783, 64
        %v2875 = vpop.permute.xlu0 %2874
        %2876 = vrot.lane.b32.xlu0 %v2784, 64
        %v2877 = vpop.permute.xlu0 %2876
        %2878 = vrot.lane.b32.xlu0 %v2785, 64
        %v2879 = vpop.permute.xlu0 %2878
        %2880 = vrot.lane.b32.xlu0 %v2786, 64
        %v2881 = vpop.permute.xlu0 %2880
        %2882 = vrot.lane.b32.xlu0 %v2787, 64
        %v2883 = vpop.permute.xlu0 %2882
        %2884 = vrot.lane.b32.xlu0 %v2788, 64
        %v2885 = vpop.permute.xlu0 %2884
        %2886 = vrot.lane.b32.xlu0 %v2789, 64
        %v2887 = vpop.permute.xlu0 %2886
        %2888 = vrot.lane.b32.xlu0 %v2790, 64
        %v2889 = vpop.permute.xlu0 %2888
        %2890 = vrot.lane.b32.xlu0 %v2791, 64
        %v2891 = vpop.permute.xlu0 %2890
        %2892 = vrot.lane.b32.xlu0 %v2792, 64
        %v2893 = vpop.permute.xlu0 %2892
        %2894 = vrot.lane.b32.xlu0 %v2793, 64
        %v2895 = vpop.permute.xlu0 %2894
        %2896 = vrot.lane.b32.xlu0 %v2794, 64
        %v2897 = vpop.permute.xlu0 %2896
        %2898 = vrot.lane.b32.xlu0 %v2795, 64
        %v2899 = vpop.permute.xlu0 %2898
        %2931 = vrot.lane.b32.xlu0 %v2737, 96
        %v2932 = vpop.permute.xlu0 %2931
        %2933 = vrot.lane.b32.xlu0 %v2738, 96
        %v2934 = vpop.permute.xlu0 %2933
        %2935 = vrot.lane.b32.xlu0 %v2739, 96
        %v2936 = vpop.permute.xlu0 %2935
        %2937 = vrot.lane.b32.xlu0 %v2740, 96
        %v2938 = vpop.permute.xlu0 %2937
        %2939 = vrot.lane.b32.xlu0 %v2741, 96
        %v2940 = vpop.permute.xlu0 %2939
        %2941 = vrot.lane.b32.xlu0 %v2742, 96
        %v2942 = vpop.permute.xlu0 %2941
        %2943 = vrot.lane.b32.xlu0 %v2743, 96
        %v2944 = vpop.permute.xlu0 %2943
        %2945 = vrot.lane.b32.xlu0 %v2802, 96
        %v2946 = vpop.permute.xlu0 %2945
        %2947 = vrot.lane.b32.xlu0 %v2744, 96
        %v2948 = vpop.permute.xlu0 %2947
        %2949 = vrot.lane.b32.xlu0 %v2745, 96
        %v2950 = vpop.permute.xlu0 %2949
        %2951 = vrot.lane.b32.xlu0 %v2746, 96
        %v2952 = vpop.permute.xlu0 %2951
        %2953 = vrot.lane.b32.xlu0 %v2747, 96
        %v2954 = vpop.permute.xlu0 %2953
        %2955 = vrot.lane.b32.xlu0 %v2748, 96
        %v2956 = vpop.permute.xlu0 %2955
        %2957 = vrot.lane.b32.xlu0 %v2749, 96
        %v2958 = vpop.permute.xlu0 %2957
        %2959 = vrot.lane.b32.xlu0 %v2750, 96
        %v2960 = vpop.permute.xlu0 %2959
        %2961 = vrot.lane.b32.xlu0 %v2803, 96
        %v2962 = vpop.permute.xlu0 %2961
        %2981 = vrot.lane.b32.xlu0 %v2782, 32
        %v2982 = vpop.permute.xlu0 %2981
        %2983 = vrot.lane.b32.xlu0 %v2783, 32
        %v2984 = vpop.permute.xlu0 %2983
        %2985 = vrot.lane.b32.xlu0 %v2784, 32
        %v2986 = vpop.permute.xlu0 %2985
        %2987 = vrot.lane.b32.xlu0 %v2785, 32
        %v2988 = vpop.permute.xlu0 %2987
        %2989 = vrot.lane.b32.xlu0 %v2786, 32
        %v2990 = vpop.permute.xlu0 %2989
        %2991 = vrot.lane.b32.xlu0 %v2787, 32
        %v2992 = vpop.permute.xlu0 %2991
        %2993 = vrot.lane.b32.xlu0 %v2788, 32
        %v2994 = vpop.permute.xlu0 %2993
        %2995 = vrot.lane.b32.xlu0 %v2808, 32
        %v2996 = vpop.permute.xlu0 %2995
        %2997 = vrot.lane.b32.xlu0 %v2789, 32
        %v2998 = vpop.permute.xlu0 %2997
        %2999 = vrot.lane.b32.xlu0 %v2790, 32
        %v3000 = vpop.permute.xlu0 %2999
        %3001 = vrot.lane.b32.xlu0 %v2791, 32
        %v3002 = vpop.permute.xlu0 %3001
        %3003 = vrot.lane.b32.xlu0 %v2792, 32
        %v3004 = vpop.permute.xlu0 %3003
        %3005 = vrot.lane.b32.xlu0 %v2793, 32
        %v3006 = vpop.permute.xlu0 %3005
        %3007 = vrot.lane.b32.xlu0 %v2794, 32
        %v3008 = vpop.permute.xlu0 %3007
        %3009 = vrot.lane.b32.xlu0 %v2795, 32
        %v3010 = vpop.permute.xlu0 %3009
        %3011 = vrot.lane.b32.xlu0 %v2809, 32
        %v3012 = vpop.permute.xlu0 %3011
        %3030 = vrot.lane.b32.xlu0 %v2738, 64
        %v3031 = vpop.permute.xlu0 %3030
        %3032 = vrot.lane.b32.xlu0 %v2739, 64
        %v3033 = vpop.permute.xlu0 %3032
        %3034 = vrot.lane.b32.xlu0 %v2740, 64
        %v3035 = vpop.permute.xlu0 %3034
        %3036 = vrot.lane.b32.xlu0 %v2741, 64
        %v3037 = vpop.permute.xlu0 %3036
        %3038 = vrot.lane.b32.xlu0 %v2742, 64
        %v3039 = vpop.permute.xlu0 %3038
        %3040 = vrot.lane.b32.xlu0 %v2743, 64
        %v3041 = vpop.permute.xlu0 %3040
        %3042 = vrot.lane.b32.xlu0 %v2802, 64
        %v3043 = vpop.permute.xlu0 %3042
        %3044 = vrot.lane.b32.xlu0 %v2736, 64
        %v3045 = vpop.permute.xlu0 %3044
        %3046 = vrot.lane.b32.xlu0 %v2745, 64
        %v3047 = vpop.permute.xlu0 %3046
        %3048 = vrot.lane.b32.xlu0 %v2746, 64
        %v3049 = vpop.permute.xlu0 %3048
        %3050 = vrot.lane.b32.xlu0 %v2747, 64
        %v3051 = vpop.permute.xlu0 %3050
        %3052 = vrot.lane.b32.xlu0 %v2748, 64
        %v3053 = vpop.permute.xlu0 %3052
        %3054 = vrot.lane.b32.xlu0 %v2749, 64
        %v3055 = vpop.permute.xlu0 %3054
        %3056 = vrot.lane.b32.xlu0 %v2750, 64
        %v3057 = vpop.permute.xlu0 %3056
        %3058 = vrot.lane.b32.xlu0 %v2803, 64
        %v3059 = vpop.permute.xlu0 %3058
        %3075 = vrot.lane.b32.xlu0 %v2620, 96
        %v3076 = vpop.permute.xlu0 %3075
        %3077 = vrot.lane.b32.xlu0 %v2621, 96
        %v3078 = vpop.permute.xlu0 %3077
        %3079 = vrot.lane.b32.xlu0 %v2622, 96
        %v3080 = vpop.permute.xlu0 %3079
        %3081 = vrot.lane.b32.xlu0 %v2623, 96
        %v3082 = vpop.permute.xlu0 %3081
        %3083 = vrot.lane.b32.xlu0 %v2624, 96
        %v3084 = vpop.permute.xlu0 %3083
        %3085 = vrot.lane.b32.xlu0 %v2625, 96
        %v3086 = vpop.permute.xlu0 %3085
        %3087 = vrot.lane.b32.xlu0 %v2626, 96
        %v3088 = vpop.permute.xlu0 %3087
        %3089 = vrot.lane.b32.xlu0 0.0, 96
        %v3090 = vpop.permute.xlu0 %3089
        %3091 = vrot.lane.b32.xlu0 %v2684, 96
        %v3092 = vpop.permute.xlu0 %3091
        %3093 = vrot.lane.b32.xlu0 %v2685, 96
        %v3094 = vpop.permute.xlu0 %3093
        %3095 = vrot.lane.b32.xlu0 %v2686, 96
        %v3096 = vpop.permute.xlu0 %3095
        %3097 = vrot.lane.b32.xlu0 %v2687, 96
        %v3098 = vpop.permute.xlu0 %3097
        %3099 = vrot.lane.b32.xlu0 %v2688, 96
        %v3100 = vpop.permute.xlu0 %3099
        %3101 = vrot.lane.b32.xlu0 %v2689, 96
        %v3102 = vpop.permute.xlu0 %3101
        %3103 = vrot.lane.b32.xlu0 %v2690, 96
        %v3104 = vpop.permute.xlu0 %3103
        %vm3120 = vcmask 261120
        %v3121 = vsel %vm3120, %v2736, %v2811
        %v3122 = vsel %vm3120, %v2737, %v2813
        %v3123 = vsel %vm3120, %v2738, %v2815
        %v3124 = vsel %vm3120, %v2739, %v2817
        %v3125 = vsel %vm3120, %v2740, %v2819
        %v3126 = vsel %vm3120, %v2741, %v2821
        %v3127 = vsel %vm3120, %v2742, %v2823
        %v3128 = vsel %vm3120, %v2743, %v2825
        %v3129 = vsel %vm3120, %v2744, %v2827
        %v3130 = vsel %vm3120, %v2745, %v2829
        %v3131 = vsel %vm3120, %v2746, %v2831
        %v3132 = vsel %vm3120, %v2747, %v2833
        %v3133 = vsel %vm3120, %v2748, %v2835
        %v3134 = vsel %vm3120, %v2749, %v2837
        %v3135 = vsel %vm3120, %v2750, %v2839
        %vm3136 = vcmask 523264
        %v3137 = vsel %vm3136, %v3121, %v2871
        %v3138 = vsel %vm3136, %v3122, %v2873
        %v3139 = vsel %vm3136, %v3123, %v2875
        %v3140 = vsel %vm3136, %v3124, %v2877
        %v3141 = vsel %vm3136, %v3125, %v2879
        %v3142 = vsel %vm3136, %v3126, %v2881
        %v3143 = vsel %vm3136, %v3127, %v2883
        %v3144 = vsel %vm3136, %v3128, %v2885
        %v3145 = vsel %vm3136, %v3129, %v2887
        %v3146 = vsel %vm3136, %v3130, %v2889
        %v3147 = vsel %vm3136, %v3131, %v2891
        %v3148 = vsel %vm3136, %v3132, %v2893
        %v3149 = vsel %vm3136, %v3133, %v2895
        %v3150 = vsel %vm3136, %v3134, %v2897
        %v3151 = vsel %vm3136, %v3135, %v2899
        %vm3152 = vcmask 785408
        %v3153 = vsel %vm3152, %v3137, %v2932
        %v3154 = vsel %vm3152, %v3138, %v2934
        %v3155 = vsel %vm3152, %v3139, %v2936
        %v3156 = vsel %vm3152, %v3140, %v2938
        %v3157 = vsel %vm3152, %v3141, %v2940
        %v3158 = vsel %vm3152, %v3142, %v2942
        %v3159 = vsel %vm3152, %v3143, %v2944
        %v3160 = vsel %vm3152, %v3144, %v2946
        %v3161 = vsel %vm3152, %v3137, %v2948
        %v3162 = vsel %vm3152, %v3145, %v2950
        %v3163 = vsel %vm3152, %v3146, %v2952
        %v3164 = vsel %vm3152, %v3147, %v2954
        %v3165 = vsel %vm3152, %v3148, %v2956
        %v3166 = vsel %vm3152, %v3149, %v2958
        %v3167 = vsel %vm3152, %v3150, %v2960
        %v3168 = vsel %vm3152, %v3151, %v2962
        %v3169 = vsel %vm3120, %v2619, %v2982
        %v3170 = vsel %vm3120, %v2620, %v2984
        %v3171 = vsel %vm3120, %v2621, %v2986
        %v3172 = vsel %vm3120, %v2622, %v2988
        %v3173 = vsel %vm3120, %v2623, %v2990
        %v3174 = vsel %vm3120, %v2624, %v2992
        %v3175 = vsel %vm3120, %v2625, %v2994
        %v3176 = vsel %vm3120, %v2626, %v2996
        %v3177 = vsel %vm3120, %v2683, %v2998
        %v3178 = vsel %vm3120, %v2684, %v3000
        %v3179 = vsel %vm3120, %v2685, %v3002
        %v3180 = vsel %vm3120, %v2686, %v3004
        %v3181 = vsel %vm3120, %v2687, %v3006
        %v3182 = vsel %vm3120, %v2688, %v3008
        %v3183 = vsel %vm3120, %v2689, %v3010
        %v3184 = vsel %vm3120, %v2690, %v3012
        %v3185 = vsel %vm3136, %v3169, %v3031
        %v3186 = vsel %vm3136, %v3170, %v3033
        %v3187 = vsel %vm3136, %v3171, %v3035
        %v3188 = vsel %vm3136, %v3172, %v3037
        %v3189 = vsel %vm3136, %v3173, %v3039
        %v3190 = vsel %vm3136, %v3174, %v3041
        %v3191 = vsel %vm3136, %v3175, %v3043
        %v3192 = vsel %vm3136, %v3176, %v3045
        %v3193 = vsel %vm3136, %v3177, %v3047
        %v3194 = vsel %vm3136, %v3178, %v3049
        %v3195 = vsel %vm3136, %v3179, %v3051
        %v3196 = vsel %vm3136, %v3180, %v3053
        %v3197 = vsel %vm3136, %v3181, %v3055
        %v3198 = vsel %vm3136, %v3182, %v3057
        %v3199 = vsel %vm3136, %v3183, %v3059
        %v3200 = vsel %vm3136, %v3184, %v3045
        %v3201 = vsel %vm3152, %v3185, %v3076
        %v3202 = vsel %vm3152, %v3186, %v3078
        %v3203 = vsel %vm3152, %v3187, %v3080
        %v3204 = vsel %vm3152, %v3188, %v3082
        %v3205 = vsel %vm3152, %v3189, %v3084
        %v3206 = vsel %vm3152, %v3190, %v3086
        %v3207 = vsel %vm3152, %v3191, %v3088
        %v3208 = vsel %vm3152, %v3192, %v3090
        %v3209 = vsel %vm3152, %v3193, %v3092
        %v3210 = vsel %vm3152, %v3194, %v3094
        %v3211 = vsel %vm3152, %v3195, %v3096
        %v3212 = vsel %vm3152, %v3196, %v3098
        %v3213 = vsel %vm3152, %v3197, %v3100
        %v3214 = vsel %vm3152, %v3198, %v3102
        %v3215 = vsel %vm3152, %v3199, %v3104
        %v3216 = vsel %vm3152, %v3200, %v3090
        %v3217 = vpack.c.bf16 %v3154, %v3153
        %v3218 = vpack.c.bf16 %v3202, %v3201
        %v3219 = vpack.c.bf16 %v2784, %v2783
        %v3220 = vpack.c.bf16 %v3156, %v3155
        %v3221 = vpack.c.bf16 %v3204, %v3203
        %v3222 = vpack.c.bf16 %v2786, %v2785
        %v3223 = vpack.c.bf16 %v3158, %v3157
        %v3224 = vpack.c.bf16 %v3206, %v3205
        %v3225 = vpack.c.bf16 %v2788, %v2787
        %v3226 = vpack.c.bf16 %v3160, %v3159
        %v3227 = vpack.c.bf16 %v3208, %v3207
        %v3228 = vpack.c.bf16 %v2781, %v2808
        %v3229 = vpack.c.bf16 %v3162, %v3161
        %v3230 = vpack.c.bf16 %v3210, %v3209
        %v3231 = vpack.c.bf16 %v2791, %v2790
        %v3232 = vpack.c.bf16 %v3164, %v3163
        %v3233 = vpack.c.bf16 %v3212, %v3211
        %v3234 = vpack.c.bf16 %v2793, %v2792
        %v3235 = vpack.c.bf16 %v3166, %v3165
        %v3236 = vpack.c.bf16 %v3214, %v3213
        %v3237 = vpack.c.bf16 %v2795, %v2794
        %v3238 = vpack.c.bf16 %v3168, %v3167
        %v3239 = vpack.c.bf16 %v3216, %v3215
        %v3240 = vpack.c.bf16 %v2781, %v2809
        %v3241 = vld [vmem:[%s4] sm:$0xf]
        %v3242 = vld [vmem:[%s4 + $0x4] sm:$0xf]
        %v3243 = vld [vmem:[%s4 + $0x8] sm:$0xf]
        %v3244 = vld [vmem:[%s4 + $0xc] sm:$0xf]
        %v3245 = vld [vmem:[%s4 + $0x10] sm:$0xf]
        %v3246 = vld [vmem:[%s4 + $0x14] sm:$0xf]
        %v3247 = vld [vmem:[%s4 + $0x18] sm:$0xf]
        %v3248 = vld [vmem:[%s4 + $0x1c] sm:$0xf]
        %v3249 = vld [vmem:[%s4 + $0x20] sm:$0xf]
        %v3250 = vld [vmem:[%s4 + $0x24] sm:$0xf]
        %v3251 = vld [vmem:[%s4 + $0x28] sm:$0xf]
        %v3252 = vld [vmem:[%s4 + $0x2c] sm:$0xf]
        %v3253 = vld [vmem:[%s4 + $0x30] sm:$0xf]
        %v3254 = vld [vmem:[%s4 + $0x34] sm:$0xf]
        %v3255 = vld [vmem:[%s4 + $0x38] sm:$0xf]
        %v3256 = vld [vmem:[%s4 + $0x3c] sm:$0xf]
        %v3257 = vld [vmem:[%s4 + $0x40] sm:$0xf]
        %v3258 = vld [vmem:[%s4 + $0x44] sm:$0xf]
        %v3259 = vld [vmem:[%s4 + $0x48] sm:$0xf]
        %v3260 = vld [vmem:[%s4 + $0x4c] sm:$0xf]
        %v3261 = vld [vmem:[%s4 + $0x50] sm:$0xf]
        %v3262 = vld [vmem:[%s4 + $0x54] sm:$0xf]
        %v3263 = vld [vmem:[%s4 + $0x58] sm:$0xf]
        %v3264 = vld [vmem:[%s4 + $0x5c] sm:$0xf]
        %v3265 = vld [vmem:[%s4 + $0x60] sm:$0xf]
        %v3266 = vld [vmem:[%s4 + $0x64] sm:$0xf]
        %v3267 = vld [vmem:[%s4 + $0x68] sm:$0xf]
        %v3268 = vld [vmem:[%s4 + $0x6c] sm:$0xf]
        %v3269 = vld [vmem:[%s4 + $0x70] sm:$0xf]
        %v3270 = vld [vmem:[%s4 + $0x74] sm:$0xf]
        %v3271 = vld [vmem:[%s4 + $0x78] sm:$0xf]
        %v3272 = vld [vmem:[%s4 + $0x7c] sm:$0xf]
        %v3273 = vld [vmem:[%s4 + $0x80] sm:$0xf]
        %v3274 = vld [vmem:[%s4 + $0x84] sm:$0xf]
        %v3275 = vld [vmem:[%s4 + $0x88] sm:$0xf]
        %v3276 = vld [vmem:[%s4 + $0x8c] sm:$0xf]
        %v3313 = vunpack.c.l.b16 %v3241
        %v3314 = vunpack.c.l.b16 %v3242
        %v3315 = vunpack.c.l.b16 %v3243
        %v3316 = vunpack.c.l.b16 %v3244
        %v3317 = vunpack.c.l.b16 %v3245
        %v3318 = vunpack.c.l.b16 %v3246
        %v3319 = vunpack.c.l.b16 %v3247
        %v3320 = vunpack.c.l.b16 %v3248
        %v3321 = vunpack.c.l.b16 %v3249
        %v3322 = vunpack.c.l.b16 %v3250
        %v3323 = vunpack.c.l.b16 %v3251
        %v3324 = vunpack.c.l.b16 %v3252
        %v3325 = vunpack.c.l.b16 %v3253
        %v3326 = vunpack.c.l.b16 %v3254
        %v3327 = vunpack.c.l.b16 %v3255
        %v3328 = vunpack.c.l.b16 %v3256
        %v3329 = vunpack.c.l.b16 %v3257
        %v3330 = vunpack.c.l.b16 %v3258
        %v3331 = vunpack.c.l.b16 %v3259
        %v3332 = vunpack.c.l.b16 %v3260
        %v3333 = vunpack.c.l.b16 %v3261
        %v3334 = vunpack.c.l.b16 %v3262
        %v3335 = vunpack.c.l.b16 %v3263
        %v3336 = vunpack.c.l.b16 %v3264
        %v3337 = vunpack.c.l.b16 %v3265
        %v3338 = vunpack.c.l.b16 %v3266
        %v3339 = vunpack.c.l.b16 %v3267
        %v3340 = vunpack.c.l.b16 %v3268
        %v3341 = vunpack.c.l.b16 %v3269
        %v3342 = vunpack.c.l.b16 %v3270
        %v3343 = vunpack.c.l.b16 %v3271
        %v3344 = vunpack.c.l.b16 %v3272
        %v3345 = vunpack.c.l.b16 %v3273
        %v3346 = vunpack.c.l.b16 %v3274
        %v3347 = vunpack.c.l.b16 %v3275
        %v3348 = vunpack.c.l.b16 %v3276
        %v3349 = vpack.c.b16 %v3314, %v3313
        %v3350 = vpack.c.b16 %v3316, %v3315
        %v3351 = vpack.c.b16 %v3318, %v3317
        %v3352 = vpack.c.b16 %v3320, %v3319
        %v3353 = vpack.c.b16 %v3322, %v3321
        %v3354 = vpack.c.b16 %v3324, %v3323
        %v3355 = vpack.c.b16 %v3326, %v3325
        %v3356 = vpack.c.b16 %v3328, %v3327
        %v3357 = vpack.c.b16 %v3330, %v3329
        %v3358 = vpack.c.b16 %v3332, %v3331
        %v3359 = vpack.c.b16 %v3334, %v3333
        %v3360 = vpack.c.b16 %v3336, %v3335
        %v3361 = vpack.c.b16 %v3338, %v3337
        %v3362 = vpack.c.b16 %v3340, %v3339
        %v3363 = vpack.c.b16 %v3342, %v3341
        %v3364 = vpack.c.b16 %v3344, %v3343
        %v3365 = vpack.c.b16 %v3346, %v3345
        %v3366 = vpack.c.b16 %v3348, %v3347
        %v3386 = vsel %vm3120, %v3219, 0
        %v3389 = vsel %vm3120, %v3222, 0
        %v3392 = vsel %vm3120, %v3225, 0
        %v3395 = vsel %vm3120, %v3228, 0
        %v3398 = vsel %vm3120, %v3231, 0
        %v3401 = vsel %vm3120, %v3234, 0
        %v3404 = vsel %vm3120, %v3237, 0
        %v3407 = vsel %vm3120, %v3240, 0
        %3409 = vmatprep.subr.bf16.mxu0 0
        %3410 = vmatpush1.bf16.msra.mxu0 %v3356
        %3411 = vmatprep.subr.bf16.mxu0 0
        %3412 = vmatpush1.bf16.msra.mxu0 %v3355
        %3413 = vmatprep.subr.bf16.mxu0 0
        %3414 = vmatpush1.bf16.msra.mxu0 %v3354
        %3415 = vmatprep.subr.bf16.mxu0 0
        %3416 = vmatpush1.bf16.msra.mxu0 %v3353
        %3417 = vmatprep.subr.bf16.mxu0 0
        %3418 = vmatpush1.bf16.msra.mxu0 %v3352
        %3419 = vmatprep.subr.bf16.mxu0 0
        %3420 = vmatpush1.bf16.msra.mxu0 %v3351
        %3421 = vmatprep.subr.bf16.mxu0 0
        %3422 = vmatpush1.bf16.msra.mxu0 %v3350
        %3423 = vmatprep.subr.bf16.mxu0 0
        %3424 = vmatpush1.bf16.msra.mxu0 %v3349
        %3425 = vmatprep.subr.bf16.mxu0 0
        %3426 = vmatpush2.bf16.msra.mxu0 %v3364
        %3427 = vmatprep.subr.bf16.mxu0 0
        %3428 = vmatpush2.bf16.msra.mxu0 %v3363
        %3429 = vmatprep.subr.bf16.mxu0 0
        %3430 = vmatpush2.bf16.msra.mxu0 %v3362
        %3431 = vmatprep.subr.bf16.mxu0 0
        %3432 = vmatpush2.bf16.msra.mxu0 %v3361
        %3433 = vmatprep.subr.bf16.mxu0 0
        %3434 = vmatpush2.bf16.msra.mxu0 %v3360
        %3435 = vmatprep.subr.bf16.mxu0 0
        %3436 = vmatpush2.bf16.msra.mxu0 %v3359
        %3437 = vmatprep.subr.bf16.mxu0 0
        %3438 = vmatpush2.bf16.msra.mxu0 %v3358
        %3439 = vmatprep.subr.bf16.mxu0 0
        %3440 = vmatpush2.bf16.msra.mxu0 %v3357
        %3441 = vmatprep.mubr.bf16.mxu0 %v3218
        %3442 = vmatmul.mubr.bf16.gmra.mxu0 %v3217
        %v3443 = vpop.f32.mrf.mxu0
        %v3444 = vadd.f32 0.0, %v3443
        %v3445 = vpop.f32.mrf.mxu0
        %v3446 = vpop.f32.mrf.mxu0
        %v3447 = vadd.f32 0.0, %v3446
        %v3448 = vpop.f32.mrf.mxu0
        %3449 = vmatprep.mubr.bf16.mxu0 %v3221
        %3450 = vmatmul.mubr.bf16.gmra.mxu0 %v3220
        %v3451 = vpop.f32.mrf.mxu0
        %v3452 = vadd.f32 0.0, %v3451
        %v3453 = vpop.f32.mrf.mxu0
        %v3454 = vpop.f32.mrf.mxu0
        %v3455 = vadd.f32 0.0, %v3454
        %v3456 = vpop.f32.mrf.mxu0
        %3457 = vmatprep.mubr.bf16.mxu0 %v3224
        %3458 = vmatmul.mubr.bf16.gmra.mxu0 %v3223
        %v3459 = vpop.f32.mrf.mxu0
        %v3460 = vadd.f32 0.0, %v3459
        %v3461 = vpop.f32.mrf.mxu0
        %v3462 = vpop.f32.mrf.mxu0
        %v3463 = vadd.f32 0.0, %v3462
        %v3464 = vpop.f32.mrf.mxu0
        %3465 = vmatprep.mubr.bf16.mxu0 %v3227
        %3466 = vmatmul.mubr.bf16.gmra.mxu0 %v3226
        %v3467 = vpop.f32.mrf.mxu0
        %v3468 = vadd.f32 0.0, %v3467
        %v3469 = vpop.f32.mrf.mxu0
        %v3470 = vpop.f32.mrf.mxu0
        %v3471 = vadd.f32 0.0, %v3470
        %v3472 = vpop.f32.mrf.mxu0
        %3473 = vmatprep.mubr.bf16.mxu0 %v3230
        %3474 = vmatmul.mubr.bf16.gmra.mxu0 %v3229
        %v3475 = vpop.f32.mrf.mxu0
        %v3476 = vadd.f32 0.0, %v3475
        %v3477 = vpop.f32.mrf.mxu0
        %v3478 = vpop.f32.mrf.mxu0
        %v3479 = vadd.f32 0.0, %v3478
        %v3480 = vpop.f32.mrf.mxu0
        %3481 = vmatprep.mubr.bf16.mxu0 %v3233
        %3482 = vmatmul.mubr.bf16.gmra.mxu0 %v3232
        %v3483 = vpop.f32.mrf.mxu0
        %v3484 = vadd.f32 0.0, %v3483
        %v3485 = vpop.f32.mrf.mxu0
        %v3486 = vpop.f32.mrf.mxu0
        %v3487 = vadd.f32 0.0, %v3486
        %v3488 = vpop.f32.mrf.mxu0
        %3489 = vmatprep.mubr.bf16.mxu0 %v3236
        %3490 = vmatmul.mubr.bf16.gmra.mxu0 %v3235
        %v3491 = vpop.f32.mrf.mxu0
        %v3492 = vadd.f32 0.0, %v3491
        %v3493 = vpop.f32.mrf.mxu0
        %v3494 = vpop.f32.mrf.mxu0
        %v3495 = vadd.f32 0.0, %v3494
        %v3496 = vpop.f32.mrf.mxu0
        %3497 = vmatprep.mubr.bf16.mxu0 %v3239
        %3498 = vmatmul.mubr.bf16.gmra.mxu0 %v3238
        %v3499 = vpop.f32.mrf.mxu0
        %v3500 = vadd.f32 0.0, %v3499
        %v3501 = vpop.f32.mrf.mxu0
        %v3502 = vpop.f32.mrf.mxu0
        %v3503 = vadd.f32 0.0, %v3502
        %v3504 = vpop.f32.mrf.mxu0
        %3505 = vdwg.mxu0
        %3506 = vmatprep.subr.bf16.mxu0 0
        %3507 = vmatpush1.bf16.msra.mxu0 0
        %3508 = vmatprep.subr.bf16.mxu0 0
        %3509 = vmatpush1.bf16.msra.mxu0 0
        %3510 = vmatprep.subr.bf16.mxu0 0
        %3511 = vmatpush1.bf16.msra.mxu0 0
        %3512 = vmatprep.subr.bf16.mxu0 0
        %3513 = vmatpush1.bf16.msra.mxu0 0
        %3514 = vmatprep.subr.bf16.mxu0 0
        %3515 = vmatpush1.bf16.msra.mxu0 0
        %3516 = vmatprep.subr.bf16.mxu0 0
        %3517 = vmatpush1.bf16.msra.mxu0 0
        %3518 = vmatprep.subr.bf16.mxu0 0
        %3519 = vmatpush1.bf16.msra.mxu0 %v3366
        %3520 = vmatprep.subr.bf16.mxu0 0
        %3521 = vmatpush1.bf16.msra.mxu0 %v3365
        %3522 = vmatprep.subr.bf16.mxu0 0
        %3523 = vmatpush2.bf16.msra.mxu0 0
        %3524 = vmatprep.subr.bf16.mxu0 0
        %3525 = vmatpush2.bf16.msra.mxu0 0
        %3526 = vmatprep.subr.bf16.mxu0 0
        %3527 = vmatpush2.bf16.msra.mxu0 0
        %3528 = vmatprep.subr.bf16.mxu0 0
        %3529 = vmatpush2.bf16.msra.mxu0 0
        %3530 = vmatprep.subr.bf16.mxu0 0
        %3531 = vmatpush2.bf16.msra.mxu0 0
        %3532 = vmatprep.subr.bf16.mxu0 0
        %3533 = vmatpush2.bf16.msra.mxu0 0
        %3534 = vmatprep.subr.bf16.mxu0 0
        %3535 = vmatpush2.bf16.msra.mxu0 0
        %3536 = vmatprep.subr.bf16.mxu0 0
        %3537 = vmatpush2.bf16.msra.mxu0 0
        %3538 = vmatprep.mubr.bf16.mxu0 0
        %3539 = vmatmul.mubr.bf16.gmra.mxu0 %v3386
        %v3540 = vpop.f32.mrf.mxu0
        %v3541 = vadd.f32 %v3444, %v3540
        %v3542 = vpop.f32.mrf.mxu0
        %v3543 = vpop.f32.mrf.mxu0
        %v3544 = vadd.f32 %v3447, %v3543
        %v3545 = vpop.f32.mrf.mxu0
        %3546 = vmatprep.mubr.bf16.mxu0 0
        %3547 = vmatmul.mubr.bf16.gmra.mxu0 %v3389
        %v3548 = vpop.f32.mrf.mxu0
        %v3549 = vadd.f32 %v3452, %v3548
        %v3550 = vpop.f32.mrf.mxu0
        %v3551 = vpop.f32.mrf.mxu0
        %v3552 = vadd.f32 %v3455, %v3551
        %v3553 = vpop.f32.mrf.mxu0
        %3554 = vmatprep.mubr.bf16.mxu0 0
        %3555 = vmatmul.mubr.bf16.gmra.mxu0 %v3392
        %v3556 = vpop.f32.mrf.mxu0
        %v3557 = vadd.f32 %v3460, %v3556
        %v3558 = vpop.f32.mrf.mxu0
        %v3559 = vpop.f32.mrf.mxu0
        %v3560 = vadd.f32 %v3463, %v3559
        %v3561 = vpop.f32.mrf.mxu0
        %3562 = vmatprep.mubr.bf16.mxu0 0
        %3563 = vmatmul.mubr.bf16.gmra.mxu0 %v3395
        %v3564 = vpop.f32.mrf.mxu0
        %v3565 = vadd.f32 %v3468, %v3564
        %v3566 = vpop.f32.mrf.mxu0
        %v3567 = vpop.f32.mrf.mxu0
        %v3568 = vadd.f32 %v3471, %v3567
        %v3569 = vpop.f32.mrf.mxu0
        %3570 = vmatprep.mubr.bf16.mxu0 0
        %3571 = vmatmul.mubr.bf16.gmra.mxu0 %v3398
        %v3572 = vpop.f32.mrf.mxu0
        %v3573 = vadd.f32 %v3476, %v3572
        %v3574 = vpop.f32.mrf.mxu0
        %v3575 = vpop.f32.mrf.mxu0
        %v3576 = vadd.f32 %v3479, %v3575
        %v3577 = vpop.f32.mrf.mxu0
        %3578 = vmatprep.mubr.bf16.mxu0 0
        %3579 = vmatmul.mubr.bf16.gmra.mxu0 %v3401
        %v3580 = vpop.f32.mrf.mxu0
        %v3581 = vadd.f32 %v3484, %v3580
        %v3582 = vpop.f32.mrf.mxu0
        %v3583 = vpop.f32.mrf.mxu0
        %v3584 = vadd.f32 %v3487, %v3583
        %v3585 = vpop.f32.mrf.mxu0
        %3586 = vmatprep.mubr.bf16.mxu0 0
        %3587 = vmatmul.mubr.bf16.gmra.mxu0 %v3404
        %v3588 = vpop.f32.mrf.mxu0
        %v3589 = vadd.f32 %v3492, %v3588
        %v3590 = vpop.f32.mrf.mxu0
        %v3591 = vpop.f32.mrf.mxu0
        %v3592 = vadd.f32 %v3495, %v3591
        %v3593 = vpop.f32.mrf.mxu0
        %3594 = vmatprep.mubr.bf16.mxu0 0
        %3595 = vmatmul.mubr.bf16.gmra.mxu0 %v3407
        %v3596 = vpop.f32.mrf.mxu0
        %v3597 = vadd.f32 %v3500, %v3596
        %v3598 = vpop.f32.mrf.mxu0
        %v3599 = vpop.f32.mrf.mxu0
        %v3600 = vadd.f32 %v3503, %v3599
        %v3601 = vpop.f32.mrf.mxu0
        %3602 = vdwg.mxu0
        %v3603 = vld [vmem:[%s9] sm:$0x1]
        %v3605 = vlaneseq
        %v3606 = vshrl.u32 %v3605, 7
        %v3607 = vsub.s32 0, %v3606
        %v3608 = vrot.slane %v3603, %v3607
        %v3610 = vmul.f32 %v3541, %v3608
        %v3611 = vmul.f32 %v3544, %v3608
        %v3612 = vmul.f32 %v3549, %v3608
        %v3613 = vmul.f32 %v3552, %v3608
        %v3614 = vmul.f32 %v3557, %v3608
        %v3615 = vmul.f32 %v3560, %v3608
        %v3616 = vmul.f32 %v3565, %v3608
        %v3617 = vmul.f32 %v3568, %v3608
        %v3618 = vmul.f32 %v3573, %v3608
        %v3619 = vmul.f32 %v3576, %v3608
        %v3620 = vmul.f32 %v3581, %v3608
        %v3621 = vmul.f32 %v3584, %v3608
        %v3622 = vmul.f32 %v3589, %v3608
        %v3623 = vmul.f32 %v3592, %v3608
        %v3624 = vmul.f32 %v3597, %v3608
        %v3625 = vmul.f32 %v3600, %v3608
        %v3626 = vld [vmem:[%s10] sm:$0x1]
        %v3628 = vlaneseq
        %v3629 = vshrl.u32 %v3628, 7
        %v3630 = vsub.s32 0, %v3629
        %v3631 = vrot.slane %v3626, %v3630
        %v3633 = vadd.f32 %v3610, %v3631
        %v3634 = vadd.f32 %v3611, %v3631
        %v3635 = vadd.f32 %v3612, %v3631
        %v3636 = vadd.f32 %v3613, %v3631
        %v3637 = vadd.f32 %v3614, %v3631
        %v3638 = vadd.f32 %v3615, %v3631
        %v3639 = vadd.f32 %v3616, %v3631
        %v3640 = vadd.f32 %v3617, %v3631
        %v3641 = vadd.f32 %v3618, %v3631
        %v3642 = vadd.f32 %v3619, %v3631
        %v3643 = vadd.f32 %v3620, %v3631
        %v3644 = vadd.f32 %v3621, %v3631
        %v3645 = vadd.f32 %v3622, %v3631
        %v3646 = vadd.f32 %v3623, %v3631
        %v3647 = vadd.f32 %v3624, %v3631
        %v3648 = vadd.f32 %v3625, %v3631
        %v3649 = vstv %s477
        %v3650 = vmul.f32 %v3633, %v3649
        %v3651 = vmul.f32 %v3634, %v3649
        %v3652 = vmul.f32 %v3635, %v3649
        %v3653 = vmul.f32 %v3636, %v3649
        %v3654 = vmul.f32 %v3637, %v3649
        %v3655 = vmul.f32 %v3638, %v3649
        %v3656 = vmul.f32 %v3639, %v3649
        %v3657 = vmul.f32 %v3640, %v3649
        %v3658 = vadd.f32 %v3650, 0.0
        %v3659 = vadd.f32 %v3651, 0.0
        %v3660 = vadd.f32 %v3652, 0.0
        %v3661 = vadd.f32 %v3653, 0.0
        %v3662 = vadd.f32 %v3654, 0.0
        %v3663 = vadd.f32 %v3655, 0.0
        %v3664 = vadd.f32 %v3656, 0.0
        %v3665 = vadd.f32 %v3657, 0.0
        %vm3666 = vcmp.ge.f32.partialorder %v3658, 1.0
        %vm3667 = vcmp.ge.f32.partialorder %v3659, 1.0
        %vm3668 = vcmp.ge.f32.partialorder %v3660, 1.0
        %vm3669 = vcmp.ge.f32.partialorder %v3661, 1.0
        %vm3670 = vcmp.ge.f32.partialorder %v3662, 1.0
        %vm3671 = vcmp.ge.f32.partialorder %v3663, 1.0
        %vm3672 = vcmp.ge.f32.partialorder %v3664, 1.0
        %vm3673 = vcmp.ge.f32.partialorder %v3665, 1.0
        %v3674 = vsel %vm3666, 1, 0
        %v3675 = vsel %vm3667, 1, 0
        %v3676 = vsel %vm3668, 1, 0
        %v3677 = vsel %vm3669, 1, 0
        %v3678 = vsel %vm3670, 1, 0
        %v3679 = vsel %vm3671, 1, 0
        %v3680 = vsel %vm3672, 1, 0
        %v3681 = vsel %vm3673, 1, 0
        %v3682 = vcvt.s32.f32 %v3674
        %v3683 = vcvt.s32.f32 %v3675
        %v3684 = vcvt.s32.f32 %v3676
        %v3685 = vcvt.s32.f32 %v3677
        %v3686 = vcvt.s32.f32 %v3678
        %v3687 = vcvt.s32.f32 %v3679
        %v3688 = vcvt.s32.f32 %v3680
        %v3689 = vcvt.s32.f32 %v3681
        %v3690 = vsub.f32 1.0, %v3682
        %v3691 = vsub.f32 1.0, %v3683
        %v3692 = vsub.f32 1.0, %v3684
        %v3693 = vsub.f32 1.0, %v3685
        %v3694 = vsub.f32 1.0, %v3686
        %v3695 = vsub.f32 1.0, %v3687
        %v3696 = vsub.f32 1.0, %v3688
        %v3697 = vsub.f32 1.0, %v3689
        %v3698 = vmul.f32 %v3658, %v3690
        %v3699 = vmul.f32 %v3659, %v3691
        %v3700 = vmul.f32 %v3660, %v3692
        %v3701 = vmul.f32 %v3661, %v3693
        %v3702 = vmul.f32 %v3662, %v3694
        %v3703 = vmul.f32 %v3663, %v3695
        %v3704 = vmul.f32 %v3664, %v3696
        %v3705 = vmul.f32 %v3665, %v3697
        %v3706 = vstv %s478
        %v3707 = vmul.f32 %v2570, %v3706
        %v3708 = vmul.f32 %v2571, %v3706
        %v3709 = vmul.f32 %v2572, %v3706
        %v3710 = vmul.f32 %v2573, %v3706
        %v3711 = vmul.f32 %v2574, %v3706
        %v3712 = vmul.f32 %v2575, %v3706
        %v3713 = vmul.f32 %v2576, %v3706
        %v3714 = vmul.f32 %v2577, %v3706
        %v3715 = vadd.f32 %v3707, 0.0
        %v3716 = vadd.f32 %v3708, 0.0
        %v3717 = vadd.f32 %v3709, 0.0
        %v3718 = vadd.f32 %v3710, 0.0
        %v3719 = vadd.f32 %v3711, 0.0
        %v3720 = vadd.f32 %v3712, 0.0
        %v3721 = vadd.f32 %v3713, 0.0
        %v3722 = vadd.f32 %v3714, 0.0
        %vm3723 = vcmp.ge.f32.partialorder %v3715, 1.0
        %vm3724 = vcmp.ge.f32.partialorder %v3716, 1.0
        %vm3725 = vcmp.ge.f32.partialorder %v3717, 1.0
        %vm3726 = vcmp.ge.f32.partialorder %v3718, 1.0
        %vm3727 = vcmp.ge.f32.partialorder %v3719, 1.0
        %vm3728 = vcmp.ge.f32.partialorder %v3720, 1.0
        %vm3729 = vcmp.ge.f32.partialorder %v3721, 1.0
        %vm3730 = vcmp.ge.f32.partialorder %v3722, 1.0
        %v3731 = vsel %vm3723, 1, 0
        %v3732 = vsel %vm3724, 1, 0
        %v3733 = vsel %vm3725, 1, 0
        %v3734 = vsel %vm3726, 1, 0
        %v3735 = vsel %vm3727, 1, 0
        %v3736 = vsel %vm3728, 1, 0
        %v3737 = vsel %vm3729, 1, 0
        %v3738 = vsel %vm3730, 1, 0
        %v3739 = vcvt.s32.f32 %v3731
        %v3740 = vcvt.s32.f32 %v3732
        %v3741 = vcvt.s32.f32 %v3733
        %v3742 = vcvt.s32.f32 %v3734
        %v3743 = vcvt.s32.f32 %v3735
        %v3744 = vcvt.s32.f32 %v3736
        %v3745 = vcvt.s32.f32 %v3737
        %v3746 = vcvt.s32.f32 %v3738
        %v3747 = vsub.f32 1.0, %v3739
        %v3748 = vsub.f32 1.0, %v3740
        %v3749 = vsub.f32 1.0, %v3741
        %v3750 = vsub.f32 1.0, %v3742
        %v3751 = vsub.f32 1.0, %v3743
        %v3752 = vsub.f32 1.0, %v3744
        %v3753 = vsub.f32 1.0, %v3745
        %v3754 = vsub.f32 1.0, %v3746
        %v3755 = vmul.f32 %v3715, %v3747
        %v3756 = vmul.f32 %v3716, %v3748
        %v3757 = vmul.f32 %v3717, %v3749
        %v3758 = vmul.f32 %v3718, %v3750
        %v3759 = vmul.f32 %v3719, %v3751
        %v3760 = vmul.f32 %v3720, %v3752
        %v3761 = vmul.f32 %v3721, %v3753
        %v3762 = vmul.f32 %v3722, %v3754
        %v3763 = vadd.f32 %v3682, %v3739
        %v3764 = vadd.f32 %v3683, %v3740
        %v3765 = vadd.f32 %v3684, %v3741
        %v3766 = vadd.f32 %v3685, %v3742
        %v3767 = vadd.f32 %v3686, %v3743
        %v3768 = vadd.f32 %v3687, %v3744
        %v3769 = vadd.f32 %v3688, %v3745
        %v3770 = vadd.f32 %v3689, %v3746
        %3771 = vst.msk [vmem:[%s474] sm:$0xff] %vm3120, %v3763
        %3772 = vst.msk [vmem:[%s474 + $0x8] sm:$0xff] %vm3120, %v3764
        %3773 = vst.msk [vmem:[%s474 + $0x10] sm:$0xff] %vm3120, %v3765
        %3774 = vst.msk [vmem:[%s474 + $0x18] sm:$0xff] %vm3120, %v3766
        %3775 = vst.msk [vmem:[%s474 + $0x20] sm:$0xff] %vm3120, %v3767
        %3776 = vst.msk [vmem:[%s474 + $0x28] sm:$0xff] %vm3120, %v3768
        %3777 = vst.msk [vmem:[%s474 + $0x30] sm:$0xff] %vm3120, %v3769
        %3778 = vst.msk [vmem:[%s474 + $0x38] sm:$0xff] %vm3120, %v3770
        %v3779 = vsub.f32 %v3641, %v3698
        %v3780 = vsub.f32 %v3642, %v3699
        %v3781 = vsub.f32 %v3643, %v3700
        %v3782 = vsub.f32 %v3644, %v3701
        %v3783 = vsub.f32 %v3645, %v3702
        %v3784 = vsub.f32 %v3646, %v3703
        %v3785 = vsub.f32 %v3647, %v3704
        %v3786 = vsub.f32 %v3648, %v3705
        %v3787 = vmul.f32 %v3779, %v3649
        %v3788 = vmul.f32 %v3780, %v3649
        %v3789 = vmul.f32 %v3781, %v3649
        %v3790 = vmul.f32 %v3782, %v3649
        %v3791 = vmul.f32 %v3783, %v3649
        %v3792 = vmul.f32 %v3784, %v3649
        %v3793 = vmul.f32 %v3785, %v3649
        %v3794 = vmul.f32 %v3786, %v3649
        %v3795 = vadd.f32 %v3698, %v3787
        %v3796 = vadd.f32 %v3699, %v3788
        %v3797 = vadd.f32 %v3700, %v3789
        %v3798 = vadd.f32 %v3701, %v3790
        %v3799 = vadd.f32 %v3702, %v3791
        %v3800 = vadd.f32 %v3703, %v3792
        %v3801 = vadd.f32 %v3704, %v3793
        %v3802 = vadd.f32 %v3705, %v3794
        %vm3803 = vcmp.ge.f32.partialorder %v3795, 1.0
        %vm3804 = vcmp.ge.f32.partialorder %v3796, 1.0
        %vm3805 = vcmp.ge.f32.partialorder %v3797, 1.0
        %vm3806 = vcmp.ge.f32.partialorder %v3798, 1.0
        %vm3807 = vcmp.ge.f32.partialorder %v3799, 1.0
        %vm3808 = vcmp.ge.f32.partialorder %v3800, 1.0
        %vm3809 = vcmp.ge.f32.partialorder %v3801, 1.0
        %vm3810 = vcmp.ge.f32.partialorder %v3802, 1.0
        %v3811 = vsel %vm3803, 1, 0
        %v3812 = vsel %vm3804, 1, 0
        %v3813 = vsel %vm3805, 1, 0
        %v3814 = vsel %vm3806, 1, 0
        %v3815 = vsel %vm3807, 1, 0
        %v3816 = vsel %vm3808, 1, 0
        %v3817 = vsel %vm3809, 1, 0
        %v3818 = vsel %vm3810, 1, 0
        %v3819 = vcvt.s32.f32 %v3811
        %v3820 = vcvt.s32.f32 %v3812
        %v3821 = vcvt.s32.f32 %v3813
        %v3822 = vcvt.s32.f32 %v3814
        %v3823 = vcvt.s32.f32 %v3815
        %v3824 = vcvt.s32.f32 %v3816
        %v3825 = vcvt.s32.f32 %v3817
        %v3826 = vcvt.s32.f32 %v3818
        %v3827 = vsub.f32 %v2578, %v3755
        %v3828 = vsub.f32 %v2579, %v3756
        %v3829 = vsub.f32 %v2580, %v3757
        %v3830 = vsub.f32 %v2581, %v3758
        %v3831 = vsub.f32 %v2582, %v3759
        %v3832 = vsub.f32 %v2583, %v3760
        %v3833 = vsub.f32 %v2584, %v3761
        %v3834 = vsub.f32 %v2585, %v3762
        %v3835 = vmul.f32 %v3827, %v3706
        %v3836 = vmul.f32 %v3828, %v3706
        %v3837 = vmul.f32 %v3829, %v3706
        %v3838 = vmul.f32 %v3830, %v3706
        %v3839 = vmul.f32 %v3831, %v3706
        %v3840 = vmul.f32 %v3832, %v3706
        %v3841 = vmul.f32 %v3833, %v3706
        %v3842 = vmul.f32 %v3834, %v3706
        %v3843 = vadd.f32 %v3755, %v3835
        %v3844 = vadd.f32 %v3756, %v3836
        %v3845 = vadd.f32 %v3757, %v3837
        %v3846 = vadd.f32 %v3758, %v3838
        %v3847 = vadd.f32 %v3759, %v3839
        %v3848 = vadd.f32 %v3760, %v3840
        %v3849 = vadd.f32 %v3761, %v3841
        %v3850 = vadd.f32 %v3762, %v3842
        %vm3851 = vcmp.ge.f32.partialorder %v3843, 1.0
        %vm3852 = vcmp.ge.f32.partialorder %v3844, 1.0
        %vm3853 = vcmp.ge.f32.partialorder %v3845, 1.0
        %vm3854 = vcmp.ge.f32.partialorder %v3846, 1.0
        %vm3855 = vcmp.ge.f32.partialorder %v3847, 1.0
        %vm3856 = vcmp.ge.f32.partialorder %v3848, 1.0
        %vm3857 = vcmp.ge.f32.partialorder %v3849, 1.0
        %vm3858 = vcmp.ge.f32.partialorder %v3850, 1.0
        %v3859 = vsel %vm3851, 1, 0
        %v3860 = vsel %vm3852, 1, 0
        %v3861 = vsel %vm3853, 1, 0
        %v3862 = vsel %vm3854, 1, 0
        %v3863 = vsel %vm3855, 1, 0
        %v3864 = vsel %vm3856, 1, 0
        %v3865 = vsel %vm3857, 1, 0
        %v3866 = vsel %vm3858, 1, 0
        %v3867 = vcvt.s32.f32 %v3859
        %v3868 = vcvt.s32.f32 %v3860
        %v3869 = vcvt.s32.f32 %v3861
        %v3870 = vcvt.s32.f32 %v3862
        %v3871 = vcvt.s32.f32 %v3863
        %v3872 = vcvt.s32.f32 %v3864
        %v3873 = vcvt.s32.f32 %v3865
        %v3874 = vcvt.s32.f32 %v3866
        %v3875 = vadd.f32 %v3819, %v3867
        %v3876 = vadd.f32 %v3820, %v3868
        %v3877 = vadd.f32 %v3821, %v3869
        %v3878 = vadd.f32 %v3822, %v3870
        %v3879 = vadd.f32 %v3823, %v3871
        %v3880 = vadd.f32 %v3824, %v3872
        %v3881 = vadd.f32 %v3825, %v3873
        %v3882 = vadd.f32 %v3826, %v3874
        %s3883 = scalar_lea.vmem %s474, 64
        %3884 = vst.msk [vmem:[%s3883] sm:$0xff] %vm3120, %v3875
        %3885 = vst.msk [vmem:[%s3883 + $0x8] sm:$0xff] %vm3120, %v3876
        %3886 = vst.msk [vmem:[%s3883 + $0x10] sm:$0xff] %vm3120, %v3877
        %3887 = vst.msk [vmem:[%s3883 + $0x18] sm:$0xff] %vm3120, %v3878
        %3888 = vst.msk [vmem:[%s3883 + $0x20] sm:$0xff] %vm3120, %v3879
        %3889 = vst.msk [vmem:[%s3883 + $0x28] sm:$0xff] %vm3120, %v3880
        %3890 = vst.msk [vmem:[%s3883 + $0x30] sm:$0xff] %vm3120, %v3881
        %3891 = vst.msk [vmem:[%s3883 + $0x38] sm:$0xff] %vm3120, %v3882
        %p3892 = scmp.lt.s32.totalorder %s25, 1
        %s3893 = scalar_select %p3892, %s25, 1
        %s3894 = smul.addr %s3893, 16
        %s3895 = smul.addr %s3894, 8
        %s3896 = scalar_lea.vmem %s13, %s3895
        // Predicated region
        $region77: #{patch_embedding_stage.1} parent=71 // pred_check
          %p3897 = pneg %p326
        $region78: #{patch_embedding_stage.1} parent=71 // pred_check_branch
          %3899 = sbr.rel (%p3897) target = $region80
        $region79: #{patch_embedding_stage.1} parent=71 // pred_region
          _
        $region80: #{patch_embedding_stage.1} parent=71 // pred_fallthru
          _
      $region72: #{patch_embedding_stage.1} parent=5 // pred_fallthru
        _
      %p3900 = scmp.le.s32.totalorder 2, %s20
      // Predicated region
      $region81: #{patch_embedding_stage.1} parent=5 // pred_check
        %p3901 = pneg %p3900
      $region82: #{patch_embedding_stage.1} parent=5 // pred_check_branch
        %3903 = sbr.rel (%p3901) target = $region84
      $region83: #{patch_embedding_stage.1} parent=5 // pred_region
        %s3904 = ssub.s32 %s20, 2
        // Predicated region
        $region85: #{patch_embedding_stage.1} parent=83 // pred_check
          %p3905 = pneg %p332
        $region86: #{patch_embedding_stage.1} parent=83 // pred_check_branch
          %3907 = sbr.rel (%p3905) target = $region88
        $region87: #{patch_embedding_stage.1} parent=83 // pred_region
          %p3908 = scmp.lt.s32.totalorder %s26, 1
          %s3909 = scalar_select %p3908, %s26, 1
          %s3910 = smul.addr %s3909, 16
          %s3911 = smul.addr %s3910, 8
          %s3912 = scalar_lea.vmem %s13, %s3911
        $region88: #{patch_embedding_stage.1} parent=83 // pred_fallthru
          _
      $region84: #{patch_embedding_stage.1} parent=5 // pred_fallthru
        _
    $region6: #{patch_embedding_stage.1} parent=1 // loop_footer
      %s24 = sadd.s32 1, %s20
    $region7: #{patch_embedding_stage.1} parent=1 // loop_footer_branch
      %19 = sbr.rel target = $region3
    $region8: #{patch_embedding_stage.1} parent=1 // loop_exit
      _
    %3913 = vsyncpa [#allocation3], 1
    %s3914 = scalar_lea.sflag [#allocation3], 1
    %3915 = vsyncpa %s3914, 1

</llo_original>
